<compile_context>
chip_gen: v7x
topology: tpu7x:2x2x1
jax: 0.10.0
libtpu: 0.0.40
codegen_flags: <defaults>
</compile_context>

<pallas_src>
import functools

import jax
import jax.numpy as jnp
from jax.experimental import pallas as pl
from jax.experimental.pallas import tpu as pltpu

# Logical layer sizes of the autoencoder.
LAYER_DIMS = [560, 200, 100, 50, 20, 50, 100, 200, 560]
NUM_LAYERS = len(LAYER_DIMS) - 1  # 8 linear layers
RELU_LAYERS = (0, 1, 2, 4, 5, 6)  # layer 3 = bottleneck (identity), 7 = sigmoid


def _round_up(n, m):
    return ((n + m - 1) // m) * m


# First/last dims stay at the true 560 (no wrapper pad / post-kernel feature
# slice); intermediate dims are zero-padded to multiples of 128 for lane-dense
# hidden matmuls: [560, 256, 128, 128, 128, 128, 128, 256, 560].
PADDED_DIMS = (
    [LAYER_DIMS[0]]
    + [_round_up(d, 128) for d in LAYER_DIMS[1:-1]]
    + [LAYER_DIMS[-1]]
)


def autoencoder_kernel(x_ref, *refs):
    """Fused MLP forward over one batch tile.

    refs = (w0, b0, w1, b1, ..., w7, b7, out_ref)
      w_l : bf16 [in_p, out_p]   (transpose of PyTorch's [out, in], zero-padded)
      b_l : f32  [1, out_p]      (zero-padded)
    """
    out_ref = refs[-1]
    param_refs = refs[:-1]

    h = x_ref[...]  # (TB, 560) f32
    for layer in range(NUM_LAYERS):
        w = param_refs[2 * layer][...]        # bf16
        b = param_refs[2 * layer + 1][...]    # f32
        # bf16 MXU matmul with f32 accumulation; bias/activation in f32.
        h = jnp.dot(h.astype(jnp.bfloat16), w,
                    preferred_element_type=jnp.float32) + b
        if layer in RELU_LAYERS:
            h = jnp.maximum(h, 0.0)
        elif layer == NUM_LAYERS - 1:
            h = jax.nn.sigmoid(h)
    out_ref[...] = h


@functools.partial(jax.jit, static_argnames=("block_batch",))
def autoencoder_forward(x, kernel_params, block_batch=1024):
    """x: [B, 560] f32. kernel_params: flat list [w0,b0,...,w7,b7] (padded, bf16/f32)."""
    batch = x.shape[0]
    d_in, d_out = LAYER_DIMS[0], LAYER_DIMS[-1]

    # Balanced batch tiles: smallest multiple-of-16 tile covering batch in
    # ceil(batch / block_batch) grid steps. Multiple of 16 keeps the sublane
    # dim clean for bf16 packing inside the kernel.
    num_tiles = -(-batch // block_batch)
    tb = _round_up(-(-batch // num_tiles), 16)
    padded_batch = num_tiles * tb

    xp = x
    if padded_batch != batch:
        # Only pad the batch axis, and only when needed (no feature padding).
        xp = jnp.pad(x, ((0, padded_batch - batch), (0, 0)))

    # x / out blocked on batch; weights & biases constant across the grid
    # (DMA'd once, VMEM-resident for all batch tiles).
    in_specs = [pl.BlockSpec((tb, d_in), lambda i: (i, 0))]
    for p in kernel_params:
        in_specs.append(pl.BlockSpec(p.shape, lambda i: (0, 0)))
    out_specs = pl.BlockSpec((tb, d_out), lambda i: (i, 0))

    out = pl.pallas_call(
        autoencoder_kernel,
        out_shape=jax.ShapeDtypeStruct((padded_batch, d_out), jnp.float32),
        grid=(num_tiles,),
        in_specs=in_specs,
        out_specs=out_specs,
        compiler_params=pltpu.CompilerParams(
            dimension_semantics=("parallel",),
            vmem_limit_bytes=48 * 1024 * 1024),
    )(xp, *kernel_params)

    if padded_batch != batch:
        out = out[:batch]
    return out


def init_params(key):
    """Logical f32 params mirroring nn.Linear's U(-1/sqrt(fan_in), ...) init.

    Returns flat list [w0, b0, ..., w7, b7] with w: [in, out], b: [out].
    """
    params = []
    for layer in range(NUM_LAYERS):
        fan_in = LAYER_DIMS[layer]
        fan_out = LAYER_DIMS[layer + 1]
        key, kw, kb = jax.random.split(key, 3)
        bound = 1.0 / jnp.sqrt(fan_in)
        w = jax.random.uniform(kw, (fan_in, fan_out), jnp.float32, -bound, bound)
        b = jax.random.uniform(kb, (fan_out,), jnp.float32, -bound, bound)
        params.extend([w, b])
    return params


def pad_params(params):
    """Zero-pad to kernel shapes; weights -> bf16 [in_p,out_p], biases -> f32 [1,out_p]."""
    padded = []
    for layer in range(NUM_LAYERS):
        w = params[2 * layer]
        b = params[2 * layer + 1]
        in_d, out_d = LAYER_DIMS[layer], LAYER_DIMS[layer + 1]
        in_p, out_p = PADDED_DIMS[layer], PADDED_DIMS[layer + 1]
        wp = jnp.zeros((in_p, out_p), jnp.float32).at[:in_d, :out_d].set(w)
        bp = jnp.zeros((1, out_p), jnp.float32).at[0, :out_d].set(b)
        padded.append(wp.astype(jnp.bfloat16))
        padded.append(bp)
    return padded


def reference_forward(x, params):
    """Pure-JAX reference emulating the kernel's bf16-input / f32-accumulate matmuls."""
    h = x
    for layer in range(NUM_LAYERS):
        w = params[2 * layer].astype(jnp.bfloat16).astype(jnp.float32)
        b = params[2 * layer + 1]
        hq = h.astype(jnp.bfloat16).astype(jnp.float32)
        h = hq @ w + b
        if layer in RELU_LAYERS:
            h = jnp.maximum(h, 0.0)
        elif layer == NUM_LAYERS - 1:
            h = jax.nn.sigmoid(h)
    return h


if __name__ == "__main__":
    key = jax.random.PRNGKey(0)
    key, kx = jax.random.split(key)

    batch = 300
    x = jax.random.normal(kx, (batch, LAYER_DIMS[0]), jnp.float32)

    params = init_params(key)           # logical f32 params (for the reference)
    kernel_params = pad_params(params)  # padded bf16/f32 params (for the kernel)

    ref = reference_forward(x, params)

    # Default path: single balanced tile (tb=304), exercises batch pad + slice.
    out = jax.block_until_ready(autoencoder_forward(x, kernel_params))
    assert out.shape == (batch, LAYER_DIMS[-1]), out.shape
    assert jnp.allclose(out, ref, atol=3e-3, rtol=3e-3), "mismatch vs reference (1 tile)"

    # Multi-tile path: block_batch=128 -> 3 balanced tiles of 112 rows.
    out2 = jax.block_until_ready(autoencoder_forward(x, kernel_params, block_batch=128))
    assert out2.shape == (batch, LAYER_DIMS[-1]), out2.shape
    assert jnp.allclose(out2, ref, atol=3e-3, rtol=3e-3), "mismatch vs reference (3 tiles)"

    print("KERNEL_OK")
</pallas_src>

<mosaic_0001>
module attributes {stable_mosaic.version = 11 : i64} {
  func.func @autoencoder_kernel(%arg0: i32, %arg1: memref<304x560xf32, #tpu.memory_space<vmem>>, %arg2: memref<560x256xbf16, #tpu.memory_space<vmem>>, %arg3: memref<1x256xf32, #tpu.memory_space<vmem>>, %arg4: memref<256x128xbf16, #tpu.memory_space<vmem>>, %arg5: memref<1x128xf32, #tpu.memory_space<vmem>>, %arg6: memref<128x128xbf16, #tpu.memory_space<vmem>>, %arg7: memref<1x128xf32, #tpu.memory_space<vmem>>, %arg8: memref<128x128xbf16, #tpu.memory_space<vmem>>, %arg9: memref<1x128xf32, #tpu.memory_space<vmem>>, %arg10: memref<128x128xbf16, #tpu.memory_space<vmem>>, %arg11: memref<1x128xf32, #tpu.memory_space<vmem>>, %arg12: memref<128x128xbf16, #tpu.memory_space<vmem>>, %arg13: memref<1x128xf32, #tpu.memory_space<vmem>>, %arg14: memref<128x256xbf16, #tpu.memory_space<vmem>>, %arg15: memref<1x256xf32, #tpu.memory_space<vmem>>, %arg16: memref<256x560xbf16, #tpu.memory_space<vmem>>, %arg17: memref<1x560xf32, #tpu.memory_space<vmem>>, %arg18: memref<304x560xf32, #tpu.memory_space<vmem>>) attributes {dimension_semantics = [#tpu.dimension_semantics<parallel>], iteration_bounds = array<i64: 1>, scalar_prefetch = 0 : i64, scratch_operands = 0 : i64, tpu.core_type = #tpu.core_type<tc>, window_params = [{transform_indices = @transform_0, window_bounds = array<i64: 304, 560>}, {pipeline_mode = #tpu.pipeline_mode<synchronous>, transform_indices = @transform_1, window_bounds = array<i64: 560, 256>}, {pipeline_mode = #tpu.pipeline_mode<synchronous>, transform_indices = @transform_2, window_bounds = array<i64: 1, 256>}, {pipeline_mode = #tpu.pipeline_mode<synchronous>, transform_indices = @transform_3, window_bounds = array<i64: 256, 128>}, {pipeline_mode = #tpu.pipeline_mode<synchronous>, transform_indices = @transform_4, window_bounds = array<i64: 1, 128>}, {pipeline_mode = #tpu.pipeline_mode<synchronous>, transform_indices = @transform_5, window_bounds = array<i64: 128, 128>}, {pipeline_mode = #tpu.pipeline_mode<synchronous>, transform_indices = @transform_6, window_bounds = array<i64: 1, 128>}, {pipeline_mode = #tpu.pipeline_mode<synchronous>, transform_indices = @transform_7, window_bounds = array<i64: 128, 128>}, {pipeline_mode = #tpu.pipeline_mode<synchronous>, transform_indices = @transform_8, window_bounds = array<i64: 1, 128>}, {pipeline_mode = #tpu.pipeline_mode<synchronous>, transform_indices = @transform_9, window_bounds = array<i64: 128, 128>}, {pipeline_mode = #tpu.pipeline_mode<synchronous>, transform_indices = @transform_10, window_bounds = array<i64: 1, 128>}, {pipeline_mode = #tpu.pipeline_mode<synchronous>, transform_indices = @transform_11, window_bounds = array<i64: 128, 128>}, {pipeline_mode = #tpu.pipeline_mode<synchronous>, transform_indices = @transform_12, window_bounds = array<i64: 1, 128>}, {pipeline_mode = #tpu.pipeline_mode<synchronous>, transform_indices = @transform_13, window_bounds = array<i64: 128, 256>}, {pipeline_mode = #tpu.pipeline_mode<synchronous>, transform_indices = @transform_14, window_bounds = array<i64: 1, 256>}, {pipeline_mode = #tpu.pipeline_mode<synchronous>, transform_indices = @transform_15, window_bounds = array<i64: 256, 560>}, {pipeline_mode = #tpu.pipeline_mode<synchronous>, transform_indices = @transform_16, window_bounds = array<i64: 1, 560>}, {transform_indices = @transform_17, window_bounds = array<i64: 304, 560>}]} {
    %c0 = arith.constant 0 : index
    %c0_0 = arith.constant 0 : index
    %0 = vector.load %arg1[%c0, %c0_0] : memref<304x560xf32, #tpu.memory_space<vmem>>, vector<304x560xf32>
    %c0_1 = arith.constant 0 : index
    %c0_2 = arith.constant 0 : index
    %1 = vector.load %arg2[%c0_1, %c0_2] : memref<560x256xbf16, #tpu.memory_space<vmem>>, vector<560x256xbf16>
    %c0_3 = arith.constant 0 : index
    %c0_4 = arith.constant 0 : index
    %2 = vector.load %arg3[%c0_3, %c0_4] : memref<1x256xf32, #tpu.memory_space<vmem>>, vector<1x256xf32>
    %3 = arith.truncf %0 : vector<304x560xf32> to vector<304x560xbf16>
    %cst = arith.constant dense<0.000000e+00> : vector<304x256xf32>
    %4 = tpu.matmul %3, %1, %cst {dimension_numbers = #tpu.dot_dimension_numbers<[1], [0], [0], [1], [0, 0, 1, 1], [], []>} : vector<304x560xbf16>, vector<560x256xbf16>, vector<304x256xf32> -> vector<304x256xf32>
    %5 = vector.broadcast %2 : vector<1x256xf32> to vector<304x256xf32>
    %6 = arith.addf %4, %5 : vector<304x256xf32>
    %cst_5 = arith.constant 0.000000e+00 : f32
    %7 = vector.broadcast %cst_5 : f32 to vector<304x256xf32>
    %8 = arith.maximumf %6, %7 : vector<304x256xf32>
    %c0_6 = arith.constant 0 : index
    %c0_7 = arith.constant 0 : index
    %9 = vector.load %arg4[%c0_6, %c0_7] : memref<256x128xbf16, #tpu.memory_space<vmem>>, vector<256x128xbf16>
    %c0_8 = arith.constant 0 : index
    %c0_9 = arith.constant 0 : index
    %10 = vector.load %arg5[%c0_8, %c0_9] : memref<1x128xf32, #tpu.memory_space<vmem>>, vector<1x128xf32>
    %11 = arith.truncf %8 : vector<304x256xf32> to vector<304x256xbf16>
    %cst_10 = arith.constant dense<0.000000e+00> : vector<304x128xf32>
    %12 = tpu.matmul %11, %9, %cst_10 {dimension_numbers = #tpu.dot_dimension_numbers<[1], [0], [0], [1], [0, 0, 1, 1], [], []>} : vector<304x256xbf16>, vector<256x128xbf16>, vector<304x128xf32> -> vector<304x128xf32>
    %13 = vector.broadcast %10 : vector<1x128xf32> to vector<304x128xf32>
    %14 = arith.addf %12, %13 : vector<304x128xf32>
    %cst_11 = arith.constant 0.000000e+00 : f32
    %15 = vector.broadcast %cst_11 : f32 to vector<304x128xf32>
    %16 = arith.maximumf %14, %15 : vector<304x128xf32>
    %c0_12 = arith.constant 0 : index
    %c0_13 = arith.constant 0 : index
    %17 = vector.load %arg6[%c0_12, %c0_13] : memref<128x128xbf16, #tpu.memory_space<vmem>>, vector<128x128xbf16>
    %c0_14 = arith.constant 0 : index
    %c0_15 = arith.constant 0 : index
    %18 = vector.load %arg7[%c0_14, %c0_15] : memref<1x128xf32, #tpu.memory_space<vmem>>, vector<1x128xf32>
    %19 = arith.truncf %16 : vector<304x128xf32> to vector<304x128xbf16>
    %cst_16 = arith.constant dense<0.000000e+00> : vector<304x128xf32>
    %20 = tpu.matmul %19, %17, %cst_16 {dimension_numbers = #tpu.dot_dimension_numbers<[1], [0], [0], [1], [0, 0, 1, 1], [], []>} : vector<304x128xbf16>, vector<128x128xbf16>, vector<304x128xf32> -> vector<304x128xf32>
    %21 = vector.broadcast %18 : vector<1x128xf32> to vector<304x128xf32>
    %22 = arith.addf %20, %21 : vector<304x128xf32>
    %cst_17 = arith.constant 0.000000e+00 : f32
    %23 = vector.broadcast %cst_17 : f32 to vector<304x128xf32>
    %24 = arith.maximumf %22, %23 : vector<304x128xf32>
    %c0_18 = arith.constant 0 : index
    %c0_19 = arith.constant 0 : index
    %25 = vector.load %arg8[%c0_18, %c0_19] : memref<128x128xbf16, #tpu.memory_space<vmem>>, vector<128x128xbf16>
    %c0_20 = arith.constant 0 : index
    %c0_21 = arith.constant 0 : index
    %26 = vector.load %arg9[%c0_20, %c0_21] : memref<1x128xf32, #tpu.memory_space<vmem>>, vector<1x128xf32>
    %27 = arith.truncf %24 : vector<304x128xf32> to vector<304x128xbf16>
    %cst_22 = arith.constant dense<0.000000e+00> : vector<304x128xf32>
    %28 = tpu.matmul %27, %25, %cst_22 {dimension_numbers = #tpu.dot_dimension_numbers<[1], [0], [0], [1], [0, 0, 1, 1], [], []>} : vector<304x128xbf16>, vector<128x128xbf16>, vector<304x128xf32> -> vector<304x128xf32>
    %29 = vector.broadcast %26 : vector<1x128xf32> to vector<304x128xf32>
    %30 = arith.addf %28, %29 : vector<304x128xf32>
    %c0_23 = arith.constant 0 : index
    %c0_24 = arith.constant 0 : index
    %31 = vector.load %arg10[%c0_23, %c0_24] : memref<128x128xbf16, #tpu.memory_space<vmem>>, vector<128x128xbf16>
    %c0_25 = arith.constant 0 : index
    %c0_26 = arith.constant 0 : index
    %32 = vector.load %arg11[%c0_25, %c0_26] : memref<1x128xf32, #tpu.memory_space<vmem>>, vector<1x128xf32>
    %33 = arith.truncf %30 : vector<304x128xf32> to vector<304x128xbf16>
    %cst_27 = arith.constant dense<0.000000e+00> : vector<304x128xf32>
    %34 = tpu.matmul %33, %31, %cst_27 {dimension_numbers = #tpu.dot_dimension_numbers<[1], [0], [0], [1], [0, 0, 1, 1], [], []>} : vector<304x128xbf16>, vector<128x128xbf16>, vector<304x128xf32> -> vector<304x128xf32>
    %35 = vector.broadcast %32 : vector<1x128xf32> to vector<304x128xf32>
    %36 = arith.addf %34, %35 : vector<304x128xf32>
    %cst_28 = arith.constant 0.000000e+00 : f32
    %37 = vector.broadcast %cst_28 : f32 to vector<304x128xf32>
    %38 = arith.maximumf %36, %37 : vector<304x128xf32>
    %c0_29 = arith.constant 0 : index
    %c0_30 = arith.constant 0 : index
    %39 = vector.load %arg12[%c0_29, %c0_30] : memref<128x128xbf16, #tpu.memory_space<vmem>>, vector<128x128xbf16>
    %c0_31 = arith.constant 0 : index
    %c0_32 = arith.constant 0 : index
    %40 = vector.load %arg13[%c0_31, %c0_32] : memref<1x128xf32, #tpu.memory_space<vmem>>, vector<1x128xf32>
    %41 = arith.truncf %38 : vector<304x128xf32> to vector<304x128xbf16>
    %cst_33 = arith.constant dense<0.000000e+00> : vector<304x128xf32>
    %42 = tpu.matmul %41, %39, %cst_33 {dimension_numbers = #tpu.dot_dimension_numbers<[1], [0], [0], [1], [0, 0, 1, 1], [], []>} : vector<304x128xbf16>, vector<128x128xbf16>, vector<304x128xf32> -> vector<304x128xf32>
    %43 = vector.broadcast %40 : vector<1x128xf32> to vector<304x128xf32>
    %44 = arith.addf %42, %43 : vector<304x128xf32>
    %cst_34 = arith.constant 0.000000e+00 : f32
    %45 = vector.broadcast %cst_34 : f32 to vector<304x128xf32>
    %46 = arith.maximumf %44, %45 : vector<304x128xf32>
    %c0_35 = arith.constant 0 : index
    %c0_36 = arith.constant 0 : index
    %47 = vector.load %arg14[%c0_35, %c0_36] : memref<128x256xbf16, #tpu.memory_space<vmem>>, vector<128x256xbf16>
    %c0_37 = arith.constant 0 : index
    %c0_38 = arith.constant 0 : index
    %48 = vector.load %arg15[%c0_37, %c0_38] : memref<1x256xf32, #tpu.memory_space<vmem>>, vector<1x256xf32>
    %49 = arith.truncf %46 : vector<304x128xf32> to vector<304x128xbf16>
    %cst_39 = arith.constant dense<0.000000e+00> : vector<304x256xf32>
    %50 = tpu.matmul %49, %47, %cst_39 {dimension_numbers = #tpu.dot_dimension_numbers<[1], [0], [0], [1], [0, 0, 1, 1], [], []>} : vector<304x128xbf16>, vector<128x256xbf16>, vector<304x256xf32> -> vector<304x256xf32>
    %51 = vector.broadcast %48 : vector<1x256xf32> to vector<304x256xf32>
    %52 = arith.addf %50, %51 : vector<304x256xf32>
    %cst_40 = arith.constant 0.000000e+00 : f32
    %53 = vector.broadcast %cst_40 : f32 to vector<304x256xf32>
    %54 = arith.maximumf %52, %53 : vector<304x256xf32>
    %c0_41 = arith.constant 0 : index
    %c0_42 = arith.constant 0 : index
    %55 = vector.load %arg16[%c0_41, %c0_42] : memref<256x560xbf16, #tpu.memory_space<vmem>>, vector<256x560xbf16>
    %c0_43 = arith.constant 0 : index
    %c0_44 = arith.constant 0 : index
    %56 = vector.load %arg17[%c0_43, %c0_44] : memref<1x560xf32, #tpu.memory_space<vmem>>, vector<1x560xf32>
    %57 = arith.truncf %54 : vector<304x256xf32> to vector<304x256xbf16>
    %cst_45 = arith.constant dense<0.000000e+00> : vector<304x560xf32>
    %58 = tpu.matmul %57, %55, %cst_45 {dimension_numbers = #tpu.dot_dimension_numbers<[1], [0], [0], [1], [0, 0, 1, 1], [], []>} : vector<304x256xbf16>, vector<256x560xbf16>, vector<304x560xf32> -> vector<304x560xf32>
    %59 = vector.broadcast %56 : vector<1x560xf32> to vector<304x560xf32>
    %60 = arith.addf %58, %59 : vector<304x560xf32>
    %61 = arith.negf %60 : vector<304x560xf32>
    %62 = math.exp %61 : vector<304x560xf32>
    %cst_46 = arith.constant 1.000000e+00 : f32
    %63 = vector.broadcast %cst_46 : f32 to vector<304x560xf32>
    %64 = arith.addf %63, %62 : vector<304x560xf32>
    %65 = arith.divf %63, %64 : vector<304x560xf32>
    %c0_47 = arith.constant 0 : index
    %c0_48 = arith.constant 0 : index
    %66 = vector.load %arg18[%c0_47, %c0_48] : memref<304x560xf32, #tpu.memory_space<vmem>>, vector<304x560xf32>
    tpu.vector_store %arg18[%c0_47, %c0_48], %65 {strides = array<i32>} : memref<304x560xf32, #tpu.memory_space<vmem>>, vector<304x560xf32>,
    return
  }
  func.func @transform_0(%arg0: i32) -> (i32, i32) {
    %c0_i32 = arith.constant 0 : i32
    %c0_i32_0 = arith.constant 0 : i32
    return %arg0, %c0_i32 : i32, i32
  }
  func.func @transform_1(%arg0: i32) -> (i32, i32) {
    %c0_i32 = arith.constant 0 : i32
    %c0_i32_0 = arith.constant 0 : i32
    %c0_i32_1 = arith.constant 0 : i32
    return %c0_i32, %c0_i32_0 : i32, i32
  }
  func.func @transform_2(%arg0: i32) -> (i32, i32) {
    %c0_i32 = arith.constant 0 : i32
    %c0_i32_0 = arith.constant 0 : i32
    %c0_i32_1 = arith.constant 0 : i32
    return %c0_i32, %c0_i32_0 : i32, i32
  }
  func.func @transform_3(%arg0: i32) -> (i32, i32) {
    %c0_i32 = arith.constant 0 : i32
    %c0_i32_0 = arith.constant 0 : i32
    %c0_i32_1 = arith.constant 0 : i32
    return %c0_i32, %c0_i32_0 : i32, i32
  }
  func.func @transform_4(%arg0: i32) -> (i32, i32) {
    %c0_i32 = arith.constant 0 : i32
    %c0_i32_0 = arith.constant 0 : i32
    %c0_i32_1 = arith.constant 0 : i32
    return %c0_i32, %c0_i32_0 : i32, i32
  }
  func.func @transform_5(%arg0: i32) -> (i32, i32) {
    %c0_i32 = arith.constant 0 : i32
    %c0_i32_0 = arith.constant 0 : i32
    %c0_i32_1 = arith.constant 0 : i32
    return %c0_i32, %c0_i32_0 : i32, i32
  }
  func.func @transform_6(%arg0: i32) -> (i32, i32) {
    %c0_i32 = arith.constant 0 : i32
    %c0_i32_0 = arith.constant 0 : i32
    %c0_i32_1 = arith.constant 0 : i32
    return %c0_i32, %c0_i32_0 : i32, i32
  }
  func.func @transform_7(%arg0: i32) -> (i32, i32) {
    %c0_i32 = arith.constant 0 : i32
    %c0_i32_0 = arith.constant 0 : i32
    %c0_i32_1 = arith.constant 0 : i32
    return %c0_i32, %c0_i32_0 : i32, i32
  }
  func.func @transform_8(%arg0: i32) -> (i32, i32) {
    %c0_i32 = arith.constant 0 : i32
    %c0_i32_0 = arith.constant 0 : i32
    %c0_i32_1 = arith.constant 0 : i32
    return %c0_i32, %c0_i32_0 : i32, i32
  }
  func.func @transform_9(%arg0: i32) -> (i32, i32) {
    %c0_i32 = arith.constant 0 : i32
    %c0_i32_0 = arith.constant 0 : i32
    %c0_i32_1 = arith.constant 0 : i32
    return %c0_i32, %c0_i32_0 : i32, i32
  }
  func.func @transform_10(%arg0: i32) -> (i32, i32) {
    %c0_i32 = arith.constant 0 : i32
    %c0_i32_0 = arith.constant 0 : i32
    %c0_i32_1 = arith.constant 0 : i32
    return %c0_i32, %c0_i32_0 : i32, i32
  }
  func.func @transform_11(%arg0: i32) -> (i32, i32) {
    %c0_i32 = arith.constant 0 : i32
    %c0_i32_0 = arith.constant 0 : i32
    %c0_i32_1 = arith.constant 0 : i32
    return %c0_i32, %c0_i32_0 : i32, i32
  }
  func.func @transform_12(%arg0: i32) -> (i32, i32) {
    %c0_i32 = arith.constant 0 : i32
    %c0_i32_0 = arith.constant 0 : i32
    %c0_i32_1 = arith.constant 0 : i32
    return %c0_i32, %c0_i32_0 : i32, i32
  }
  func.func @transform_13(%arg0: i32) -> (i32, i32) {
    %c0_i32 = arith.constant 0 : i32
    %c0_i32_0 = arith.constant 0 : i32
    %c0_i32_1 = arith.constant 0 : i32
    return %c0_i32, %c0_i32_0 : i32, i32
  }
  func.func @transform_14(%arg0: i32) -> (i32, i32) {
    %c0_i32 = arith.constant 0 : i32
    %c0_i32_0 = arith.constant 0 : i32
    %c0_i32_1 = arith.constant 0 : i32
    return %c0_i32, %c0_i32_0 : i32, i32
  }
  func.func @transform_15(%arg0: i32) -> (i32, i32) {
    %c0_i32 = arith.constant 0 : i32
    %c0_i32_0 = arith.constant 0 : i32
    %c0_i32_1 = arith.constant 0 : i32
    return %c0_i32, %c0_i32_0 : i32, i32
  }
  func.func @transform_16(%arg0: i32) -> (i32, i32) {
    %c0_i32 = arith.constant 0 : i32
    %c0_i32_0 = arith.constant 0 : i32
    %c0_i32_1 = arith.constant 0 : i32
    return %c0_i32, %c0_i32_0 : i32, i32
  }
  func.func @transform_17(%arg0: i32) -> (i32, i32) {
    %c0_i32 = arith.constant 0 : i32
    %c0_i32_0 = arith.constant 0 : i32
    return %arg0, %c0_i32 : i32, i32
  }
}

</mosaic_0001>

<llo_original>
// kernel: autoencoder_forward.1
$region0: #{autoencoder_forward.1}
  #allocation0 [shape = 'u32[]', space=smem, size = 0x4, offset = 0x4, fixed_abs, tag = 'smem constant byte address 0x4 - core index']
  #allocation1 [shape = 'u32[144,128]{1,0:T(1,128)}', space=vmem, size = 0x12000, scoped, tag = 'internal scratch']
  %s0 = inlined_call_operand.vmem [shape: f32[304,560], index: 0, kind: input, shape index: {}]
  %s1 = inlined_call_operand.vmem [shape: bf16[560,256], index: 1, kind: input, shape index: {}]
  %s2 = inlined_call_operand.vmem [shape: f32[1,256], index: 2, kind: input, shape index: {}]
  %s3 = inlined_call_operand.vmem [shape: bf16[256,128], index: 3, kind: input, shape index: {}]
  %s4 = inlined_call_operand.vmem [shape: f32[1,128], index: 4, kind: input, shape index: {}]
  %s5 = inlined_call_operand.vmem [shape: bf16[128,128], index: 5, kind: input, shape index: {}]
  %s6 = inlined_call_operand.vmem [shape: f32[1,128], index: 6, kind: input, shape index: {}]
  %s7 = inlined_call_operand.vmem [shape: bf16[128,128], index: 7, kind: input, shape index: {}]
  %s8 = inlined_call_operand.vmem [shape: f32[1,128], index: 8, kind: input, shape index: {}]
  %s9 = inlined_call_operand.vmem [shape: bf16[128,128], index: 9, kind: input, shape index: {}]
  %s10 = inlined_call_operand.vmem [shape: f32[1,128], index: 10, kind: input, shape index: {}]
  %s11 = inlined_call_operand.vmem [shape: bf16[128,128], index: 11, kind: input, shape index: {}]
  %s12 = inlined_call_operand.vmem [shape: f32[1,128], index: 12, kind: input, shape index: {}]
  %s13 = inlined_call_operand.vmem [shape: bf16[128,256], index: 13, kind: input, shape index: {}]
  %s14 = inlined_call_operand.vmem [shape: f32[1,256], index: 14, kind: input, shape index: {}]
  %s15 = inlined_call_operand.vmem [shape: bf16[256,560], index: 15, kind: input, shape index: {}]
  %s16 = inlined_call_operand.vmem [shape: f32[1,560], index: 16, kind: input, shape index: {}]
  %s17 = inlined_call_operand.hbm [shape: f32[304,560], index: 17, kind: output, shape index: {}]
  %s18 = sld [smem:[#allocation0]]
  $region78: #{autoencoder_forward.1} parent=0
    _
  %s20 = ssub.s32 1, %s18
  %s21 = scalar_select 0, %s20, %s18
  $region1: #{autoencoder_forward.1} parent=0
    #allocation2 [shape = 'u8[778240]{0}', space=vmem, size = 0xbe000, scoped, tag = 'output window, operand 0, single buffered']
    #allocation3 [shape = 's32[1]{0}', space=sflag, size = 0x4, scoped, tag = 'scoped memory for autoencoder_forward.1']
    %22 = vsyncpa [#allocation3], 0
    // Predicated region
    $region2: #{autoencoder_forward.1} parent=1 // pred_check
      _
    $region3: #{autoencoder_forward.1} parent=1 // pred_check_branch
      %24 = sbr.rel (0) target = $region5
    $region4: #{autoencoder_forward.1} parent=1 // pred_region
      _
    $region5: #{autoencoder_forward.1} parent=1 // pred_fallthru
      _
    // Predicated region
    $region6: #{autoencoder_forward.1} parent=1 // pred_check
      _
    $region7: #{autoencoder_forward.1} parent=1 // pred_check_branch
      %26 = sbr.rel (0) target = $region9
    $region8: #{autoencoder_forward.1} parent=1 // pred_region
      _
    $region9: #{autoencoder_forward.1} parent=1 // pred_fallthru
      _
    // Predicated region
    $region10: #{autoencoder_forward.1} parent=1 // pred_check
      _
    $region11: #{autoencoder_forward.1} parent=1 // pred_check_branch
      %28 = sbr.rel (0) target = $region13
    $region12: #{autoencoder_forward.1} parent=1 // pred_region
      _
    $region13: #{autoencoder_forward.1} parent=1 // pred_fallthru
      _
    // Predicated region
    $region14: #{autoencoder_forward.1} parent=1 // pred_check
      _
    $region15: #{autoencoder_forward.1} parent=1 // pred_check_branch
      %30 = sbr.rel (0) target = $region17
    $region16: #{autoencoder_forward.1} parent=1 // pred_region
      _
    $region17: #{autoencoder_forward.1} parent=1 // pred_fallthru
      _
    // Predicated region
    $region18: #{autoencoder_forward.1} parent=1 // pred_check
      _
    $region19: #{autoencoder_forward.1} parent=1 // pred_check_branch
      %32 = sbr.rel (0) target = $region21
    $region20: #{autoencoder_forward.1} parent=1 // pred_region
      _
    $region21: #{autoencoder_forward.1} parent=1 // pred_fallthru
      _
    // Predicated region
    $region22: #{autoencoder_forward.1} parent=1 // pred_check
      _
    $region23: #{autoencoder_forward.1} parent=1 // pred_check_branch
      %34 = sbr.rel (0) target = $region25
    $region24: #{autoencoder_forward.1} parent=1 // pred_region
      _
    $region25: #{autoencoder_forward.1} parent=1 // pred_fallthru
      _
    // Predicated region
    $region26: #{autoencoder_forward.1} parent=1 // pred_check
      _
    $region27: #{autoencoder_forward.1} parent=1 // pred_check_branch
      %36 = sbr.rel (0) target = $region29
    $region28: #{autoencoder_forward.1} parent=1 // pred_region
      _
    $region29: #{autoencoder_forward.1} parent=1 // pred_fallthru
      _
    // Predicated region
    $region30: #{autoencoder_forward.1} parent=1 // pred_check
      _
    $region31: #{autoencoder_forward.1} parent=1 // pred_check_branch
      %38 = sbr.rel (0) target = $region33
    $region32: #{autoencoder_forward.1} parent=1 // pred_region
      _
    $region33: #{autoencoder_forward.1} parent=1 // pred_fallthru
      _
    // Predicated region
    $region34: #{autoencoder_forward.1} parent=1 // pred_check
      _
    $region35: #{autoencoder_forward.1} parent=1 // pred_check_branch
      %40 = sbr.rel (0) target = $region37
    $region36: #{autoencoder_forward.1} parent=1 // pred_region
      _
    $region37: #{autoencoder_forward.1} parent=1 // pred_fallthru
      _
    // Predicated region
    $region38: #{autoencoder_forward.1} parent=1 // pred_check
      _
    $region39: #{autoencoder_forward.1} parent=1 // pred_check_branch
      %42 = sbr.rel (0) target = $region41
    $region40: #{autoencoder_forward.1} parent=1 // pred_region
      _
    $region41: #{autoencoder_forward.1} parent=1 // pred_fallthru
      _
    // Predicated region
    $region42: #{autoencoder_forward.1} parent=1 // pred_check
      _
    $region43: #{autoencoder_forward.1} parent=1 // pred_check_branch
      %44 = sbr.rel (0) target = $region45
    $region44: #{autoencoder_forward.1} parent=1 // pred_region
      _
    $region45: #{autoencoder_forward.1} parent=1 // pred_fallthru
      _
    // Predicated region
    $region46: #{autoencoder_forward.1} parent=1 // pred_check
      _
    $region47: #{autoencoder_forward.1} parent=1 // pred_check_branch
      %46 = sbr.rel (0) target = $region49
    $region48: #{autoencoder_forward.1} parent=1 // pred_region
      _
    $region49: #{autoencoder_forward.1} parent=1 // pred_fallthru
      _
    // Predicated region
    $region50: #{autoencoder_forward.1} parent=1 // pred_check
      _
    $region51: #{autoencoder_forward.1} parent=1 // pred_check_branch
      %48 = sbr.rel (0) target = $region53
    $region52: #{autoencoder_forward.1} parent=1 // pred_region
      _
    $region53: #{autoencoder_forward.1} parent=1 // pred_fallthru
      _
    // Predicated region
    $region54: #{autoencoder_forward.1} parent=1 // pred_check
      _
    $region55: #{autoencoder_forward.1} parent=1 // pred_check_branch
      %50 = sbr.rel (0) target = $region57
    $region56: #{autoencoder_forward.1} parent=1 // pred_region
      _
    $region57: #{autoencoder_forward.1} parent=1 // pred_fallthru
      _
    // Predicated region
    $region58: #{autoencoder_forward.1} parent=1 // pred_check
      _
    $region59: #{autoencoder_forward.1} parent=1 // pred_check_branch
      %52 = sbr.rel (0) target = $region61
    $region60: #{autoencoder_forward.1} parent=1 // pred_region
      _
    $region61: #{autoencoder_forward.1} parent=1 // pred_fallthru
      _
    // Predicated region
    $region62: #{autoencoder_forward.1} parent=1 // pred_check
      _
    $region63: #{autoencoder_forward.1} parent=1 // pred_check_branch
      %54 = sbr.rel (0) target = $region65
    $region64: #{autoencoder_forward.1} parent=1 // pred_region
      _
    $region65: #{autoencoder_forward.1} parent=1 // pred_fallthru
      _
    // Predicated region
    $region66: #{autoencoder_forward.1} parent=1 // pred_check
      _
    $region67: #{autoencoder_forward.1} parent=1 // pred_check_branch
      %56 = sbr.rel (0) target = $region69
    $region68: #{autoencoder_forward.1} parent=1 // pred_region
      _
    $region69: #{autoencoder_forward.1} parent=1 // pred_fallthru
      _
    %v58 = vld [vmem:[%s0] sm:$0xff]
    %v59 = vld [vmem:[%s0 + $0x8] sm:$0xff]
    %v60 = vld [vmem:[%s0 + $0x10] sm:$0xff]
    %v61 = vld [vmem:[%s0 + $0x18] sm:$0xff]
    %v62 = vld [vmem:[%s0 + $0x20] sm:$0xff]
    %v63 = vld [vmem:[%s0 + $0x28] sm:$0xff]
    %v64 = vld [vmem:[%s0 + $0x30] sm:$0xff]
    %v65 = vld [vmem:[%s0 + $0x38] sm:$0xff]
    %v66 = vld [vmem:[%s0 + $0x40] sm:$0xff]
    %v67 = vld [vmem:[%s0 + $0x48] sm:$0xff]
    %v68 = vld [vmem:[%s0 + $0x50] sm:$0xff]
    %v69 = vld [vmem:[%s0 + $0x58] sm:$0xff]
    %v70 = vld [vmem:[%s0 + $0x60] sm:$0xff]
    %v71 = vld [vmem:[%s0 + $0x68] sm:$0xff]
    %v72 = vld [vmem:[%s0 + $0x70] sm:$0xff]
    %v73 = vld [vmem:[%s0 + $0x78] sm:$0xff]
    %v74 = vld [vmem:[%s0 + $0x80] sm:$0xff]
    %v75 = vld [vmem:[%s0 + $0x88] sm:$0xff]
    %v76 = vld [vmem:[%s0 + $0x90] sm:$0xff]
    %v77 = vld [vmem:[%s0 + $0x98] sm:$0xff]
    %v78 = vld [vmem:[%s0 + $0xa0] sm:$0xff]
    %v79 = vld [vmem:[%s0 + $0xa8] sm:$0xff]
    %v80 = vld [vmem:[%s0 + $0xb0] sm:$0xff]
    %v81 = vld [vmem:[%s0 + $0xb8] sm:$0xff]
    %v82 = vld [vmem:[%s0 + $0xc0] sm:$0xff]
    %v83 = vld [vmem:[%s0 + $0xc8] sm:$0xff]
    %v84 = vld [vmem:[%s0 + $0xd0] sm:$0xff]
    %v85 = vld [vmem:[%s0 + $0xd8] sm:$0xff]
    %v86 = vld [vmem:[%s0 + $0xe0] sm:$0xff]
    %v87 = vld [vmem:[%s0 + $0xe8] sm:$0xff]
    %v88 = vld [vmem:[%s0 + $0xf0] sm:$0xff]
    %v89 = vld [vmem:[%s0 + $0xf8] sm:$0xff]
    %v90 = vld [vmem:[%s0 + $0x100] sm:$0xff]
    %v91 = vld [vmem:[%s0 + $0x108] sm:$0xff]
    %v92 = vld [vmem:[%s0 + $0x110] sm:$0xff]
    %v93 = vld [vmem:[%s0 + $0x118] sm:$0xff]
    %v94 = vld [vmem:[%s0 + $0x120] sm:$0xff]
    %v95 = vld [vmem:[%s0 + $0x128] sm:$0xff]
    %v96 = vld [vmem:[%s0 + $0x130] sm:$0xff]
    %v97 = vld [vmem:[%s0 + $0x138] sm:$0xff]
    %v98 = vld [vmem:[%s0 + $0x140] sm:$0xff]
    %v99 = vld [vmem:[%s0 + $0x148] sm:$0xff]
    %v100 = vld [vmem:[%s0 + $0x150] sm:$0xff]
    %v101 = vld [vmem:[%s0 + $0x158] sm:$0xff]
    %v102 = vld [vmem:[%s0 + $0x160] sm:$0xff]
    %v103 = vld [vmem:[%s0 + $0x168] sm:$0xff]
    %v104 = vld [vmem:[%s0 + $0x170] sm:$0xff]
    %v105 = vld [vmem:[%s0 + $0x178] sm:$0xff]
    %v106 = vld [vmem:[%s0 + $0x180] sm:$0xff]
    %v107 = vld [vmem:[%s0 + $0x188] sm:$0xff]
    %v108 = vld [vmem:[%s0 + $0x190] sm:$0xff]
    %v109 = vld [vmem:[%s0 + $0x198] sm:$0xff]
    %v110 = vld [vmem:[%s0 + $0x1a0] sm:$0xff]
    %v111 = vld [vmem:[%s0 + $0x1a8] sm:$0xff]
    %v112 = vld [vmem:[%s0 + $0x1b0] sm:$0xff]
    %v113 = vld [vmem:[%s0 + $0x1b8] sm:$0xff]
    %v114 = vld [vmem:[%s0 + $0x1c0] sm:$0xff]
    %v115 = vld [vmem:[%s0 + $0x1c8] sm:$0xff]
    %v116 = vld [vmem:[%s0 + $0x1d0] sm:$0xff]
    %v117 = vld [vmem:[%s0 + $0x1d8] sm:$0xff]
    %v118 = vld [vmem:[%s0 + $0x1e0] sm:$0xff]
    %v119 = vld [vmem:[%s0 + $0x1e8] sm:$0xff]
    %v120 = vld [vmem:[%s0 + $0x1f0] sm:$0xff]
    %v121 = vld [vmem:[%s0 + $0x1f8] sm:$0xff]
    %v122 = vld [vmem:[%s0 + $0x200] sm:$0xff]
    %v123 = vld [vmem:[%s0 + $0x208] sm:$0xff]
    %v124 = vld [vmem:[%s0 + $0x210] sm:$0xff]
    %v125 = vld [vmem:[%s0 + $0x218] sm:$0xff]
    %v126 = vld [vmem:[%s0 + $0x220] sm:$0xff]
    %v127 = vld [vmem:[%s0 + $0x228] sm:$0xff]
    %v128 = vld [vmem:[%s0 + $0x230] sm:$0xff]
    %v129 = vld [vmem:[%s0 + $0x238] sm:$0xff]
    %v130 = vld [vmem:[%s0 + $0x240] sm:$0xff]
    %v131 = vld [vmem:[%s0 + $0x248] sm:$0xff]
    %v132 = vld [vmem:[%s0 + $0x250] sm:$0xff]
    %v133 = vld [vmem:[%s0 + $0x258] sm:$0xff]
    %v134 = vld [vmem:[%s0 + $0x260] sm:$0xff]
    %v135 = vld [vmem:[%s0 + $0x268] sm:$0xff]
    %v136 = vld [vmem:[%s0 + $0x270] sm:$0xff]
    %v137 = vld [vmem:[%s0 + $0x278] sm:$0xff]
    %v138 = vld [vmem:[%s0 + $0x280] sm:$0xff]
    %v139 = vld [vmem:[%s0 + $0x288] sm:$0xff]
    %v140 = vld [vmem:[%s0 + $0x290] sm:$0xff]
    %v141 = vld [vmem:[%s0 + $0x298] sm:$0xff]
    %v142 = vld [vmem:[%s0 + $0x2a0] sm:$0xff]
    %v143 = vld [vmem:[%s0 + $0x2a8] sm:$0xff]
    %v144 = vld [vmem:[%s0 + $0x2b0] sm:$0xff]
    %v145 = vld [vmem:[%s0 + $0x2b8] sm:$0xff]
    %v146 = vld [vmem:[%s0 + $0x2c0] sm:$0xff]
    %v147 = vld [vmem:[%s0 + $0x2c8] sm:$0xff]
    %v148 = vld [vmem:[%s0 + $0x2d0] sm:$0xff]
    %v149 = vld [vmem:[%s0 + $0x2d8] sm:$0xff]
    %v150 = vld [vmem:[%s0 + $0x2e0] sm:$0xff]
    %v151 = vld [vmem:[%s0 + $0x2e8] sm:$0xff]
    %v152 = vld [vmem:[%s0 + $0x2f0] sm:$0xff]
    %v153 = vld [vmem:[%s0 + $0x2f8] sm:$0xff]
    %v154 = vld [vmem:[%s0 + $0x300] sm:$0xff]
    %v155 = vld [vmem:[%s0 + $0x308] sm:$0xff]
    %v156 = vld [vmem:[%s0 + $0x310] sm:$0xff]
    %v157 = vld [vmem:[%s0 + $0x318] sm:$0xff]
    %v158 = vld [vmem:[%s0 + $0x320] sm:$0xff]
    %v159 = vld [vmem:[%s0 + $0x328] sm:$0xff]
    %v160 = vld [vmem:[%s0 + $0x330] sm:$0xff]
    %v161 = vld [vmem:[%s0 + $0x338] sm:$0xff]
    %v162 = vld [vmem:[%s0 + $0x340] sm:$0xff]
    %v163 = vld [vmem:[%s0 + $0x348] sm:$0xff]
    %v164 = vld [vmem:[%s0 + $0x350] sm:$0xff]
    %v165 = vld [vmem:[%s0 + $0x358] sm:$0xff]
    %v166 = vld [vmem:[%s0 + $0x360] sm:$0xff]
    %v167 = vld [vmem:[%s0 + $0x368] sm:$0xff]
    %v168 = vld [vmem:[%s0 + $0x370] sm:$0xff]
    %v169 = vld [vmem:[%s0 + $0x378] sm:$0xff]
    %v170 = vld [vmem:[%s0 + $0x380] sm:$0xff]
    %v171 = vld [vmem:[%s0 + $0x388] sm:$0xff]
    %v172 = vld [vmem:[%s0 + $0x390] sm:$0xff]
    %v173 = vld [vmem:[%s0 + $0x398] sm:$0xff]
    %v174 = vld [vmem:[%s0 + $0x3a0] sm:$0xff]
    %v175 = vld [vmem:[%s0 + $0x3a8] sm:$0xff]
    %v176 = vld [vmem:[%s0 + $0x3b0] sm:$0xff]
    %v177 = vld [vmem:[%s0 + $0x3b8] sm:$0xff]
    %v178 = vld [vmem:[%s0 + $0x3c0] sm:$0xff]
    %v179 = vld [vmem:[%s0 + $0x3c8] sm:$0xff]
    %v180 = vld [vmem:[%s0 + $0x3d0] sm:$0xff]
    %v181 = vld [vmem:[%s0 + $0x3d8] sm:$0xff]
    %v182 = vld [vmem:[%s0 + $0x3e0] sm:$0xff]
    %v183 = vld [vmem:[%s0 + $0x3e8] sm:$0xff]
    %v184 = vld [vmem:[%s0 + $0x3f0] sm:$0xff]
    %v185 = vld [vmem:[%s0 + $0x3f8] sm:$0xff]
    %v186 = vld [vmem:[%s0 + $0x400] sm:$0xff]
    %v187 = vld [vmem:[%s0 + $0x408] sm:$0xff]
    %v188 = vld [vmem:[%s0 + $0x410] sm:$0xff]
    %v189 = vld [vmem:[%s0 + $0x418] sm:$0xff]
    %v190 = vld [vmem:[%s0 + $0x420] sm:$0xff]
    %v191 = vld [vmem:[%s0 + $0x428] sm:$0xff]
    %v192 = vld [vmem:[%s0 + $0x430] sm:$0xff]
    %v193 = vld [vmem:[%s0 + $0x438] sm:$0xff]
    %v194 = vld [vmem:[%s0 + $0x440] sm:$0xff]
    %v195 = vld [vmem:[%s0 + $0x448] sm:$0xff]
    %v196 = vld [vmem:[%s0 + $0x450] sm:$0xff]
    %v197 = vld [vmem:[%s0 + $0x458] sm:$0xff]
    %v198 = vld [vmem:[%s0 + $0x460] sm:$0xff]
    %v199 = vld [vmem:[%s0 + $0x468] sm:$0xff]
    %v200 = vld [vmem:[%s0 + $0x470] sm:$0xff]
    %v201 = vld [vmem:[%s0 + $0x478] sm:$0xff]
    %v202 = vld [vmem:[%s0 + $0x480] sm:$0xff]
    %v203 = vld [vmem:[%s0 + $0x488] sm:$0xff]
    %v204 = vld [vmem:[%s0 + $0x490] sm:$0xff]
    %v205 = vld [vmem:[%s0 + $0x498] sm:$0xff]
    %v206 = vld [vmem:[%s0 + $0x4a0] sm:$0xff]
    %v207 = vld [vmem:[%s0 + $0x4a8] sm:$0xff]
    %v208 = vld [vmem:[%s0 + $0x4b0] sm:$0xff]
    %v209 = vld [vmem:[%s0 + $0x4b8] sm:$0xff]
    %v210 = vld [vmem:[%s0 + $0x4c0] sm:$0xff]
    %v211 = vld [vmem:[%s0 + $0x4c8] sm:$0xff]
    %v212 = vld [vmem:[%s0 + $0x4d0] sm:$0xff]
    %v213 = vld [vmem:[%s0 + $0x4d8] sm:$0xff]
    %v214 = vld [vmem:[%s0 + $0x4e0] sm:$0xff]
    %v215 = vld [vmem:[%s0 + $0x4e8] sm:$0xff]
    %v216 = vld [vmem:[%s0 + $0x4f0] sm:$0xff]
    %v217 = vld [vmem:[%s0 + $0x4f8] sm:$0xff]
    %v218 = vld [vmem:[%s0 + $0x500] sm:$0xff]
    %v219 = vld [vmem:[%s0 + $0x508] sm:$0xff]
    %v220 = vld [vmem:[%s0 + $0x510] sm:$0xff]
    %v221 = vld [vmem:[%s0 + $0x518] sm:$0xff]
    %v222 = vld [vmem:[%s0 + $0x520] sm:$0xff]
    %v223 = vld [vmem:[%s0 + $0x528] sm:$0xff]
    %v224 = vld [vmem:[%s0 + $0x530] sm:$0xff]
    %v225 = vld [vmem:[%s0 + $0x538] sm:$0xff]
    %v226 = vld [vmem:[%s0 + $0x540] sm:$0xff]
    %v227 = vld [vmem:[%s0 + $0x548] sm:$0xff]
    %v228 = vld [vmem:[%s0 + $0x550] sm:$0xff]
    %v229 = vld [vmem:[%s0 + $0x558] sm:$0xff]
    %v230 = vld [vmem:[%s0 + $0x560] sm:$0xff]
    %v231 = vld [vmem:[%s0 + $0x568] sm:$0xff]
    %v232 = vld [vmem:[%s0 + $0x570] sm:$0xff]
    %v233 = vld [vmem:[%s0 + $0x578] sm:$0xff]
    %v234 = vld [vmem:[%s0 + $0x580] sm:$0xff]
    %v235 = vld [vmem:[%s0 + $0x588] sm:$0xff]
    %v236 = vld [vmem:[%s0 + $0x590] sm:$0xff]
    %v237 = vld [vmem:[%s0 + $0x598] sm:$0xff]
    %v238 = vld [vmem:[%s0 + $0x5a0] sm:$0xff]
    %v239 = vld [vmem:[%s0 + $0x5a8] sm:$0xff]
    %v240 = vld [vmem:[%s0 + $0x5b0] sm:$0xff]
    %v241 = vld [vmem:[%s0 + $0x5b8] sm:$0xff]
    %v242 = vld [vmem:[%s0 + $0x5c0] sm:$0xff]
    %v243 = vld [vmem:[%s0 + $0x5c8] sm:$0xff]
    %v244 = vld [vmem:[%s0 + $0x5d0] sm:$0xff]
    %v245 = vld [vmem:[%s0 + $0x5d8] sm:$0xff]
    %v246 = vld [vmem:[%s0 + $0x5e0] sm:$0xff]
    %v247 = vld [vmem:[%s0 + $0x5e8] sm:$0xff]
    %v248 = vld [vmem:[%s1] sm:$0xff]
    %v249 = vld [vmem:[%s1 + $0x8] sm:$0xff]
    %v250 = vld [vmem:[%s1 + $0x10] sm:$0xff]
    %v251 = vld [vmem:[%s1 + $0x18] sm:$0xff]
    %v252 = vld [vmem:[%s1 + $0x20] sm:$0xff]
    %v253 = vld [vmem:[%s1 + $0x28] sm:$0xff]
    %v254 = vld [vmem:[%s1 + $0x30] sm:$0xff]
    %v255 = vld [vmem:[%s1 + $0x38] sm:$0xff]
    %v256 = vld [vmem:[%s1 + $0x40] sm:$0xff]
    %v257 = vld [vmem:[%s1 + $0x48] sm:$0xff]
    %v258 = vld [vmem:[%s1 + $0x50] sm:$0xff]
    %v259 = vld [vmem:[%s1 + $0x58] sm:$0xff]
    %v260 = vld [vmem:[%s1 + $0x60] sm:$0xff]
    %v261 = vld [vmem:[%s1 + $0x68] sm:$0xff]
    %v262 = vld [vmem:[%s1 + $0x70] sm:$0xff]
    %v263 = vld [vmem:[%s1 + $0x78] sm:$0xff]
    %v264 = vld [vmem:[%s1 + $0x80] sm:$0xff]
    %v265 = vld [vmem:[%s1 + $0x88] sm:$0xff]
    %v266 = vld [vmem:[%s1 + $0x90] sm:$0xff]
    %v267 = vld [vmem:[%s1 + $0x98] sm:$0xff]
    %v268 = vld [vmem:[%s1 + $0xa0] sm:$0xff]
    %v269 = vld [vmem:[%s1 + $0xa8] sm:$0xff]
    %v270 = vld [vmem:[%s1 + $0xb0] sm:$0xff]
    %v271 = vld [vmem:[%s1 + $0xb8] sm:$0xff]
    %v272 = vld [vmem:[%s1 + $0xc0] sm:$0xff]
    %v273 = vld [vmem:[%s1 + $0xc8] sm:$0xff]
    %v274 = vld [vmem:[%s1 + $0xd0] sm:$0xff]
    %v275 = vld [vmem:[%s1 + $0xd8] sm:$0xff]
    %v276 = vld [vmem:[%s1 + $0xe0] sm:$0xff]
    %v277 = vld [vmem:[%s1 + $0xe8] sm:$0xff]
    %v278 = vld [vmem:[%s1 + $0xf0] sm:$0xff]
    %v279 = vld [vmem:[%s1 + $0xf8] sm:$0xff]
    %v280 = vld [vmem:[%s1 + $0x100] sm:$0xff]
    %v281 = vld [vmem:[%s1 + $0x108] sm:$0xff]
    %v282 = vld [vmem:[%s1 + $0x110] sm:$0xff]
    %v283 = vld [vmem:[%s1 + $0x118] sm:$0xff]
    %v284 = vld [vmem:[%s1 + $0x120] sm:$0xff]
    %v285 = vld [vmem:[%s1 + $0x128] sm:$0xff]
    %v286 = vld [vmem:[%s1 + $0x130] sm:$0xff]
    %v287 = vld [vmem:[%s1 + $0x138] sm:$0xff]
    %v288 = vld [vmem:[%s1 + $0x140] sm:$0xff]
    %v289 = vld [vmem:[%s1 + $0x148] sm:$0xff]
    %v290 = vld [vmem:[%s1 + $0x150] sm:$0xff]
    %v291 = vld [vmem:[%s1 + $0x158] sm:$0xff]
    %v292 = vld [vmem:[%s1 + $0x160] sm:$0xff]
    %v293 = vld [vmem:[%s1 + $0x168] sm:$0xff]
    %v294 = vld [vmem:[%s1 + $0x170] sm:$0xff]
    %v295 = vld [vmem:[%s1 + $0x178] sm:$0xff]
    %v296 = vld [vmem:[%s1 + $0x180] sm:$0xff]
    %v297 = vld [vmem:[%s1 + $0x188] sm:$0xff]
    %v298 = vld [vmem:[%s1 + $0x190] sm:$0xff]
    %v299 = vld [vmem:[%s1 + $0x198] sm:$0xff]
    %v300 = vld [vmem:[%s1 + $0x1a0] sm:$0xff]
    %v301 = vld [vmem:[%s1 + $0x1a8] sm:$0xff]
    %v302 = vld [vmem:[%s1 + $0x1b0] sm:$0xff]
    %v303 = vld [vmem:[%s1 + $0x1b8] sm:$0xff]
    %v304 = vld [vmem:[%s1 + $0x1c0] sm:$0xff]
    %v305 = vld [vmem:[%s1 + $0x1c8] sm:$0xff]
    %v306 = vld [vmem:[%s1 + $0x1d0] sm:$0xff]
    %v307 = vld [vmem:[%s1 + $0x1d8] sm:$0xff]
    %v308 = vld [vmem:[%s1 + $0x1e0] sm:$0xff]
    %v309 = vld [vmem:[%s1 + $0x1e8] sm:$0xff]
    %v310 = vld [vmem:[%s1 + $0x1f0] sm:$0xff]
    %v311 = vld [vmem:[%s1 + $0x1f8] sm:$0xff]
    %v312 = vld [vmem:[%s1 + $0x200] sm:$0xff]
    %v313 = vld [vmem:[%s1 + $0x208] sm:$0xff]
    %v314 = vld [vmem:[%s1 + $0x210] sm:$0xff]
    %v315 = vld [vmem:[%s1 + $0x218] sm:$0xff]
    %v316 = vld [vmem:[%s1 + $0x220] sm:$0xff]
    %v317 = vld [vmem:[%s1 + $0x228] sm:$0xff]
    %v318 = vld [vmem:[%s2] sm:$0x3]
    %v319 = vpack.c.bf16 %v63, %v58
    %v320 = vpack.c.bf16 %v64, %v59
    %v321 = vpack.c.bf16 %v65, %v60
    %v322 = vpack.c.bf16 %v66, %v61
    %v323 = vpack.c.bf16 %v67, %v62
    %v324 = vpack.c.bf16 %v73, %v68
    %v325 = vpack.c.bf16 %v74, %v69
    %v326 = vpack.c.bf16 %v75, %v70
    %v327 = vpack.c.bf16 %v76, %v71
    %v328 = vpack.c.bf16 %v77, %v72
    %v329 = vpack.c.bf16 %v83, %v78
    %v330 = vpack.c.bf16 %v84, %v79
    %v331 = vpack.c.bf16 %v85, %v80
    %v332 = vpack.c.bf16 %v86, %v81
    %v333 = vpack.c.bf16 %v87, %v82
    %v334 = vpack.c.bf16 %v93, %v88
    %v335 = vpack.c.bf16 %v94, %v89
    %v336 = vpack.c.bf16 %v95, %v90
    %v337 = vpack.c.bf16 %v96, %v91
    %v338 = vpack.c.bf16 %v97, %v92
    %v339 = vpack.c.bf16 %v103, %v98
    %v340 = vpack.c.bf16 %v104, %v99
    %v341 = vpack.c.bf16 %v105, %v100
    %v342 = vpack.c.bf16 %v106, %v101
    %v343 = vpack.c.bf16 %v107, %v102
    %v344 = vpack.c.bf16 %v113, %v108
    %v345 = vpack.c.bf16 %v114, %v109
    %v346 = vpack.c.bf16 %v115, %v110
    %v347 = vpack.c.bf16 %v116, %v111
    %v348 = vpack.c.bf16 %v117, %v112
    %v349 = vpack.c.bf16 %v123, %v118
    %v350 = vpack.c.bf16 %v124, %v119
    %v351 = vpack.c.bf16 %v125, %v120
    %v352 = vpack.c.bf16 %v126, %v121
    %v353 = vpack.c.bf16 %v127, %v122
    %v354 = vpack.c.bf16 %v133, %v128
    %v355 = vpack.c.bf16 %v134, %v129
    %v356 = vpack.c.bf16 %v135, %v130
    %v357 = vpack.c.bf16 %v136, %v131
    %v358 = vpack.c.bf16 %v137, %v132
    %v359 = vpack.c.bf16 %v143, %v138
    %v360 = vpack.c.bf16 %v144, %v139
    %v361 = vpack.c.bf16 %v145, %v140
    %v362 = vpack.c.bf16 %v146, %v141
    %v363 = vpack.c.bf16 %v147, %v142
    %v364 = vpack.c.bf16 %v153, %v148
    %v365 = vpack.c.bf16 %v154, %v149
    %v366 = vpack.c.bf16 %v155, %v150
    %v367 = vpack.c.bf16 %v156, %v151
    %v368 = vpack.c.bf16 %v157, %v152
    %v369 = vpack.c.bf16 %v163, %v158
    %v370 = vpack.c.bf16 %v164, %v159
    %v371 = vpack.c.bf16 %v165, %v160
    %v372 = vpack.c.bf16 %v166, %v161
    %v373 = vpack.c.bf16 %v167, %v162
    %v374 = vpack.c.bf16 %v173, %v168
    %v375 = vpack.c.bf16 %v174, %v169
    %v376 = vpack.c.bf16 %v175, %v170
    %v377 = vpack.c.bf16 %v176, %v171
    %v378 = vpack.c.bf16 %v177, %v172
    %v379 = vpack.c.bf16 %v183, %v178
    %v380 = vpack.c.bf16 %v184, %v179
    %v381 = vpack.c.bf16 %v185, %v180
    %v382 = vpack.c.bf16 %v186, %v181
    %v383 = vpack.c.bf16 %v187, %v182
    %v384 = vpack.c.bf16 %v193, %v188
    %v385 = vpack.c.bf16 %v194, %v189
    %v386 = vpack.c.bf16 %v195, %v190
    %v387 = vpack.c.bf16 %v196, %v191
    %v388 = vpack.c.bf16 %v197, %v192
    %v389 = vpack.c.bf16 %v203, %v198
    %v390 = vpack.c.bf16 %v204, %v199
    %v391 = vpack.c.bf16 %v205, %v200
    %v392 = vpack.c.bf16 %v206, %v201
    %v393 = vpack.c.bf16 %v207, %v202
    %v394 = vpack.c.bf16 %v213, %v208
    %v395 = vpack.c.bf16 %v214, %v209
    %v396 = vpack.c.bf16 %v215, %v210
    %v397 = vpack.c.bf16 %v216, %v211
    %v398 = vpack.c.bf16 %v217, %v212
    %v399 = vpack.c.bf16 %v223, %v218
    %v400 = vpack.c.bf16 %v224, %v219
    %v401 = vpack.c.bf16 %v225, %v220
    %v402 = vpack.c.bf16 %v226, %v221
    %v403 = vpack.c.bf16 %v227, %v222
    %v404 = vpack.c.bf16 %v233, %v228
    %v405 = vpack.c.bf16 %v234, %v229
    %v406 = vpack.c.bf16 %v235, %v230
    %v407 = vpack.c.bf16 %v236, %v231
    %v408 = vpack.c.bf16 %v237, %v232
    %v409 = vpack.c.bf16 %v243, %v238
    %v410 = vpack.c.bf16 %v244, %v239
    %v411 = vpack.c.bf16 %v245, %v240
    %v412 = vpack.c.bf16 %v246, %v241
    %v413 = vpack.c.bf16 %v247, %v242
    %v415 = vlaneseq
    %v416 = vshrl.u32 %v415, 7
    %v417 = vsub.s32 0, %v416
    %v418 = vrot.slane %v318, %v417
    %v419 = vlaneseq
    %v420 = vshrl.u32 %v419, 7
    %v421 = vsub.s32 1, %v420
    %v422 = vrot.slane %v318, %v421
    %v495 = vunpack.c.l.b16 %v248
    %v496 = vunpack.c.h.b16 %v248
    %v497 = vunpack.c.l.b16 %v249
    %v498 = vunpack.c.h.b16 %v249
    %v499 = vunpack.c.l.b16 %v250
    %v500 = vunpack.c.h.b16 %v250
    %v501 = vunpack.c.l.b16 %v251
    %v502 = vunpack.c.h.b16 %v251
    %v503 = vunpack.c.l.b16 %v252
    %v504 = vunpack.c.h.b16 %v252
    %v505 = vunpack.c.l.b16 %v253
    %v506 = vunpack.c.h.b16 %v253
    %v507 = vunpack.c.l.b16 %v254
    %v508 = vunpack.c.h.b16 %v254
    %v509 = vunpack.c.l.b16 %v255
    %v510 = vunpack.c.h.b16 %v255
    %v511 = vunpack.c.l.b16 %v256
    %v512 = vunpack.c.h.b16 %v256
    %v513 = vunpack.c.l.b16 %v257
    %v514 = vunpack.c.h.b16 %v257
    %v515 = vunpack.c.l.b16 %v258
    %v516 = vunpack.c.h.b16 %v258
    %v517 = vunpack.c.l.b16 %v259
    %v518 = vunpack.c.h.b16 %v259
    %v519 = vunpack.c.l.b16 %v260
    %v520 = vunpack.c.h.b16 %v260
    %v521 = vunpack.c.l.b16 %v261
    %v522 = vunpack.c.h.b16 %v261
    %v523 = vunpack.c.l.b16 %v262
    %v524 = vunpack.c.h.b16 %v262
    %v525 = vunpack.c.l.b16 %v263
    %v526 = vunpack.c.h.b16 %v263
    %v527 = vunpack.c.l.b16 %v264
    %v528 = vunpack.c.h.b16 %v264
    %v529 = vunpack.c.l.b16 %v265
    %v530 = vunpack.c.h.b16 %v265
    %v531 = vunpack.c.l.b16 %v266
    %v532 = vunpack.c.h.b16 %v266
    %v533 = vunpack.c.l.b16 %v267
    %v534 = vunpack.c.h.b16 %v267
    %v535 = vunpack.c.l.b16 %v268
    %v536 = vunpack.c.h.b16 %v268
    %v537 = vunpack.c.l.b16 %v269
    %v538 = vunpack.c.h.b16 %v269
    %v539 = vunpack.c.l.b16 %v270
    %v540 = vunpack.c.h.b16 %v270
    %v541 = vunpack.c.l.b16 %v271
    %v542 = vunpack.c.h.b16 %v271
    %v543 = vunpack.c.l.b16 %v272
    %v544 = vunpack.c.h.b16 %v272
    %v545 = vunpack.c.l.b16 %v273
    %v546 = vunpack.c.h.b16 %v273
    %v547 = vunpack.c.l.b16 %v274
    %v548 = vunpack.c.h.b16 %v274
    %v549 = vunpack.c.l.b16 %v275
    %v550 = vunpack.c.h.b16 %v275
    %v551 = vunpack.c.l.b16 %v276
    %v552 = vunpack.c.h.b16 %v276
    %v553 = vunpack.c.l.b16 %v277
    %v554 = vunpack.c.h.b16 %v277
    %v555 = vunpack.c.l.b16 %v278
    %v556 = vunpack.c.h.b16 %v278
    %v557 = vunpack.c.l.b16 %v279
    %v558 = vunpack.c.h.b16 %v279
    %v559 = vunpack.c.l.b16 %v280
    %v560 = vunpack.c.h.b16 %v280
    %v561 = vunpack.c.l.b16 %v281
    %v562 = vunpack.c.h.b16 %v281
    %v563 = vunpack.c.l.b16 %v282
    %v564 = vunpack.c.h.b16 %v282
    %v565 = vunpack.c.l.b16 %v283
    %v566 = vunpack.c.h.b16 %v283
    %v567 = vunpack.c.l.b16 %v284
    %v568 = vunpack.c.h.b16 %v284
    %v569 = vunpack.c.l.b16 %v285
    %v570 = vunpack.c.h.b16 %v285
    %v571 = vunpack.c.l.b16 %v286
    %v572 = vunpack.c.h.b16 %v286
    %v573 = vunpack.c.l.b16 %v287
    %v574 = vunpack.c.h.b16 %v287
    %v575 = vunpack.c.l.b16 %v288
    %v576 = vunpack.c.h.b16 %v288
    %v577 = vunpack.c.l.b16 %v289
    %v578 = vunpack.c.h.b16 %v289
    %v579 = vunpack.c.l.b16 %v290
    %v580 = vunpack.c.h.b16 %v290
    %v581 = vunpack.c.l.b16 %v291
    %v582 = vunpack.c.h.b16 %v291
    %v583 = vunpack.c.l.b16 %v292
    %v584 = vunpack.c.h.b16 %v292
    %v585 = vunpack.c.l.b16 %v293
    %v586 = vunpack.c.h.b16 %v293
    %v587 = vunpack.c.l.b16 %v294
    %v588 = vunpack.c.h.b16 %v294
    %v589 = vunpack.c.l.b16 %v295
    %v590 = vunpack.c.h.b16 %v295
    %v591 = vunpack.c.l.b16 %v296
    %v592 = vunpack.c.h.b16 %v296
    %v593 = vunpack.c.l.b16 %v297
    %v594 = vunpack.c.h.b16 %v297
    %v595 = vunpack.c.l.b16 %v298
    %v596 = vunpack.c.h.b16 %v298
    %v597 = vunpack.c.l.b16 %v299
    %v598 = vunpack.c.h.b16 %v299
    %v599 = vunpack.c.l.b16 %v300
    %v600 = vunpack.c.h.b16 %v300
    %v601 = vunpack.c.l.b16 %v301
    %v602 = vunpack.c.h.b16 %v301
    %v603 = vunpack.c.l.b16 %v302
    %v604 = vunpack.c.h.b16 %v302
    %v605 = vunpack.c.l.b16 %v303
    %v606 = vunpack.c.h.b16 %v303
    %v607 = vunpack.c.l.b16 %v304
    %v608 = vunpack.c.h.b16 %v304
    %v609 = vunpack.c.l.b16 %v305
    %v610 = vunpack.c.h.b16 %v305
    %v611 = vunpack.c.l.b16 %v306
    %v612 = vunpack.c.h.b16 %v306
    %v613 = vunpack.c.l.b16 %v307
    %v614 = vunpack.c.h.b16 %v307
    %v615 = vunpack.c.l.b16 %v308
    %v616 = vunpack.c.h.b16 %v308
    %v617 = vunpack.c.l.b16 %v309
    %v618 = vunpack.c.h.b16 %v309
    %v619 = vunpack.c.l.b16 %v310
    %v620 = vunpack.c.h.b16 %v310
    %v621 = vunpack.c.l.b16 %v311
    %v622 = vunpack.c.h.b16 %v311
    %v623 = vunpack.c.l.b16 %v312
    %v624 = vunpack.c.h.b16 %v312
    %v625 = vunpack.c.l.b16 %v313
    %v626 = vunpack.c.h.b16 %v313
    %v627 = vunpack.c.l.b16 %v314
    %v628 = vunpack.c.h.b16 %v314
    %v629 = vunpack.c.l.b16 %v315
    %v630 = vunpack.c.h.b16 %v315
    %v631 = vunpack.c.l.b16 %v316
    %v632 = vunpack.c.h.b16 %v316
    %v633 = vunpack.c.l.b16 %v317
    %v634 = vunpack.c.h.b16 %v317
    %v635 = vpack.c.b16 %v497, %v495
    %v636 = vpack.c.b16 %v498, %v496
    %v637 = vpack.c.b16 %v501, %v499
    %v638 = vpack.c.b16 %v502, %v500
    %v639 = vpack.c.b16 %v505, %v503
    %v640 = vpack.c.b16 %v506, %v504
    %v641 = vpack.c.b16 %v509, %v507
    %v642 = vpack.c.b16 %v510, %v508
    %v643 = vpack.c.b16 %v513, %v511
    %v644 = vpack.c.b16 %v514, %v512
    %v645 = vpack.c.b16 %v517, %v515
    %v646 = vpack.c.b16 %v518, %v516
    %v647 = vpack.c.b16 %v521, %v519
    %v648 = vpack.c.b16 %v522, %v520
    %v649 = vpack.c.b16 %v525, %v523
    %v650 = vpack.c.b16 %v526, %v524
    %v651 = vpack.c.b16 %v529, %v527
    %v652 = vpack.c.b16 %v530, %v528
    %v653 = vpack.c.b16 %v533, %v531
    %v654 = vpack.c.b16 %v534, %v532
    %v655 = vpack.c.b16 %v537, %v535
    %v656 = vpack.c.b16 %v538, %v536
    %v657 = vpack.c.b16 %v541, %v539
    %v658 = vpack.c.b16 %v542, %v540
    %v659 = vpack.c.b16 %v545, %v543
    %v660 = vpack.c.b16 %v546, %v544
    %v661 = vpack.c.b16 %v549, %v547
    %v662 = vpack.c.b16 %v550, %v548
    %v663 = vpack.c.b16 %v553, %v551
    %v664 = vpack.c.b16 %v554, %v552
    %v665 = vpack.c.b16 %v557, %v555
    %v666 = vpack.c.b16 %v558, %v556
    %v667 = vpack.c.b16 %v561, %v559
    %v668 = vpack.c.b16 %v562, %v560
    %v669 = vpack.c.b16 %v565, %v563
    %v670 = vpack.c.b16 %v566, %v564
    %v671 = vpack.c.b16 %v569, %v567
    %v672 = vpack.c.b16 %v570, %v568
    %v673 = vpack.c.b16 %v573, %v571
    %v674 = vpack.c.b16 %v574, %v572
    %v675 = vpack.c.b16 %v577, %v575
    %v676 = vpack.c.b16 %v578, %v576
    %v677 = vpack.c.b16 %v581, %v579
    %v678 = vpack.c.b16 %v582, %v580
    %v679 = vpack.c.b16 %v585, %v583
    %v680 = vpack.c.b16 %v586, %v584
    %v681 = vpack.c.b16 %v589, %v587
    %v682 = vpack.c.b16 %v590, %v588
    %v683 = vpack.c.b16 %v593, %v591
    %v684 = vpack.c.b16 %v594, %v592
    %v685 = vpack.c.b16 %v597, %v595
    %v686 = vpack.c.b16 %v598, %v596
    %v687 = vpack.c.b16 %v601, %v599
    %v688 = vpack.c.b16 %v602, %v600
    %v689 = vpack.c.b16 %v605, %v603
    %v690 = vpack.c.b16 %v606, %v604
    %v691 = vpack.c.b16 %v609, %v607
    %v692 = vpack.c.b16 %v610, %v608
    %v693 = vpack.c.b16 %v613, %v611
    %v694 = vpack.c.b16 %v614, %v612
    %v695 = vpack.c.b16 %v617, %v615
    %v696 = vpack.c.b16 %v618, %v616
    %v697 = vpack.c.b16 %v621, %v619
    %v698 = vpack.c.b16 %v622, %v620
    %v699 = vpack.c.b16 %v625, %v623
    %v700 = vpack.c.b16 %v626, %v624
    %v701 = vpack.c.b16 %v629, %v627
    %v702 = vpack.c.b16 %v630, %v628
    %v703 = vpack.c.b16 %v633, %v631
    %v704 = vpack.c.b16 %v634, %v632
    %vm775 = vcmask 392192
    %v777 = vsel %vm775, %v323, 0
    %v780 = vsel %vm775, %v328, 0
    %v783 = vsel %vm775, %v333, 0
    %v786 = vsel %vm775, %v338, 0
    %v789 = vsel %vm775, %v343, 0
    %v792 = vsel %vm775, %v348, 0
    %v795 = vsel %vm775, %v353, 0
    %v798 = vsel %vm775, %v358, 0
    %v801 = vsel %vm775, %v363, 0
    %v804 = vsel %vm775, %v368, 0
    %v807 = vsel %vm775, %v373, 0
    %v810 = vsel %vm775, %v378, 0
    %v813 = vsel %vm775, %v383, 0
    %v816 = vsel %vm775, %v388, 0
    %v819 = vsel %vm775, %v393, 0
    %v822 = vsel %vm775, %v398, 0
    %v825 = vsel %vm775, %v403, 0
    %v828 = vsel %vm775, %v408, 0
    %v831 = vsel %vm775, %v413, 0
    %833 = vmatprep.subr.bf16.mxu0 %v636
    %834 = vmatpush1.bf16.msra.mxu0 %v635
    %835 = vmatprep.subr.bf16.mxu0 %v638
    %836 = vmatpush1.bf16.msra.mxu0 %v637
    %837 = vmatprep.subr.bf16.mxu0 %v640
    %838 = vmatpush1.bf16.msra.mxu0 %v639
    %839 = vmatprep.subr.bf16.mxu0 %v642
    %840 = vmatpush1.bf16.msra.mxu0 %v641
    %841 = vmatprep.subr.bf16.mxu0 %v644
    %842 = vmatpush1.bf16.msra.mxu0 %v643
    %843 = vmatprep.subr.bf16.mxu0 %v646
    %844 = vmatpush1.bf16.msra.mxu0 %v645
    %845 = vmatprep.subr.bf16.mxu0 %v648
    %846 = vmatpush1.bf16.msra.mxu0 %v647
    %847 = vmatprep.subr.bf16.mxu0 %v650
    %848 = vmatpush1.bf16.msra.mxu0 %v649
    %849 = vmatprep.subr.bf16.mxu0 %v652
    %850 = vmatpush1.bf16.msra.mxu0 %v651
    %851 = vmatprep.subr.bf16.mxu0 %v654
    %852 = vmatpush1.bf16.msra.mxu0 %v653
    %853 = vmatprep.subr.bf16.mxu0 %v656
    %854 = vmatpush1.bf16.msra.mxu0 %v655
    %855 = vmatprep.subr.bf16.mxu0 %v658
    %856 = vmatpush1.bf16.msra.mxu0 %v657
    %857 = vmatprep.subr.bf16.mxu0 %v660
    %858 = vmatpush1.bf16.msra.mxu0 %v659
    %859 = vmatprep.subr.bf16.mxu0 %v662
    %860 = vmatpush1.bf16.msra.mxu0 %v661
    %861 = vmatprep.subr.bf16.mxu0 %v664
    %862 = vmatpush1.bf16.msra.mxu0 %v663
    %863 = vmatprep.subr.bf16.mxu0 %v666
    %864 = vmatpush1.bf16.msra.mxu0 %v665
    %865 = vmatprep.mubr.bf16.mxu0 %v320
    %866 = vmatmul.mubr.bf16.gmra.mrb[0].mxu0 %v319
    %v867 = vpop.f32.mrb[0].mxu0
    %v868 = vadd.f32 %v418, %v867
    %v869 = vpop.f32.mrb[0].mxu0
    %v870 = vadd.f32 %v422, %v869
    %v871 = vpop.f32.mrb[0].mxu0
    %v872 = vadd.f32 %v418, %v871
    %v873 = vpop.f32.mrb[0].mxu0
    %v874 = vadd.f32 %v422, %v873
    %875 = vmatprep.mubr.bf16.mxu0 %v325
    %876 = vmatmul.mubr.bf16.gmra.mrb[0].mxu0 %v324
    %v877 = vpop.f32.mrb[0].mxu0
    %v878 = vadd.f32 %v418, %v877
    %v879 = vpop.f32.mrb[0].mxu0
    %v880 = vadd.f32 %v422, %v879
    %v881 = vpop.f32.mrb[0].mxu0
    %v882 = vadd.f32 %v418, %v881
    %v883 = vpop.f32.mrb[0].mxu0
    %v884 = vadd.f32 %v422, %v883
    %885 = vmatprep.mubr.bf16.mxu0 %v330
    %886 = vmatmul.mubr.bf16.gmra.mrb[0].mxu0 %v329
    %v887 = vpop.f32.mrb[0].mxu0
    %v888 = vadd.f32 %v418, %v887
    %v889 = vpop.f32.mrb[0].mxu0
    %v890 = vadd.f32 %v422, %v889
    %v891 = vpop.f32.mrb[0].mxu0
    %v892 = vadd.f32 %v418, %v891
    %v893 = vpop.f32.mrb[0].mxu0
    %v894 = vadd.f32 %v422, %v893
    %895 = vmatprep.mubr.bf16.mxu0 %v335
    %896 = vmatmul.mubr.bf16.gmra.mrb[0].mxu0 %v334
    %v897 = vpop.f32.mrb[0].mxu0
    %v898 = vadd.f32 %v418, %v897
    %v899 = vpop.f32.mrb[0].mxu0
    %v900 = vadd.f32 %v422, %v899
    %v901 = vpop.f32.mrb[0].mxu0
    %v902 = vadd.f32 %v418, %v901
    %v903 = vpop.f32.mrb[0].mxu0
    %v904 = vadd.f32 %v422, %v903
    %905 = vmatprep.mubr.bf16.mxu0 %v340
    %906 = vmatmul.mubr.bf16.gmra.mrb[0].mxu0 %v339
    %v907 = vpop.f32.mrb[0].mxu0
    %v908 = vadd.f32 %v418, %v907
    %v909 = vpop.f32.mrb[0].mxu0
    %v910 = vadd.f32 %v422, %v909
    %v911 = vpop.f32.mrb[0].mxu0
    %v912 = vadd.f32 %v418, %v911
    %v913 = vpop.f32.mrb[0].mxu0
    %v914 = vadd.f32 %v422, %v913
    %915 = vmatprep.mubr.bf16.mxu0 %v345
    %916 = vmatmul.mubr.bf16.gmra.mrb[0].mxu0 %v344
    %v917 = vpop.f32.mrb[0].mxu0
    %v918 = vadd.f32 %v418, %v917
    %v919 = vpop.f32.mrb[0].mxu0
    %v920 = vadd.f32 %v422, %v919
    %v921 = vpop.f32.mrb[0].mxu0
    %v922 = vadd.f32 %v418, %v921
    %v923 = vpop.f32.mrb[0].mxu0
    %v924 = vadd.f32 %v422, %v923
    %925 = vmatprep.mubr.bf16.mxu0 %v350
    %926 = vmatmul.mubr.bf16.gmra.mrb[0].mxu0 %v349
    %v927 = vpop.f32.mrb[0].mxu0
    %v928 = vadd.f32 %v418, %v927
    %v929 = vpop.f32.mrb[0].mxu0
    %v930 = vadd.f32 %v422, %v929
    %v931 = vpop.f32.mrb[0].mxu0
    %v932 = vadd.f32 %v418, %v931
    %v933 = vpop.f32.mrb[0].mxu0
    %v934 = vadd.f32 %v422, %v933
    %935 = vmatprep.mubr.bf16.mxu0 %v355
    %936 = vmatmul.mubr.bf16.gmra.mrb[0].mxu0 %v354
    %v937 = vpop.f32.mrb[0].mxu0
    %v938 = vadd.f32 %v418, %v937
    %v939 = vpop.f32.mrb[0].mxu0
    %v940 = vadd.f32 %v422, %v939
    %v941 = vpop.f32.mrb[0].mxu0
    %v942 = vadd.f32 %v418, %v941
    %v943 = vpop.f32.mrb[0].mxu0
    %v944 = vadd.f32 %v422, %v943
    %945 = vmatprep.mubr.bf16.mxu0 %v360
    %946 = vmatmul.mubr.bf16.gmra.mrb[0].mxu0 %v359
    %v947 = vpop.f32.mrb[0].mxu0
    %v948 = vadd.f32 %v418, %v947
    %v949 = vpop.f32.mrb[0].mxu0
    %v950 = vadd.f32 %v422, %v949
    %v951 = vpop.f32.mrb[0].mxu0
    %v952 = vadd.f32 %v418, %v951
    %v953 = vpop.f32.mrb[0].mxu0
    %v954 = vadd.f32 %v422, %v953
    %955 = vmatprep.mubr.bf16.mxu0 %v365
    %956 = vmatmul.mubr.bf16.gmra.mrb[0].mxu0 %v364
    %v957 = vpop.f32.mrb[0].mxu0
    %v958 = vadd.f32 %v418, %v957
    %v959 = vpop.f32.mrb[0].mxu0
    %v960 = vadd.f32 %v422, %v959
    %v961 = vpop.f32.mrb[0].mxu0
    %v962 = vadd.f32 %v418, %v961
    %v963 = vpop.f32.mrb[0].mxu0
    %v964 = vadd.f32 %v422, %v963
    %965 = vmatprep.mubr.bf16.mxu0 %v370
    %966 = vmatmul.mubr.bf16.gmra.mrb[0].mxu0 %v369
    %v967 = vpop.f32.mrb[0].mxu0
    %v968 = vadd.f32 %v418, %v967
    %v969 = vpop.f32.mrb[0].mxu0
    %v970 = vadd.f32 %v422, %v969
    %v971 = vpop.f32.mrb[0].mxu0
    %v972 = vadd.f32 %v418, %v971
    %v973 = vpop.f32.mrb[0].mxu0
    %v974 = vadd.f32 %v422, %v973
    %975 = vmatprep.mubr.bf16.mxu0 %v375
    %976 = vmatmul.mubr.bf16.gmra.mrb[0].mxu0 %v374
    %v977 = vpop.f32.mrb[0].mxu0
    %v978 = vadd.f32 %v418, %v977
    %v979 = vpop.f32.mrb[0].mxu0
    %v980 = vadd.f32 %v422, %v979
    %v981 = vpop.f32.mrb[0].mxu0
    %v982 = vadd.f32 %v418, %v981
    %v983 = vpop.f32.mrb[0].mxu0
    %v984 = vadd.f32 %v422, %v983
    %985 = vmatprep.mubr.bf16.mxu0 %v380
    %986 = vmatmul.mubr.bf16.gmra.mrb[0].mxu0 %v379
    %v987 = vpop.f32.mrb[0].mxu0
    %v988 = vadd.f32 %v418, %v987
    %v989 = vpop.f32.mrb[0].mxu0
    %v990 = vadd.f32 %v422, %v989
    %v991 = vpop.f32.mrb[0].mxu0
    %v992 = vadd.f32 %v418, %v991
    %v993 = vpop.f32.mrb[0].mxu0
    %v994 = vadd.f32 %v422, %v993
    %995 = vmatprep.mubr.bf16.mxu0 %v385
    %996 = vmatmul.mubr.bf16.gmra.mrb[0].mxu0 %v384
    %v997 = vpop.f32.mrb[0].mxu0
    %v998 = vadd.f32 %v418, %v997
    %v999 = vpop.f32.mrb[0].mxu0
    %v1000 = vadd.f32 %v422, %v999
    %v1001 = vpop.f32.mrb[0].mxu0
    %v1002 = vadd.f32 %v418, %v1001
    %v1003 = vpop.f32.mrb[0].mxu0
    %v1004 = vadd.f32 %v422, %v1003
    %1005 = vmatprep.mubr.bf16.mxu0 %v390
    %1006 = vmatmul.mubr.bf16.gmra.mrb[0].mxu0 %v389
    %v1007 = vpop.f32.mrb[0].mxu0
    %v1008 = vadd.f32 %v418, %v1007
    %v1009 = vpop.f32.mrb[0].mxu0
    %v1010 = vadd.f32 %v422, %v1009
    %v1011 = vpop.f32.mrb[0].mxu0
    %v1012 = vadd.f32 %v418, %v1011
    %v1013 = vpop.f32.mrb[0].mxu0
    %v1014 = vadd.f32 %v422, %v1013
    %1015 = vmatprep.mubr.bf16.mxu0 %v395
    %1016 = vmatmul.mubr.bf16.gmra.mrb[0].mxu0 %v394
    %v1017 = vpop.f32.mrb[0].mxu0
    %v1018 = vadd.f32 %v418, %v1017
    %v1019 = vpop.f32.mrb[0].mxu0
    %v1020 = vadd.f32 %v422, %v1019
    %v1021 = vpop.f32.mrb[0].mxu0
    %v1022 = vadd.f32 %v418, %v1021
    %v1023 = vpop.f32.mrb[0].mxu0
    %v1024 = vadd.f32 %v422, %v1023
    %1025 = vmatprep.mubr.bf16.mxu0 %v400
    %1026 = vmatmul.mubr.bf16.gmra.mrb[0].mxu0 %v399
    %v1027 = vpop.f32.mrb[0].mxu0
    %v1028 = vadd.f32 %v418, %v1027
    %v1029 = vpop.f32.mrb[0].mxu0
    %v1030 = vadd.f32 %v422, %v1029
    %v1031 = vpop.f32.mrb[0].mxu0
    %v1032 = vadd.f32 %v418, %v1031
    %v1033 = vpop.f32.mrb[0].mxu0
    %v1034 = vadd.f32 %v422, %v1033
    %1035 = vmatprep.mubr.bf16.mxu0 %v405
    %1036 = vmatmul.mubr.bf16.gmra.mrb[0].mxu0 %v404
    %v1037 = vpop.f32.mrb[0].mxu0
    %v1038 = vadd.f32 %v418, %v1037
    %v1039 = vpop.f32.mrb[0].mxu0
    %v1040 = vadd.f32 %v422, %v1039
    %v1041 = vpop.f32.mrb[0].mxu0
    %v1042 = vadd.f32 %v418, %v1041
    %v1043 = vpop.f32.mrb[0].mxu0
    %v1044 = vadd.f32 %v422, %v1043
    %1045 = vmatprep.mubr.bf16.mxu0 %v410
    %1046 = vmatmul.mubr.bf16.gmra.mrb[0].mxu0 %v409
    %v1047 = vpop.f32.mrb[0].mxu0
    %v1048 = vadd.f32 %v418, %v1047
    %v1049 = vpop.f32.mrb[0].mxu0
    %v1050 = vadd.f32 %v422, %v1049
    %v1051 = vpop.f32.mrb[0].mxu0
    %v1052 = vadd.f32 %v418, %v1051
    %v1053 = vpop.f32.mrb[0].mxu0
    %v1054 = vadd.f32 %v422, %v1053
    %1055 = vdwg.mxu0
    %1056 = vmatprep.subr.bf16.mxu0 %v668
    %1057 = vmatpush1.bf16.msra.mxu0 %v667
    %1058 = vmatprep.subr.bf16.mxu0 %v670
    %1059 = vmatpush1.bf16.msra.mxu0 %v669
    %1060 = vmatprep.subr.bf16.mxu0 %v672
    %1061 = vmatpush1.bf16.msra.mxu0 %v671
    %1062 = vmatprep.subr.bf16.mxu0 %v674
    %1063 = vmatpush1.bf16.msra.mxu0 %v673
    %1064 = vmatprep.subr.bf16.mxu0 %v676
    %1065 = vmatpush1.bf16.msra.mxu0 %v675
    %1066 = vmatprep.subr.bf16.mxu0 %v678
    %1067 = vmatpush1.bf16.msra.mxu0 %v677
    %1068 = vmatprep.subr.bf16.mxu0 %v680
    %1069 = vmatpush1.bf16.msra.mxu0 %v679
    %1070 = vmatprep.subr.bf16.mxu0 %v682
    %1071 = vmatpush1.bf16.msra.mxu0 %v681
    %1072 = vmatprep.subr.bf16.mxu0 %v684
    %1073 = vmatpush1.bf16.msra.mxu0 %v683
    %1074 = vmatprep.subr.bf16.mxu0 %v686
    %1075 = vmatpush1.bf16.msra.mxu0 %v685
    %1076 = vmatprep.subr.bf16.mxu0 %v688
    %1077 = vmatpush1.bf16.msra.mxu0 %v687
    %1078 = vmatprep.subr.bf16.mxu0 %v690
    %1079 = vmatpush1.bf16.msra.mxu0 %v689
    %1080 = vmatprep.subr.bf16.mxu0 %v692
    %1081 = vmatpush1.bf16.msra.mxu0 %v691
    %1082 = vmatprep.subr.bf16.mxu0 %v694
    %1083 = vmatpush1.bf16.msra.mxu0 %v693
    %1084 = vmatprep.subr.bf16.mxu0 %v696
    %1085 = vmatpush1.bf16.msra.mxu0 %v695
    %1086 = vmatprep.subr.bf16.mxu0 %v698
    %1087 = vmatpush1.bf16.msra.mxu0 %v697
    %1088 = vmatprep.mubr.bf16.mxu0 %v322
    %1089 = vmatmul.mubr.bf16.gmra.mrb[0].mxu0 %v321
    %v1090 = vpop.f32.mrb[0].mxu0
    %v1091 = vadd.f32 %v868, %v1090
    %v1092 = vpop.f32.mrb[0].mxu0
    %v1093 = vadd.f32 %v870, %v1092
    %v1094 = vpop.f32.mrb[0].mxu0
    %v1095 = vadd.f32 %v872, %v1094
    %v1096 = vpop.f32.mrb[0].mxu0
    %v1097 = vadd.f32 %v874, %v1096
    %1098 = vmatprep.mubr.bf16.mxu0 %v327
    %1099 = vmatmul.mubr.bf16.gmra.mrb[0].mxu0 %v326
    %v1100 = vpop.f32.mrb[0].mxu0
    %v1101 = vadd.f32 %v878, %v1100
    %v1102 = vpop.f32.mrb[0].mxu0
    %v1103 = vadd.f32 %v880, %v1102
    %v1104 = vpop.f32.mrb[0].mxu0
    %v1105 = vadd.f32 %v882, %v1104
    %v1106 = vpop.f32.mrb[0].mxu0
    %v1107 = vadd.f32 %v884, %v1106
    %1108 = vmatprep.mubr.bf16.mxu0 %v332
    %1109 = vmatmul.mubr.bf16.gmra.mrb[0].mxu0 %v331
    %v1110 = vpop.f32.mrb[0].mxu0
    %v1111 = vadd.f32 %v888, %v1110
    %v1112 = vpop.f32.mrb[0].mxu0
    %v1113 = vadd.f32 %v890, %v1112
    %v1114 = vpop.f32.mrb[0].mxu0
    %v1115 = vadd.f32 %v892, %v1114
    %v1116 = vpop.f32.mrb[0].mxu0
    %v1117 = vadd.f32 %v894, %v1116
    %1118 = vmatprep.mubr.bf16.mxu0 %v337
    %1119 = vmatmul.mubr.bf16.gmra.mrb[0].mxu0 %v336
    %v1120 = vpop.f32.mrb[0].mxu0
    %v1121 = vadd.f32 %v898, %v1120
    %v1122 = vpop.f32.mrb[0].mxu0
    %v1123 = vadd.f32 %v900, %v1122
    %v1124 = vpop.f32.mrb[0].mxu0
    %v1125 = vadd.f32 %v902, %v1124
    %v1126 = vpop.f32.mrb[0].mxu0
    %v1127 = vadd.f32 %v904, %v1126
    %1128 = vmatprep.mubr.bf16.mxu0 %v342
    %1129 = vmatmul.mubr.bf16.gmra.mrb[0].mxu0 %v341
    %v1130 = vpop.f32.mrb[0].mxu0
    %v1131 = vadd.f32 %v908, %v1130
    %v1132 = vpop.f32.mrb[0].mxu0
    %v1133 = vadd.f32 %v910, %v1132
    %v1134 = vpop.f32.mrb[0].mxu0
    %v1135 = vadd.f32 %v912, %v1134
    %v1136 = vpop.f32.mrb[0].mxu0
    %v1137 = vadd.f32 %v914, %v1136
    %1138 = vmatprep.mubr.bf16.mxu0 %v347
    %1139 = vmatmul.mubr.bf16.gmra.mrb[0].mxu0 %v346
    %v1140 = vpop.f32.mrb[0].mxu0
    %v1141 = vadd.f32 %v918, %v1140
    %v1142 = vpop.f32.mrb[0].mxu0
    %v1143 = vadd.f32 %v920, %v1142
    %v1144 = vpop.f32.mrb[0].mxu0
    %v1145 = vadd.f32 %v922, %v1144
    %v1146 = vpop.f32.mrb[0].mxu0
    %v1147 = vadd.f32 %v924, %v1146
    %1148 = vmatprep.mubr.bf16.mxu0 %v352
    %1149 = vmatmul.mubr.bf16.gmra.mrb[0].mxu0 %v351
    %v1150 = vpop.f32.mrb[0].mxu0
    %v1151 = vadd.f32 %v928, %v1150
    %v1152 = vpop.f32.mrb[0].mxu0
    %v1153 = vadd.f32 %v930, %v1152
    %v1154 = vpop.f32.mrb[0].mxu0
    %v1155 = vadd.f32 %v932, %v1154
    %v1156 = vpop.f32.mrb[0].mxu0
    %v1157 = vadd.f32 %v934, %v1156
    %1158 = vmatprep.mubr.bf16.mxu0 %v357
    %1159 = vmatmul.mubr.bf16.gmra.mrb[0].mxu0 %v356
    %v1160 = vpop.f32.mrb[0].mxu0
    %v1161 = vadd.f32 %v938, %v1160
    %v1162 = vpop.f32.mrb[0].mxu0
    %v1163 = vadd.f32 %v940, %v1162
    %v1164 = vpop.f32.mrb[0].mxu0
    %v1165 = vadd.f32 %v942, %v1164
    %v1166 = vpop.f32.mrb[0].mxu0
    %v1167 = vadd.f32 %v944, %v1166
    %1168 = vmatprep.mubr.bf16.mxu0 %v362
    %1169 = vmatmul.mubr.bf16.gmra.mrb[0].mxu0 %v361
    %v1170 = vpop.f32.mrb[0].mxu0
    %v1171 = vadd.f32 %v948, %v1170
    %v1172 = vpop.f32.mrb[0].mxu0
    %v1173 = vadd.f32 %v950, %v1172
    %v1174 = vpop.f32.mrb[0].mxu0
    %v1175 = vadd.f32 %v952, %v1174
    %v1176 = vpop.f32.mrb[0].mxu0
    %v1177 = vadd.f32 %v954, %v1176
    %1178 = vmatprep.mubr.bf16.mxu0 %v367
    %1179 = vmatmul.mubr.bf16.gmra.mrb[0].mxu0 %v366
    %v1180 = vpop.f32.mrb[0].mxu0
    %v1181 = vadd.f32 %v958, %v1180
    %v1182 = vpop.f32.mrb[0].mxu0
    %v1183 = vadd.f32 %v960, %v1182
    %v1184 = vpop.f32.mrb[0].mxu0
    %v1185 = vadd.f32 %v962, %v1184
    %v1186 = vpop.f32.mrb[0].mxu0
    %v1187 = vadd.f32 %v964, %v1186
    %1188 = vmatprep.mubr.bf16.mxu0 %v372
    %1189 = vmatmul.mubr.bf16.gmra.mrb[0].mxu0 %v371
    %v1190 = vpop.f32.mrb[0].mxu0
    %v1191 = vadd.f32 %v968, %v1190
    %v1192 = vpop.f32.mrb[0].mxu0
    %v1193 = vadd.f32 %v970, %v1192
    %v1194 = vpop.f32.mrb[0].mxu0
    %v1195 = vadd.f32 %v972, %v1194
    %v1196 = vpop.f32.mrb[0].mxu0
    %v1197 = vadd.f32 %v974, %v1196
    %1198 = vmatprep.mubr.bf16.mxu0 %v377
    %1199 = vmatmul.mubr.bf16.gmra.mrb[0].mxu0 %v376
    %v1200 = vpop.f32.mrb[0].mxu0
    %v1201 = vadd.f32 %v978, %v1200
    %v1202 = vpop.f32.mrb[0].mxu0
    %v1203 = vadd.f32 %v980, %v1202
    %v1204 = vpop.f32.mrb[0].mxu0
    %v1205 = vadd.f32 %v982, %v1204
    %v1206 = vpop.f32.mrb[0].mxu0
    %v1207 = vadd.f32 %v984, %v1206
    %1208 = vmatprep.mubr.bf16.mxu0 %v382
    %1209 = vmatmul.mubr.bf16.gmra.mrb[0].mxu0 %v381
    %v1210 = vpop.f32.mrb[0].mxu0
    %v1211 = vadd.f32 %v988, %v1210
    %v1212 = vpop.f32.mrb[0].mxu0
    %v1213 = vadd.f32 %v990, %v1212
    %v1214 = vpop.f32.mrb[0].mxu0
    %v1215 = vadd.f32 %v992, %v1214
    %v1216 = vpop.f32.mrb[0].mxu0
    %v1217 = vadd.f32 %v994, %v1216
    %1218 = vmatprep.mubr.bf16.mxu0 %v387
    %1219 = vmatmul.mubr.bf16.gmra.mrb[0].mxu0 %v386
    %v1220 = vpop.f32.mrb[0].mxu0
    %v1221 = vadd.f32 %v998, %v1220
    %v1222 = vpop.f32.mrb[0].mxu0
    %v1223 = vadd.f32 %v1000, %v1222
    %v1224 = vpop.f32.mrb[0].mxu0
    %v1225 = vadd.f32 %v1002, %v1224
    %v1226 = vpop.f32.mrb[0].mxu0
    %v1227 = vadd.f32 %v1004, %v1226
    %1228 = vmatprep.mubr.bf16.mxu0 %v392
    %1229 = vmatmul.mubr.bf16.gmra.mrb[0].mxu0 %v391
    %v1230 = vpop.f32.mrb[0].mxu0
    %v1231 = vadd.f32 %v1008, %v1230
    %v1232 = vpop.f32.mrb[0].mxu0
    %v1233 = vadd.f32 %v1010, %v1232
    %v1234 = vpop.f32.mrb[0].mxu0
    %v1235 = vadd.f32 %v1012, %v1234
    %v1236 = vpop.f32.mrb[0].mxu0
    %v1237 = vadd.f32 %v1014, %v1236
    %1238 = vmatprep.mubr.bf16.mxu0 %v397
    %1239 = vmatmul.mubr.bf16.gmra.mrb[0].mxu0 %v396
    %v1240 = vpop.f32.mrb[0].mxu0
    %v1241 = vadd.f32 %v1018, %v1240
    %v1242 = vpop.f32.mrb[0].mxu0
    %v1243 = vadd.f32 %v1020, %v1242
    %v1244 = vpop.f32.mrb[0].mxu0
    %v1245 = vadd.f32 %v1022, %v1244
    %v1246 = vpop.f32.mrb[0].mxu0
    %v1247 = vadd.f32 %v1024, %v1246
    %1248 = vmatprep.mubr.bf16.mxu0 %v402
    %1249 = vmatmul.mubr.bf16.gmra.mrb[0].mxu0 %v401
    %v1250 = vpop.f32.mrb[0].mxu0
    %v1251 = vadd.f32 %v1028, %v1250
    %v1252 = vpop.f32.mrb[0].mxu0
    %v1253 = vadd.f32 %v1030, %v1252
    %v1254 = vpop.f32.mrb[0].mxu0
    %v1255 = vadd.f32 %v1032, %v1254
    %v1256 = vpop.f32.mrb[0].mxu0
    %v1257 = vadd.f32 %v1034, %v1256
    %1258 = vmatprep.mubr.bf16.mxu0 %v407
    %1259 = vmatmul.mubr.bf16.gmra.mrb[0].mxu0 %v406
    %v1260 = vpop.f32.mrb[0].mxu0
    %v1261 = vadd.f32 %v1038, %v1260
    %v1262 = vpop.f32.mrb[0].mxu0
    %v1263 = vadd.f32 %v1040, %v1262
    %v1264 = vpop.f32.mrb[0].mxu0
    %v1265 = vadd.f32 %v1042, %v1264
    %v1266 = vpop.f32.mrb[0].mxu0
    %v1267 = vadd.f32 %v1044, %v1266
    %1268 = vmatprep.mubr.bf16.mxu0 %v412
    %1269 = vmatmul.mubr.bf16.gmra.mrb[0].mxu0 %v411
    %v1270 = vpop.f32.mrb[0].mxu0
    %v1271 = vadd.f32 %v1048, %v1270
    %v1272 = vpop.f32.mrb[0].mxu0
    %v1273 = vadd.f32 %v1050, %v1272
    %v1274 = vpop.f32.mrb[0].mxu0
    %v1275 = vadd.f32 %v1052, %v1274
    %v1276 = vpop.f32.mrb[0].mxu0
    %v1277 = vadd.f32 %v1054, %v1276
    %1278 = vdwg.mxu0
    %1279 = vmatprep.subr.bf16.mxu0 %v700
    %1280 = vmatpush1.bf16.msra.mxu0 %v699
    %1281 = vmatprep.subr.bf16.mxu0 %v702
    %1282 = vmatpush1.bf16.msra.mxu0 %v701
    %1283 = vmatprep.subr.bf16.mxu0 %v704
    %1284 = vmatpush1.bf16.msra.mxu0 %v703
    %1285 = vmatprep.subr.bf16.mxu0 0
    %1286 = vmatpush1.bf16.msra.mxu0 0
    %1287 = vmatprep.subr.bf16.mxu0 0
    %1288 = vmatpush1.bf16.msra.mxu0 0
    %1289 = vmatprep.subr.bf16.mxu0 0
    %1290 = vmatpush1.bf16.msra.mxu0 0
    %1291 = vmatprep.subr.bf16.mxu0 0
    %1292 = vmatpush1.bf16.msra.mxu0 0
    %1293 = vmatprep.subr.bf16.mxu0 0
    %1294 = vmatpush1.bf16.msra.mxu0 0
    %1295 = vmatprep.subr.bf16.mxu0 0
    %1296 = vmatpush1.bf16.msra.mxu0 0
    %1297 = vmatprep.subr.bf16.mxu0 0
    %1298 = vmatpush1.bf16.msra.mxu0 0
    %1299 = vmatprep.subr.bf16.mxu0 0
    %1300 = vmatpush1.bf16.msra.mxu0 0
    %1301 = vmatprep.subr.bf16.mxu0 0
    %1302 = vmatpush1.bf16.msra.mxu0 0
    %1303 = vmatprep.subr.bf16.mxu0 0
    %1304 = vmatpush1.bf16.msra.mxu0 0
    %1305 = vmatprep.subr.bf16.mxu0 0
    %1306 = vmatpush1.bf16.msra.mxu0 0
    %1307 = vmatprep.subr.bf16.mxu0 0
    %1308 = vmatpush1.bf16.msra.mxu0 0
    %1309 = vmatprep.subr.bf16.mxu0 0
    %1310 = vmatpush1.bf16.msra.mxu0 0
    %1311 = vmatprep.mubr.bf16.mxu0 0
    %1312 = vmatmul.mubr.bf16.gmra.mrb[0].mxu0 %v777
    %v1313 = vpop.f32.mrb[0].mxu0
    %v1314 = vadd.f32 %v1091, %v1313
    %v1315 = vpop.f32.mrb[0].mxu0
    %v1316 = vadd.f32 %v1093, %v1315
    %v1317 = vpop.f32.mrb[0].mxu0
    %v1318 = vadd.f32 %v1095, %v1317
    %v1319 = vpop.f32.mrb[0].mxu0
    %v1320 = vadd.f32 %v1097, %v1319
    %1321 = vmatprep.mubr.bf16.mxu0 0
    %1322 = vmatmul.mubr.bf16.gmra.mrb[0].mxu0 %v780
    %v1323 = vpop.f32.mrb[0].mxu0
    %v1324 = vadd.f32 %v1101, %v1323
    %v1325 = vpop.f32.mrb[0].mxu0
    %v1326 = vadd.f32 %v1103, %v1325
    %v1327 = vpop.f32.mrb[0].mxu0
    %v1328 = vadd.f32 %v1105, %v1327
    %v1329 = vpop.f32.mrb[0].mxu0
    %v1330 = vadd.f32 %v1107, %v1329
    %1331 = vmatprep.mubr.bf16.mxu0 0
    %1332 = vmatmul.mubr.bf16.gmra.mrb[0].mxu0 %v783
    %v1333 = vpop.f32.mrb[0].mxu0
    %v1334 = vadd.f32 %v1111, %v1333
    %v1335 = vpop.f32.mrb[0].mxu0
    %v1336 = vadd.f32 %v1113, %v1335
    %v1337 = vpop.f32.mrb[0].mxu0
    %v1338 = vadd.f32 %v1115, %v1337
    %v1339 = vpop.f32.mrb[0].mxu0
    %v1340 = vadd.f32 %v1117, %v1339
    %1341 = vmatprep.mubr.bf16.mxu0 0
    %1342 = vmatmul.mubr.bf16.gmra.mrb[0].mxu0 %v786
    %v1343 = vpop.f32.mrb[0].mxu0
    %v1344 = vadd.f32 %v1121, %v1343
    %v1345 = vpop.f32.mrb[0].mxu0
    %v1346 = vadd.f32 %v1123, %v1345
    %v1347 = vpop.f32.mrb[0].mxu0
    %v1348 = vadd.f32 %v1125, %v1347
    %v1349 = vpop.f32.mrb[0].mxu0
    %v1350 = vadd.f32 %v1127, %v1349
    %1351 = vmatprep.mubr.bf16.mxu0 0
    %1352 = vmatmul.mubr.bf16.gmra.mrb[0].mxu0 %v789
    %v1353 = vpop.f32.mrb[0].mxu0
    %v1354 = vadd.f32 %v1131, %v1353
    %v1355 = vpop.f32.mrb[0].mxu0
    %v1356 = vadd.f32 %v1133, %v1355
    %v1357 = vpop.f32.mrb[0].mxu0
    %v1358 = vadd.f32 %v1135, %v1357
    %v1359 = vpop.f32.mrb[0].mxu0
    %v1360 = vadd.f32 %v1137, %v1359
    %1361 = vmatprep.mubr.bf16.mxu0 0
    %1362 = vmatmul.mubr.bf16.gmra.mrb[0].mxu0 %v792
    %v1363 = vpop.f32.mrb[0].mxu0
    %v1364 = vadd.f32 %v1141, %v1363
    %v1365 = vpop.f32.mrb[0].mxu0
    %v1366 = vadd.f32 %v1143, %v1365
    %v1367 = vpop.f32.mrb[0].mxu0
    %v1368 = vadd.f32 %v1145, %v1367
    %v1369 = vpop.f32.mrb[0].mxu0
    %v1370 = vadd.f32 %v1147, %v1369
    %1371 = vmatprep.mubr.bf16.mxu0 0
    %1372 = vmatmul.mubr.bf16.gmra.mrb[0].mxu0 %v795
    %v1373 = vpop.f32.mrb[0].mxu0
    %v1374 = vadd.f32 %v1151, %v1373
    %v1375 = vpop.f32.mrb[0].mxu0
    %v1376 = vadd.f32 %v1153, %v1375
    %v1377 = vpop.f32.mrb[0].mxu0
    %v1378 = vadd.f32 %v1155, %v1377
    %v1379 = vpop.f32.mrb[0].mxu0
    %v1380 = vadd.f32 %v1157, %v1379
    %1381 = vmatprep.mubr.bf16.mxu0 0
    %1382 = vmatmul.mubr.bf16.gmra.mrb[0].mxu0 %v798
    %v1383 = vpop.f32.mrb[0].mxu0
    %v1384 = vadd.f32 %v1161, %v1383
    %v1385 = vpop.f32.mrb[0].mxu0
    %v1386 = vadd.f32 %v1163, %v1385
    %v1387 = vpop.f32.mrb[0].mxu0
    %v1388 = vadd.f32 %v1165, %v1387
    %v1389 = vpop.f32.mrb[0].mxu0
    %v1390 = vadd.f32 %v1167, %v1389
    %1391 = vmatprep.mubr.bf16.mxu0 0
    %1392 = vmatmul.mubr.bf16.gmra.mrb[0].mxu0 %v801
    %v1393 = vpop.f32.mrb[0].mxu0
    %v1394 = vadd.f32 %v1171, %v1393
    %v1395 = vpop.f32.mrb[0].mxu0
    %v1396 = vadd.f32 %v1173, %v1395
    %v1397 = vpop.f32.mrb[0].mxu0
    %v1398 = vadd.f32 %v1175, %v1397
    %v1399 = vpop.f32.mrb[0].mxu0
    %v1400 = vadd.f32 %v1177, %v1399
    %1401 = vmatprep.mubr.bf16.mxu0 0
    %1402 = vmatmul.mubr.bf16.gmra.mrb[0].mxu0 %v804
    %v1403 = vpop.f32.mrb[0].mxu0
    %v1404 = vadd.f32 %v1181, %v1403
    %v1405 = vpop.f32.mrb[0].mxu0
    %v1406 = vadd.f32 %v1183, %v1405
    %v1407 = vpop.f32.mrb[0].mxu0
    %v1408 = vadd.f32 %v1185, %v1407
    %v1409 = vpop.f32.mrb[0].mxu0
    %v1410 = vadd.f32 %v1187, %v1409
    %1411 = vmatprep.mubr.bf16.mxu0 0
    %1412 = vmatmul.mubr.bf16.gmra.mrb[0].mxu0 %v807
    %v1413 = vpop.f32.mrb[0].mxu0
    %v1414 = vadd.f32 %v1191, %v1413
    %v1415 = vpop.f32.mrb[0].mxu0
    %v1416 = vadd.f32 %v1193, %v1415
    %v1417 = vpop.f32.mrb[0].mxu0
    %v1418 = vadd.f32 %v1195, %v1417
    %v1419 = vpop.f32.mrb[0].mxu0
    %v1420 = vadd.f32 %v1197, %v1419
    %1421 = vmatprep.mubr.bf16.mxu0 0
    %1422 = vmatmul.mubr.bf16.gmra.mrb[0].mxu0 %v810
    %v1423 = vpop.f32.mrb[0].mxu0
    %v1424 = vadd.f32 %v1201, %v1423
    %v1425 = vpop.f32.mrb[0].mxu0
    %v1426 = vadd.f32 %v1203, %v1425
    %v1427 = vpop.f32.mrb[0].mxu0
    %v1428 = vadd.f32 %v1205, %v1427
    %v1429 = vpop.f32.mrb[0].mxu0
    %v1430 = vadd.f32 %v1207, %v1429
    %1431 = vmatprep.mubr.bf16.mxu0 0
    %1432 = vmatmul.mubr.bf16.gmra.mrb[0].mxu0 %v813
    %v1433 = vpop.f32.mrb[0].mxu0
    %v1434 = vadd.f32 %v1211, %v1433
    %v1435 = vpop.f32.mrb[0].mxu0
    %v1436 = vadd.f32 %v1213, %v1435
    %v1437 = vpop.f32.mrb[0].mxu0
    %v1438 = vadd.f32 %v1215, %v1437
    %v1439 = vpop.f32.mrb[0].mxu0
    %v1440 = vadd.f32 %v1217, %v1439
    %1441 = vmatprep.mubr.bf16.mxu0 0
    %1442 = vmatmul.mubr.bf16.gmra.mrb[0].mxu0 %v816
    %v1443 = vpop.f32.mrb[0].mxu0
    %v1444 = vadd.f32 %v1221, %v1443
    %v1445 = vpop.f32.mrb[0].mxu0
    %v1446 = vadd.f32 %v1223, %v1445
    %v1447 = vpop.f32.mrb[0].mxu0
    %v1448 = vadd.f32 %v1225, %v1447
    %v1449 = vpop.f32.mrb[0].mxu0
    %v1450 = vadd.f32 %v1227, %v1449
    %1451 = vmatprep.mubr.bf16.mxu0 0
    %1452 = vmatmul.mubr.bf16.gmra.mrb[0].mxu0 %v819
    %v1453 = vpop.f32.mrb[0].mxu0
    %v1454 = vadd.f32 %v1231, %v1453
    %v1455 = vpop.f32.mrb[0].mxu0
    %v1456 = vadd.f32 %v1233, %v1455
    %v1457 = vpop.f32.mrb[0].mxu0
    %v1458 = vadd.f32 %v1235, %v1457
    %v1459 = vpop.f32.mrb[0].mxu0
    %v1460 = vadd.f32 %v1237, %v1459
    %1461 = vmatprep.mubr.bf16.mxu0 0
    %1462 = vmatmul.mubr.bf16.gmra.mrb[0].mxu0 %v822
    %v1463 = vpop.f32.mrb[0].mxu0
    %v1464 = vadd.f32 %v1241, %v1463
    %v1465 = vpop.f32.mrb[0].mxu0
    %v1466 = vadd.f32 %v1243, %v1465
    %v1467 = vpop.f32.mrb[0].mxu0
    %v1468 = vadd.f32 %v1245, %v1467
    %v1469 = vpop.f32.mrb[0].mxu0
    %v1470 = vadd.f32 %v1247, %v1469
    %1471 = vmatprep.mubr.bf16.mxu0 0
    %1472 = vmatmul.mubr.bf16.gmra.mrb[0].mxu0 %v825
    %v1473 = vpop.f32.mrb[0].mxu0
    %v1474 = vadd.f32 %v1251, %v1473
    %v1475 = vpop.f32.mrb[0].mxu0
    %v1476 = vadd.f32 %v1253, %v1475
    %v1477 = vpop.f32.mrb[0].mxu0
    %v1478 = vadd.f32 %v1255, %v1477
    %v1479 = vpop.f32.mrb[0].mxu0
    %v1480 = vadd.f32 %v1257, %v1479
    %1481 = vmatprep.mubr.bf16.mxu0 0
    %1482 = vmatmul.mubr.bf16.gmra.mrb[0].mxu0 %v828
    %v1483 = vpop.f32.mrb[0].mxu0
    %v1484 = vadd.f32 %v1261, %v1483
    %v1485 = vpop.f32.mrb[0].mxu0
    %v1486 = vadd.f32 %v1263, %v1485
    %v1487 = vpop.f32.mrb[0].mxu0
    %v1488 = vadd.f32 %v1265, %v1487
    %v1489 = vpop.f32.mrb[0].mxu0
    %v1490 = vadd.f32 %v1267, %v1489
    %1491 = vmatprep.mubr.bf16.mxu0 0
    %1492 = vmatmul.mubr.bf16.gmra.mrb[0].mxu0 %v831
    %v1493 = vpop.f32.mrb[0].mxu0
    %v1494 = vadd.f32 %v1271, %v1493
    %v1495 = vpop.f32.mrb[0].mxu0
    %v1496 = vadd.f32 %v1273, %v1495
    %v1497 = vpop.f32.mrb[0].mxu0
    %v1498 = vadd.f32 %v1275, %v1497
    %v1499 = vpop.f32.mrb[0].mxu0
    %v1500 = vadd.f32 %v1277, %v1499
    %1501 = vdwg.mxu0
    %v1502 = vmax.f32 %v1314, 0.0
    %v1503 = vmax.f32 %v1316, 0.0
    %v1504 = vmax.f32 %v1318, 0.0
    %v1505 = vmax.f32 %v1320, 0.0
    %v1506 = vmax.f32 %v1324, 0.0
    %v1507 = vmax.f32 %v1326, 0.0
    %v1508 = vmax.f32 %v1328, 0.0
    %v1509 = vmax.f32 %v1330, 0.0
    %v1510 = vmax.f32 %v1334, 0.0
    %v1511 = vmax.f32 %v1336, 0.0
    %v1512 = vmax.f32 %v1338, 0.0
    %v1513 = vmax.f32 %v1340, 0.0
    %v1514 = vmax.f32 %v1344, 0.0
    %v1515 = vmax.f32 %v1346, 0.0
    %v1516 = vmax.f32 %v1348, 0.0
    %v1517 = vmax.f32 %v1350, 0.0
    %v1518 = vmax.f32 %v1354, 0.0
    %v1519 = vmax.f32 %v1356, 0.0
    %v1520 = vmax.f32 %v1358, 0.0
    %v1521 = vmax.f32 %v1360, 0.0
    %v1522 = vmax.f32 %v1364, 0.0
    %v1523 = vmax.f32 %v1366, 0.0
    %v1524 = vmax.f32 %v1368, 0.0
    %v1525 = vmax.f32 %v1370, 0.0
    %v1526 = vmax.f32 %v1374, 0.0
    %v1527 = vmax.f32 %v1376, 0.0
    %v1528 = vmax.f32 %v1378, 0.0
    %v1529 = vmax.f32 %v1380, 0.0
    %v1530 = vmax.f32 %v1384, 0.0
    %v1531 = vmax.f32 %v1386, 0.0
    %v1532 = vmax.f32 %v1388, 0.0
    %v1533 = vmax.f32 %v1390, 0.0
    %v1534 = vmax.f32 %v1394, 0.0
    %v1535 = vmax.f32 %v1396, 0.0
    %v1536 = vmax.f32 %v1398, 0.0
    %v1537 = vmax.f32 %v1400, 0.0
    %v1538 = vmax.f32 %v1404, 0.0
    %v1539 = vmax.f32 %v1406, 0.0
    %v1540 = vmax.f32 %v1408, 0.0
    %v1541 = vmax.f32 %v1410, 0.0
    %v1542 = vmax.f32 %v1414, 0.0
    %v1543 = vmax.f32 %v1416, 0.0
    %v1544 = vmax.f32 %v1418, 0.0
    %v1545 = vmax.f32 %v1420, 0.0
    %v1546 = vmax.f32 %v1424, 0.0
    %v1547 = vmax.f32 %v1426, 0.0
    %v1548 = vmax.f32 %v1428, 0.0
    %v1549 = vmax.f32 %v1430, 0.0
    %v1550 = vmax.f32 %v1434, 0.0
    %v1551 = vmax.f32 %v1436, 0.0
    %v1552 = vmax.f32 %v1438, 0.0
    %v1553 = vmax.f32 %v1440, 0.0
    %v1554 = vmax.f32 %v1444, 0.0
    %v1555 = vmax.f32 %v1446, 0.0
    %v1556 = vmax.f32 %v1448, 0.0
    %v1557 = vmax.f32 %v1450, 0.0
    %v1558 = vmax.f32 %v1454, 0.0
    %v1559 = vmax.f32 %v1456, 0.0
    %v1560 = vmax.f32 %v1458, 0.0
    %v1561 = vmax.f32 %v1460, 0.0
    %v1562 = vmax.f32 %v1464, 0.0
    %v1563 = vmax.f32 %v1466, 0.0
    %v1564 = vmax.f32 %v1468, 0.0
    %v1565 = vmax.f32 %v1470, 0.0
    %v1566 = vmax.f32 %v1474, 0.0
    %v1567 = vmax.f32 %v1476, 0.0
    %v1568 = vmax.f32 %v1478, 0.0
    %v1569 = vmax.f32 %v1480, 0.0
    %v1570 = vmax.f32 %v1484, 0.0
    %v1571 = vmax.f32 %v1486, 0.0
    %v1572 = vmax.f32 %v1488, 0.0
    %v1573 = vmax.f32 %v1490, 0.0
    %v1574 = vmax.f32 %v1494, 0.0
    %v1575 = vmax.f32 %v1496, 0.0
    %v1576 = vmax.f32 %v1498, 0.0
    %v1577 = vmax.f32 %v1500, 0.0
    %v1578 = vld [vmem:[%s3] sm:$0xf]
    %v1579 = vld [vmem:[%s3 + $0x4] sm:$0xf]
    %v1580 = vld [vmem:[%s3 + $0x8] sm:$0xf]
    %v1581 = vld [vmem:[%s3 + $0xc] sm:$0xf]
    %v1582 = vld [vmem:[%s3 + $0x10] sm:$0xf]
    %v1583 = vld [vmem:[%s3 + $0x14] sm:$0xf]
    %v1584 = vld [vmem:[%s3 + $0x18] sm:$0xf]
    %v1585 = vld [vmem:[%s3 + $0x1c] sm:$0xf]
    %v1586 = vld [vmem:[%s3 + $0x20] sm:$0xf]
    %v1587 = vld [vmem:[%s3 + $0x24] sm:$0xf]
    %v1588 = vld [vmem:[%s3 + $0x28] sm:$0xf]
    %v1589 = vld [vmem:[%s3 + $0x2c] sm:$0xf]
    %v1590 = vld [vmem:[%s3 + $0x30] sm:$0xf]
    %v1591 = vld [vmem:[%s3 + $0x34] sm:$0xf]
    %v1592 = vld [vmem:[%s3 + $0x38] sm:$0xf]
    %v1593 = vld [vmem:[%s3 + $0x3c] sm:$0xf]
    %v1594 = vld [vmem:[%s3 + $0x40] sm:$0xf]
    %v1595 = vld [vmem:[%s3 + $0x44] sm:$0xf]
    %v1596 = vld [vmem:[%s3 + $0x48] sm:$0xf]
    %v1597 = vld [vmem:[%s3 + $0x4c] sm:$0xf]
    %v1598 = vld [vmem:[%s3 + $0x50] sm:$0xf]
    %v1599 = vld [vmem:[%s3 + $0x54] sm:$0xf]
    %v1600 = vld [vmem:[%s3 + $0x58] sm:$0xf]
    %v1601 = vld [vmem:[%s3 + $0x5c] sm:$0xf]
    %v1602 = vld [vmem:[%s3 + $0x60] sm:$0xf]
    %v1603 = vld [vmem:[%s3 + $0x64] sm:$0xf]
    %v1604 = vld [vmem:[%s3 + $0x68] sm:$0xf]
    %v1605 = vld [vmem:[%s3 + $0x6c] sm:$0xf]
    %v1606 = vld [vmem:[%s3 + $0x70] sm:$0xf]
    %v1607 = vld [vmem:[%s3 + $0x74] sm:$0xf]
    %v1608 = vld [vmem:[%s3 + $0x78] sm:$0xf]
    %v1609 = vld [vmem:[%s3 + $0x7c] sm:$0xf]
    %v1610 = vld [vmem:[%s4] sm:$0x1]
    %v1611 = vpack.c.bf16 %v1504, %v1502
    %v1612 = vpack.c.bf16 %v1505, %v1503
    %v1613 = vpack.c.bf16 %v1508, %v1506
    %v1614 = vpack.c.bf16 %v1509, %v1507
    %v1615 = vpack.c.bf16 %v1512, %v1510
    %v1616 = vpack.c.bf16 %v1513, %v1511
    %v1617 = vpack.c.bf16 %v1516, %v1514
    %v1618 = vpack.c.bf16 %v1517, %v1515
    %v1619 = vpack.c.bf16 %v1520, %v1518
    %v1620 = vpack.c.bf16 %v1521, %v1519
    %v1621 = vpack.c.bf16 %v1524, %v1522
    %v1622 = vpack.c.bf16 %v1525, %v1523
    %v1623 = vpack.c.bf16 %v1528, %v1526
    %v1624 = vpack.c.bf16 %v1529, %v1527
    %v1625 = vpack.c.bf16 %v1532, %v1530
    %v1626 = vpack.c.bf16 %v1533, %v1531
    %v1627 = vpack.c.bf16 %v1536, %v1534
    %v1628 = vpack.c.bf16 %v1537, %v1535
    %v1629 = vpack.c.bf16 %v1540, %v1538
    %v1630 = vpack.c.bf16 %v1541, %v1539
    %v1631 = vpack.c.bf16 %v1544, %v1542
    %v1632 = vpack.c.bf16 %v1545, %v1543
    %v1633 = vpack.c.bf16 %v1548, %v1546
    %v1634 = vpack.c.bf16 %v1549, %v1547
    %v1635 = vpack.c.bf16 %v1552, %v1550
    %v1636 = vpack.c.bf16 %v1553, %v1551
    %v1637 = vpack.c.bf16 %v1556, %v1554
    %v1638 = vpack.c.bf16 %v1557, %v1555
    %v1639 = vpack.c.bf16 %v1560, %v1558
    %v1640 = vpack.c.bf16 %v1561, %v1559
    %v1641 = vpack.c.bf16 %v1564, %v1562
    %v1642 = vpack.c.bf16 %v1565, %v1563
    %v1643 = vpack.c.bf16 %v1568, %v1566
    %v1644 = vpack.c.bf16 %v1569, %v1567
    %v1645 = vpack.c.bf16 %v1572, %v1570
    %v1646 = vpack.c.bf16 %v1573, %v1571
    %v1647 = vpack.c.bf16 %v1576, %v1574
    %v1648 = vpack.c.bf16 %v1577, %v1575
    %v1650 = vlaneseq
    %v1651 = vshrl.u32 %v1650, 7
    %v1652 = vsub.s32 0, %v1651
    %v1653 = vrot.slane %v1610, %v1652
    %v1687 = vunpack.c.l.b16 %v1578
    %v1688 = vunpack.c.l.b16 %v1579
    %v1689 = vunpack.c.l.b16 %v1580
    %v1690 = vunpack.c.l.b16 %v1581
    %v1691 = vunpack.c.l.b16 %v1582
    %v1692 = vunpack.c.l.b16 %v1583
    %v1693 = vunpack.c.l.b16 %v1584
    %v1694 = vunpack.c.l.b16 %v1585
    %v1695 = vunpack.c.l.b16 %v1586
    %v1696 = vunpack.c.l.b16 %v1587
    %v1697 = vunpack.c.l.b16 %v1588
    %v1698 = vunpack.c.l.b16 %v1589
    %v1699 = vunpack.c.l.b16 %v1590
    %v1700 = vunpack.c.l.b16 %v1591
    %v1701 = vunpack.c.l.b16 %v1592
    %v1702 = vunpack.c.l.b16 %v1593
    %v1703 = vunpack.c.l.b16 %v1594
    %v1704 = vunpack.c.l.b16 %v1595
    %v1705 = vunpack.c.l.b16 %v1596
    %v1706 = vunpack.c.l.b16 %v1597
    %v1707 = vunpack.c.l.b16 %v1598
    %v1708 = vunpack.c.l.b16 %v1599
    %v1709 = vunpack.c.l.b16 %v1600
    %v1710 = vunpack.c.l.b16 %v1601
    %v1711 = vunpack.c.l.b16 %v1602
    %v1712 = vunpack.c.l.b16 %v1603
    %v1713 = vunpack.c.l.b16 %v1604
    %v1714 = vunpack.c.l.b16 %v1605
    %v1715 = vunpack.c.l.b16 %v1606
    %v1716 = vunpack.c.l.b16 %v1607
    %v1717 = vunpack.c.l.b16 %v1608
    %v1718 = vunpack.c.l.b16 %v1609
    %v1719 = vpack.c.b16 %v1688, %v1687
    %v1720 = vpack.c.b16 %v1690, %v1689
    %v1721 = vpack.c.b16 %v1692, %v1691
    %v1722 = vpack.c.b16 %v1694, %v1693
    %v1723 = vpack.c.b16 %v1696, %v1695
    %v1724 = vpack.c.b16 %v1698, %v1697
    %v1725 = vpack.c.b16 %v1700, %v1699
    %v1726 = vpack.c.b16 %v1702, %v1701
    %v1727 = vpack.c.b16 %v1704, %v1703
    %v1728 = vpack.c.b16 %v1706, %v1705
    %v1729 = vpack.c.b16 %v1708, %v1707
    %v1730 = vpack.c.b16 %v1710, %v1709
    %v1731 = vpack.c.b16 %v1712, %v1711
    %v1732 = vpack.c.b16 %v1714, %v1713
    %v1733 = vpack.c.b16 %v1716, %v1715
    %v1734 = vpack.c.b16 %v1718, %v1717
    %1751 = vmatprep.subr.bf16.mxu0 0
    %1752 = vmatpush1.bf16.msra.mxu0 %v1719
    %1753 = vmatprep.subr.bf16.mxu0 0
    %1754 = vmatpush1.bf16.msra.mxu0 %v1720
    %1755 = vmatprep.subr.bf16.mxu0 0
    %1756 = vmatpush1.bf16.msra.mxu0 %v1721
    %1757 = vmatprep.subr.bf16.mxu0 0
    %1758 = vmatpush1.bf16.msra.mxu0 %v1722
    %1759 = vmatprep.subr.bf16.mxu0 0
    %1760 = vmatpush1.bf16.msra.mxu0 %v1723
    %1761 = vmatprep.subr.bf16.mxu0 0
    %1762 = vmatpush1.bf16.msra.mxu0 %v1724
    %1763 = vmatprep.subr.bf16.mxu0 0
    %1764 = vmatpush1.bf16.msra.mxu0 %v1725
    %1765 = vmatprep.subr.bf16.mxu0 0
    %1766 = vmatpush1.bf16.msra.mxu0 %v1726
    %1767 = vmatprep.subr.bf16.mxu0 0
    %1768 = vmatpush1.bf16.msra.mxu0 %v1727
    %1769 = vmatprep.subr.bf16.mxu0 0
    %1770 = vmatpush1.bf16.msra.mxu0 %v1728
    %1771 = vmatprep.subr.bf16.mxu0 0
    %1772 = vmatpush1.bf16.msra.mxu0 %v1729
    %1773 = vmatprep.subr.bf16.mxu0 0
    %1774 = vmatpush1.bf16.msra.mxu0 %v1730
    %1775 = vmatprep.subr.bf16.mxu0 0
    %1776 = vmatpush1.bf16.msra.mxu0 %v1731
    %1777 = vmatprep.subr.bf16.mxu0 0
    %1778 = vmatpush1.bf16.msra.mxu0 %v1732
    %1779 = vmatprep.subr.bf16.mxu0 0
    %1780 = vmatpush1.bf16.msra.mxu0 %v1733
    %1781 = vmatprep.subr.bf16.mxu0 0
    %1782 = vmatpush1.bf16.msra.mxu0 %v1734
    %1783 = vmatprep.mubr.bf16.mxu0 %v1612
    %1784 = vmatmul.mubr.bf16.gmra.mrb[0].mxu0 %v1611
    %v1785 = vpop.f32.mrb[0].mxu0
    %v1786 = vadd.f32 %v1653, %v1785
    %v1787 = vpop.f32.mrb[0].mxu0
    %v1788 = vpop.f32.mrb[0].mxu0
    %v1789 = vadd.f32 %v1653, %v1788
    %v1790 = vpop.f32.mrb[0].mxu0
    %1791 = vmatprep.mubr.bf16.mxu0 %v1614
    %1792 = vmatmul.mubr.bf16.gmra.mrb[0].mxu0 %v1613
    %v1793 = vpop.f32.mrb[0].mxu0
    %v1794 = vadd.f32 %v1653, %v1793
    %v1795 = vpop.f32.mrb[0].mxu0
    %v1796 = vpop.f32.mrb[0].mxu0
    %v1797 = vadd.f32 %v1653, %v1796
    %v1798 = vpop.f32.mrb[0].mxu0
    %1799 = vmatprep.mubr.bf16.mxu0 %v1616
    %1800 = vmatmul.mubr.bf16.gmra.mrb[0].mxu0 %v1615
    %v1801 = vpop.f32.mrb[0].mxu0
    %v1802 = vadd.f32 %v1653, %v1801
    %v1803 = vpop.f32.mrb[0].mxu0
    %v1804 = vpop.f32.mrb[0].mxu0
    %v1805 = vadd.f32 %v1653, %v1804
    %v1806 = vpop.f32.mrb[0].mxu0
    %1807 = vmatprep.mubr.bf16.mxu0 %v1618
    %1808 = vmatmul.mubr.bf16.gmra.mrb[0].mxu0 %v1617
    %v1809 = vpop.f32.mrb[0].mxu0
    %v1810 = vadd.f32 %v1653, %v1809
    %v1811 = vpop.f32.mrb[0].mxu0
    %v1812 = vpop.f32.mrb[0].mxu0
    %v1813 = vadd.f32 %v1653, %v1812
    %v1814 = vpop.f32.mrb[0].mxu0
    %1815 = vmatprep.mubr.bf16.mxu0 %v1620
    %1816 = vmatmul.mubr.bf16.gmra.mrb[0].mxu0 %v1619
    %v1817 = vpop.f32.mrb[0].mxu0
    %v1818 = vadd.f32 %v1653, %v1817
    %v1819 = vpop.f32.mrb[0].mxu0
    %v1820 = vpop.f32.mrb[0].mxu0
    %v1821 = vadd.f32 %v1653, %v1820
    %v1822 = vpop.f32.mrb[0].mxu0
    %1823 = vmatprep.mubr.bf16.mxu0 %v1622
    %1824 = vmatmul.mubr.bf16.gmra.mrb[0].mxu0 %v1621
    %v1825 = vpop.f32.mrb[0].mxu0
    %v1826 = vadd.f32 %v1653, %v1825
    %v1827 = vpop.f32.mrb[0].mxu0
    %v1828 = vpop.f32.mrb[0].mxu0
    %v1829 = vadd.f32 %v1653, %v1828
    %v1830 = vpop.f32.mrb[0].mxu0
    %1831 = vmatprep.mubr.bf16.mxu0 %v1624
    %1832 = vmatmul.mubr.bf16.gmra.mrb[0].mxu0 %v1623
    %v1833 = vpop.f32.mrb[0].mxu0
    %v1834 = vadd.f32 %v1653, %v1833
    %v1835 = vpop.f32.mrb[0].mxu0
    %v1836 = vpop.f32.mrb[0].mxu0
    %v1837 = vadd.f32 %v1653, %v1836
    %v1838 = vpop.f32.mrb[0].mxu0
    %1839 = vmatprep.mubr.bf16.mxu0 %v1626
    %1840 = vmatmul.mubr.bf16.gmra.mrb[0].mxu0 %v1625
    %v1841 = vpop.f32.mrb[0].mxu0
    %v1842 = vadd.f32 %v1653, %v1841
    %v1843 = vpop.f32.mrb[0].mxu0
    %v1844 = vpop.f32.mrb[0].mxu0
    %v1845 = vadd.f32 %v1653, %v1844
    %v1846 = vpop.f32.mrb[0].mxu0
    %1847 = vmatprep.mubr.bf16.mxu0 %v1628
    %1848 = vmatmul.mubr.bf16.gmra.mrb[0].mxu0 %v1627
    %v1849 = vpop.f32.mrb[0].mxu0
    %v1850 = vadd.f32 %v1653, %v1849
    %v1851 = vpop.f32.mrb[0].mxu0
    %v1852 = vpop.f32.mrb[0].mxu0
    %v1853 = vadd.f32 %v1653, %v1852
    %v1854 = vpop.f32.mrb[0].mxu0
    %1855 = vmatprep.mubr.bf16.mxu0 %v1630
    %1856 = vmatmul.mubr.bf16.gmra.mrb[0].mxu0 %v1629
    %v1857 = vpop.f32.mrb[0].mxu0
    %v1858 = vadd.f32 %v1653, %v1857
    %v1859 = vpop.f32.mrb[0].mxu0
    %v1860 = vpop.f32.mrb[0].mxu0
    %v1861 = vadd.f32 %v1653, %v1860
    %v1862 = vpop.f32.mrb[0].mxu0
    %1863 = vmatprep.mubr.bf16.mxu0 %v1632
    %1864 = vmatmul.mubr.bf16.gmra.mrb[0].mxu0 %v1631
    %v1865 = vpop.f32.mrb[0].mxu0
    %v1866 = vadd.f32 %v1653, %v1865
    %v1867 = vpop.f32.mrb[0].mxu0
    %v1868 = vpop.f32.mrb[0].mxu0
    %v1869 = vadd.f32 %v1653, %v1868
    %v1870 = vpop.f32.mrb[0].mxu0
    %1871 = vmatprep.mubr.bf16.mxu0 %v1634
    %1872 = vmatmul.mubr.bf16.gmra.mrb[0].mxu0 %v1633
    %v1873 = vpop.f32.mrb[0].mxu0
    %v1874 = vadd.f32 %v1653, %v1873
    %v1875 = vpop.f32.mrb[0].mxu0
    %v1876 = vpop.f32.mrb[0].mxu0
    %v1877 = vadd.f32 %v1653, %v1876
    %v1878 = vpop.f32.mrb[0].mxu0
    %1879 = vmatprep.mubr.bf16.mxu0 %v1636
    %1880 = vmatmul.mubr.bf16.gmra.mrb[0].mxu0 %v1635
    %v1881 = vpop.f32.mrb[0].mxu0
    %v1882 = vadd.f32 %v1653, %v1881
    %v1883 = vpop.f32.mrb[0].mxu0
    %v1884 = vpop.f32.mrb[0].mxu0
    %v1885 = vadd.f32 %v1653, %v1884
    %v1886 = vpop.f32.mrb[0].mxu0
    %1887 = vmatprep.mubr.bf16.mxu0 %v1638
    %1888 = vmatmul.mubr.bf16.gmra.mrb[0].mxu0 %v1637
    %v1889 = vpop.f32.mrb[0].mxu0
    %v1890 = vadd.f32 %v1653, %v1889
    %v1891 = vpop.f32.mrb[0].mxu0
    %v1892 = vpop.f32.mrb[0].mxu0
    %v1893 = vadd.f32 %v1653, %v1892
    %v1894 = vpop.f32.mrb[0].mxu0
    %1895 = vmatprep.mubr.bf16.mxu0 %v1640
    %1896 = vmatmul.mubr.bf16.gmra.mrb[0].mxu0 %v1639
    %v1897 = vpop.f32.mrb[0].mxu0
    %v1898 = vadd.f32 %v1653, %v1897
    %v1899 = vpop.f32.mrb[0].mxu0
    %v1900 = vpop.f32.mrb[0].mxu0
    %v1901 = vadd.f32 %v1653, %v1900
    %v1902 = vpop.f32.mrb[0].mxu0
    %1903 = vmatprep.mubr.bf16.mxu0 %v1642
    %1904 = vmatmul.mubr.bf16.gmra.mrb[0].mxu0 %v1641
    %v1905 = vpop.f32.mrb[0].mxu0
    %v1906 = vadd.f32 %v1653, %v1905
    %v1907 = vpop.f32.mrb[0].mxu0
    %v1908 = vpop.f32.mrb[0].mxu0
    %v1909 = vadd.f32 %v1653, %v1908
    %v1910 = vpop.f32.mrb[0].mxu0
    %1911 = vmatprep.mubr.bf16.mxu0 %v1644
    %1912 = vmatmul.mubr.bf16.gmra.mrb[0].mxu0 %v1643
    %v1913 = vpop.f32.mrb[0].mxu0
    %v1914 = vadd.f32 %v1653, %v1913
    %v1915 = vpop.f32.mrb[0].mxu0
    %v1916 = vpop.f32.mrb[0].mxu0
    %v1917 = vadd.f32 %v1653, %v1916
    %v1918 = vpop.f32.mrb[0].mxu0
    %1919 = vmatprep.mubr.bf16.mxu0 %v1646
    %1920 = vmatmul.mubr.bf16.gmra.mrb[0].mxu0 %v1645
    %v1921 = vpop.f32.mrb[0].mxu0
    %v1922 = vadd.f32 %v1653, %v1921
    %v1923 = vpop.f32.mrb[0].mxu0
    %v1924 = vpop.f32.mrb[0].mxu0
    %v1925 = vadd.f32 %v1653, %v1924
    %v1926 = vpop.f32.mrb[0].mxu0
    %1927 = vmatprep.mubr.bf16.mxu0 %v1648
    %1928 = vmatmul.mubr.bf16.gmra.mrb[0].mxu0 %v1647
    %v1929 = vpop.f32.mrb[0].mxu0
    %v1930 = vadd.f32 %v1653, %v1929
    %v1931 = vpop.f32.mrb[0].mxu0
    %v1932 = vpop.f32.mrb[0].mxu0
    %v1933 = vadd.f32 %v1653, %v1932
    %v1934 = vpop.f32.mrb[0].mxu0
    %1935 = vdwg.mxu0
    %v1936 = vmax.f32 %v1786, 0.0
    %v1937 = vmax.f32 %v1789, 0.0
    %v1938 = vmax.f32 %v1794, 0.0
    %v1939 = vmax.f32 %v1797, 0.0
    %v1940 = vmax.f32 %v1802, 0.0
    %v1941 = vmax.f32 %v1805, 0.0
    %v1942 = vmax.f32 %v1810, 0.0
    %v1943 = vmax.f32 %v1813, 0.0
    %v1944 = vmax.f32 %v1818, 0.0
    %v1945 = vmax.f32 %v1821, 0.0
    %v1946 = vmax.f32 %v1826, 0.0
    %v1947 = vmax.f32 %v1829, 0.0
    %v1948 = vmax.f32 %v1834, 0.0
    %v1949 = vmax.f32 %v1837, 0.0
    %v1950 = vmax.f32 %v1842, 0.0
    %v1951 = vmax.f32 %v1845, 0.0
    %v1952 = vmax.f32 %v1850, 0.0
    %v1953 = vmax.f32 %v1853, 0.0
    %v1954 = vmax.f32 %v1858, 0.0
    %v1955 = vmax.f32 %v1861, 0.0
    %v1956 = vmax.f32 %v1866, 0.0
    %v1957 = vmax.f32 %v1869, 0.0
    %v1958 = vmax.f32 %v1874, 0.0
    %v1959 = vmax.f32 %v1877, 0.0
    %v1960 = vmax.f32 %v1882, 0.0
    %v1961 = vmax.f32 %v1885, 0.0
    %v1962 = vmax.f32 %v1890, 0.0
    %v1963 = vmax.f32 %v1893, 0.0
    %v1964 = vmax.f32 %v1898, 0.0
    %v1965 = vmax.f32 %v1901, 0.0
    %v1966 = vmax.f32 %v1906, 0.0
    %v1967 = vmax.f32 %v1909, 0.0
    %v1968 = vmax.f32 %v1914, 0.0
    %v1969 = vmax.f32 %v1917, 0.0
    %v1970 = vmax.f32 %v1922, 0.0
    %v1971 = vmax.f32 %v1925, 0.0
    %v1972 = vmax.f32 %v1930, 0.0
    %v1973 = vmax.f32 %v1933, 0.0
    %v1974 = vld [vmem:[%s5] sm:$0xf]
    %v1975 = vld [vmem:[%s5 + $0x4] sm:$0xf]
    %v1976 = vld [vmem:[%s5 + $0x8] sm:$0xf]
    %v1977 = vld [vmem:[%s5 + $0xc] sm:$0xf]
    %v1978 = vld [vmem:[%s5 + $0x10] sm:$0xf]
    %v1979 = vld [vmem:[%s5 + $0x14] sm:$0xf]
    %v1980 = vld [vmem:[%s5 + $0x18] sm:$0xf]
    %v1981 = vld [vmem:[%s5 + $0x1c] sm:$0xf]
    %v1982 = vld [vmem:[%s5 + $0x20] sm:$0xf]
    %v1983 = vld [vmem:[%s5 + $0x24] sm:$0xf]
    %v1984 = vld [vmem:[%s5 + $0x28] sm:$0xf]
    %v1985 = vld [vmem:[%s5 + $0x2c] sm:$0xf]
    %v1986 = vld [vmem:[%s5 + $0x30] sm:$0xf]
    %v1987 = vld [vmem:[%s5 + $0x34] sm:$0xf]
    %v1988 = vld [vmem:[%s5 + $0x38] sm:$0xf]
    %v1989 = vld [vmem:[%s5 + $0x3c] sm:$0xf]
    %v1990 = vld [vmem:[%s6] sm:$0x1]
    %v1991 = vpack.c.bf16 %v1937, %v1936
    %v1992 = vpack.c.bf16 %v1939, %v1938
    %v1993 = vpack.c.bf16 %v1941, %v1940
    %v1994 = vpack.c.bf16 %v1943, %v1942
    %v1995 = vpack.c.bf16 %v1945, %v1944
    %v1996 = vpack.c.bf16 %v1947, %v1946
    %v1997 = vpack.c.bf16 %v1949, %v1948
    %v1998 = vpack.c.bf16 %v1951, %v1950
    %v1999 = vpack.c.bf16 %v1953, %v1952
    %v2000 = vpack.c.bf16 %v1955, %v1954
    %v2001 = vpack.c.bf16 %v1957, %v1956
    %v2002 = vpack.c.bf16 %v1959, %v1958
    %v2003 = vpack.c.bf16 %v1961, %v1960
    %v2004 = vpack.c.bf16 %v1963, %v1962
    %v2005 = vpack.c.bf16 %v1965, %v1964
    %v2006 = vpack.c.bf16 %v1967, %v1966
    %v2007 = vpack.c.bf16 %v1969, %v1968
    %v2008 = vpack.c.bf16 %v1971, %v1970
    %v2009 = vpack.c.bf16 %v1973, %v1972
    %v2011 = vlaneseq
    %v2012 = vshrl.u32 %v2011, 7
    %v2013 = vsub.s32 0, %v2012
    %v2014 = vrot.slane %v1990, %v2013
    %v2032 = vunpack.c.l.b16 %v1974
    %v2033 = vunpack.c.l.b16 %v1975
    %v2034 = vunpack.c.l.b16 %v1976
    %v2035 = vunpack.c.l.b16 %v1977
    %v2036 = vunpack.c.l.b16 %v1978
    %v2037 = vunpack.c.l.b16 %v1979
    %v2038 = vunpack.c.l.b16 %v1980
    %v2039 = vunpack.c.l.b16 %v1981
    %v2040 = vunpack.c.l.b16 %v1982
    %v2041 = vunpack.c.l.b16 %v1983
    %v2042 = vunpack.c.l.b16 %v1984
    %v2043 = vunpack.c.l.b16 %v1985
    %v2044 = vunpack.c.l.b16 %v1986
    %v2045 = vunpack.c.l.b16 %v1987
    %v2046 = vunpack.c.l.b16 %v1988
    %v2047 = vunpack.c.l.b16 %v1989
    %v2048 = vpack.c.b16 %v2033, %v2032
    %v2049 = vpack.c.b16 %v2035, %v2034
    %v2050 = vpack.c.b16 %v2037, %v2036
    %v2051 = vpack.c.b16 %v2039, %v2038
    %v2052 = vpack.c.b16 %v2041, %v2040
    %v2053 = vpack.c.b16 %v2043, %v2042
    %v2054 = vpack.c.b16 %v2045, %v2044
    %v2055 = vpack.c.b16 %v2047, %v2046
    %2064 = vmatprep.subr.bf16.mxu0 0
    %2065 = vmatpush1.bf16.msra.mxu0 %v2048
    %2066 = vmatprep.subr.bf16.mxu0 0
    %2067 = vmatpush1.bf16.msra.mxu0 %v2049
    %2068 = vmatprep.subr.bf16.mxu0 0
    %2069 = vmatpush1.bf16.msra.mxu0 %v2050
    %2070 = vmatprep.subr.bf16.mxu0 0
    %2071 = vmatpush1.bf16.msra.mxu0 %v2051
    %2072 = vmatprep.subr.bf16.mxu0 0
    %2073 = vmatpush1.bf16.msra.mxu0 %v2052
    %2074 = vmatprep.subr.bf16.mxu0 0
    %2075 = vmatpush1.bf16.msra.mxu0 %v2053
    %2076 = vmatprep.subr.bf16.mxu0 0
    %2077 = vmatpush1.bf16.msra.mxu0 %v2054
    %2078 = vmatprep.subr.bf16.mxu0 0
    %2079 = vmatpush1.bf16.msra.mxu0 %v2055
    %2080 = vmatprep.subr.bf16.mxu0 0
    %2081 = vmatpush1.bf16.msra.mxu0 0
    %2082 = vmatprep.subr.bf16.mxu0 0
    %2083 = vmatpush1.bf16.msra.mxu0 0
    %2084 = vmatprep.subr.bf16.mxu0 0
    %2085 = vmatpush1.bf16.msra.mxu0 0
    %2086 = vmatprep.subr.bf16.mxu0 0
    %2087 = vmatpush1.bf16.msra.mxu0 0
    %2088 = vmatprep.subr.bf16.mxu0 0
    %2089 = vmatpush1.bf16.msra.mxu0 0
    %2090 = vmatprep.subr.bf16.mxu0 0
    %2091 = vmatpush1.bf16.msra.mxu0 0
    %2092 = vmatprep.subr.bf16.mxu0 0
    %2093 = vmatpush1.bf16.msra.mxu0 0
    %2094 = vmatprep.subr.bf16.mxu0 0
    %2095 = vmatpush1.bf16.msra.mxu0 0
    %2096 = vmatprep.mubr.bf16.mxu0 0
    %2097 = vmatmul.mubr.bf16.gmra.mrb[0].mxu0 %v1991
    %v2098 = vpop.f32.mrb[0].mxu0
    %v2099 = vadd.f32 %v2014, %v2098
    %v2100 = vpop.f32.mrb[0].mxu0
    %v2101 = vpop.f32.mrb[0].mxu0
    %v2102 = vadd.f32 %v2014, %v2101
    %v2103 = vpop.f32.mrb[0].mxu0
    %2104 = vmatprep.mubr.bf16.mxu0 0
    %2105 = vmatmul.mubr.bf16.gmra.mrb[0].mxu0 %v1992
    %v2106 = vpop.f32.mrb[0].mxu0
    %v2107 = vadd.f32 %v2014, %v2106
    %v2108 = vpop.f32.mrb[0].mxu0
    %v2109 = vpop.f32.mrb[0].mxu0
    %v2110 = vadd.f32 %v2014, %v2109
    %v2111 = vpop.f32.mrb[0].mxu0
    %2112 = vmatprep.mubr.bf16.mxu0 0
    %2113 = vmatmul.mubr.bf16.gmra.mrb[0].mxu0 %v1993
    %v2114 = vpop.f32.mrb[0].mxu0
    %v2115 = vadd.f32 %v2014, %v2114
    %v2116 = vpop.f32.mrb[0].mxu0
    %v2117 = vpop.f32.mrb[0].mxu0
    %v2118 = vadd.f32 %v2014, %v2117
    %v2119 = vpop.f32.mrb[0].mxu0
    %2120 = vmatprep.mubr.bf16.mxu0 0
    %2121 = vmatmul.mubr.bf16.gmra.mrb[0].mxu0 %v1994
    %v2122 = vpop.f32.mrb[0].mxu0
    %v2123 = vadd.f32 %v2014, %v2122
    %v2124 = vpop.f32.mrb[0].mxu0
    %v2125 = vpop.f32.mrb[0].mxu0
    %v2126 = vadd.f32 %v2014, %v2125
    %v2127 = vpop.f32.mrb[0].mxu0
    %2128 = vmatprep.mubr.bf16.mxu0 0
    %2129 = vmatmul.mubr.bf16.gmra.mrb[0].mxu0 %v1995
    %v2130 = vpop.f32.mrb[0].mxu0
    %v2131 = vadd.f32 %v2014, %v2130
    %v2132 = vpop.f32.mrb[0].mxu0
    %v2133 = vpop.f32.mrb[0].mxu0
    %v2134 = vadd.f32 %v2014, %v2133
    %v2135 = vpop.f32.mrb[0].mxu0
    %2136 = vmatprep.mubr.bf16.mxu0 0
    %2137 = vmatmul.mubr.bf16.gmra.mrb[0].mxu0 %v1996
    %v2138 = vpop.f32.mrb[0].mxu0
    %v2139 = vadd.f32 %v2014, %v2138
    %v2140 = vpop.f32.mrb[0].mxu0
    %v2141 = vpop.f32.mrb[0].mxu0
    %v2142 = vadd.f32 %v2014, %v2141
    %v2143 = vpop.f32.mrb[0].mxu0
    %2144 = vmatprep.mubr.bf16.mxu0 0
    %2145 = vmatmul.mubr.bf16.gmra.mrb[0].mxu0 %v1997
    %v2146 = vpop.f32.mrb[0].mxu0
    %v2147 = vadd.f32 %v2014, %v2146
    %v2148 = vpop.f32.mrb[0].mxu0
    %v2149 = vpop.f32.mrb[0].mxu0
    %v2150 = vadd.f32 %v2014, %v2149
    %v2151 = vpop.f32.mrb[0].mxu0
    %2152 = vmatprep.mubr.bf16.mxu0 0
    %2153 = vmatmul.mubr.bf16.gmra.mrb[0].mxu0 %v1998
    %v2154 = vpop.f32.mrb[0].mxu0
    %v2155 = vadd.f32 %v2014, %v2154
    %v2156 = vpop.f32.mrb[0].mxu0
    %v2157 = vpop.f32.mrb[0].mxu0
    %v2158 = vadd.f32 %v2014, %v2157
    %v2159 = vpop.f32.mrb[0].mxu0
    %2160 = vmatprep.mubr.bf16.mxu0 0
    %2161 = vmatmul.mubr.bf16.gmra.mrb[0].mxu0 %v1999
    %v2162 = vpop.f32.mrb[0].mxu0
    %v2163 = vadd.f32 %v2014, %v2162
    %v2164 = vpop.f32.mrb[0].mxu0
    %v2165 = vpop.f32.mrb[0].mxu0
    %v2166 = vadd.f32 %v2014, %v2165
    %v2167 = vpop.f32.mrb[0].mxu0
    %2168 = vmatprep.mubr.bf16.mxu0 0
    %2169 = vmatmul.mubr.bf16.gmra.mrb[0].mxu0 %v2000
    %v2170 = vpop.f32.mrb[0].mxu0
    %v2171 = vadd.f32 %v2014, %v2170
    %v2172 = vpop.f32.mrb[0].mxu0
    %v2173 = vpop.f32.mrb[0].mxu0
    %v2174 = vadd.f32 %v2014, %v2173
    %v2175 = vpop.f32.mrb[0].mxu0
    %2176 = vmatprep.mubr.bf16.mxu0 0
    %2177 = vmatmul.mubr.bf16.gmra.mrb[0].mxu0 %v2001
    %v2178 = vpop.f32.mrb[0].mxu0
    %v2179 = vadd.f32 %v2014, %v2178
    %v2180 = vpop.f32.mrb[0].mxu0
    %v2181 = vpop.f32.mrb[0].mxu0
    %v2182 = vadd.f32 %v2014, %v2181
    %v2183 = vpop.f32.mrb[0].mxu0
    %2184 = vmatprep.mubr.bf16.mxu0 0
    %2185 = vmatmul.mubr.bf16.gmra.mrb[0].mxu0 %v2002
    %v2186 = vpop.f32.mrb[0].mxu0
    %v2187 = vadd.f32 %v2014, %v2186
    %v2188 = vpop.f32.mrb[0].mxu0
    %v2189 = vpop.f32.mrb[0].mxu0
    %v2190 = vadd.f32 %v2014, %v2189
    %v2191 = vpop.f32.mrb[0].mxu0
    %2192 = vmatprep.mubr.bf16.mxu0 0
    %2193 = vmatmul.mubr.bf16.gmra.mrb[0].mxu0 %v2003
    %v2194 = vpop.f32.mrb[0].mxu0
    %v2195 = vadd.f32 %v2014, %v2194
    %v2196 = vpop.f32.mrb[0].mxu0
    %v2197 = vpop.f32.mrb[0].mxu0
    %v2198 = vadd.f32 %v2014, %v2197
    %v2199 = vpop.f32.mrb[0].mxu0
    %2200 = vmatprep.mubr.bf16.mxu0 0
    %2201 = vmatmul.mubr.bf16.gmra.mrb[0].mxu0 %v2004
    %v2202 = vpop.f32.mrb[0].mxu0
    %v2203 = vadd.f32 %v2014, %v2202
    %v2204 = vpop.f32.mrb[0].mxu0
    %v2205 = vpop.f32.mrb[0].mxu0
    %v2206 = vadd.f32 %v2014, %v2205
    %v2207 = vpop.f32.mrb[0].mxu0
    %2208 = vmatprep.mubr.bf16.mxu0 0
    %2209 = vmatmul.mubr.bf16.gmra.mrb[0].mxu0 %v2005
    %v2210 = vpop.f32.mrb[0].mxu0
    %v2211 = vadd.f32 %v2014, %v2210
    %v2212 = vpop.f32.mrb[0].mxu0
    %v2213 = vpop.f32.mrb[0].mxu0
    %v2214 = vadd.f32 %v2014, %v2213
    %v2215 = vpop.f32.mrb[0].mxu0
    %2216 = vmatprep.mubr.bf16.mxu0 0
    %2217 = vmatmul.mubr.bf16.gmra.mrb[0].mxu0 %v2006
    %v2218 = vpop.f32.mrb[0].mxu0
    %v2219 = vadd.f32 %v2014, %v2218
    %v2220 = vpop.f32.mrb[0].mxu0
    %v2221 = vpop.f32.mrb[0].mxu0
    %v2222 = vadd.f32 %v2014, %v2221
    %v2223 = vpop.f32.mrb[0].mxu0
    %2224 = vmatprep.mubr.bf16.mxu0 0
    %2225 = vmatmul.mubr.bf16.gmra.mrb[0].mxu0 %v2007
    %v2226 = vpop.f32.mrb[0].mxu0
    %v2227 = vadd.f32 %v2014, %v2226
    %v2228 = vpop.f32.mrb[0].mxu0
    %v2229 = vpop.f32.mrb[0].mxu0
    %v2230 = vadd.f32 %v2014, %v2229
    %v2231 = vpop.f32.mrb[0].mxu0
    %2232 = vmatprep.mubr.bf16.mxu0 0
    %2233 = vmatmul.mubr.bf16.gmra.mrb[0].mxu0 %v2008
    %v2234 = vpop.f32.mrb[0].mxu0
    %v2235 = vadd.f32 %v2014, %v2234
    %v2236 = vpop.f32.mrb[0].mxu0
    %v2237 = vpop.f32.mrb[0].mxu0
    %v2238 = vadd.f32 %v2014, %v2237
    %v2239 = vpop.f32.mrb[0].mxu0
    %2240 = vmatprep.mubr.bf16.mxu0 0
    %2241 = vmatmul.mubr.bf16.gmra.mrb[0].mxu0 %v2009
    %v2242 = vpop.f32.mrb[0].mxu0
    %v2243 = vadd.f32 %v2014, %v2242
    %v2244 = vpop.f32.mrb[0].mxu0
    %v2245 = vpop.f32.mrb[0].mxu0
    %v2246 = vadd.f32 %v2014, %v2245
    %v2247 = vpop.f32.mrb[0].mxu0
    %2248 = vdwg.mxu0
    %v2249 = vmax.f32 %v2099, 0.0
    %v2250 = vmax.f32 %v2102, 0.0
    %v2251 = vmax.f32 %v2107, 0.0
    %v2252 = vmax.f32 %v2110, 0.0
    %v2253 = vmax.f32 %v2115, 0.0
    %v2254 = vmax.f32 %v2118, 0.0
    %v2255 = vmax.f32 %v2123, 0.0
    %v2256 = vmax.f32 %v2126, 0.0
    %v2257 = vmax.f32 %v2131, 0.0
    %v2258 = vmax.f32 %v2134, 0.0
    %v2259 = vmax.f32 %v2139, 0.0
    %v2260 = vmax.f32 %v2142, 0.0
    %v2261 = vmax.f32 %v2147, 0.0
    %v2262 = vmax.f32 %v2150, 0.0
    %v2263 = vmax.f32 %v2155, 0.0
    %v2264 = vmax.f32 %v2158, 0.0
    %v2265 = vmax.f32 %v2163, 0.0
    %v2266 = vmax.f32 %v2166, 0.0
    %v2267 = vmax.f32 %v2171, 0.0
    %v2268 = vmax.f32 %v2174, 0.0
    %v2269 = vmax.f32 %v2179, 0.0
    %v2270 = vmax.f32 %v2182, 0.0
    %v2271 = vmax.f32 %v2187, 0.0
    %v2272 = vmax.f32 %v2190, 0.0
    %v2273 = vmax.f32 %v2195, 0.0
    %v2274 = vmax.f32 %v2198, 0.0
    %v2275 = vmax.f32 %v2203, 0.0
    %v2276 = vmax.f32 %v2206, 0.0
    %v2277 = vmax.f32 %v2211, 0.0
    %v2278 = vmax.f32 %v2214, 0.0
    %v2279 = vmax.f32 %v2219, 0.0
    %v2280 = vmax.f32 %v2222, 0.0
    %v2281 = vmax.f32 %v2227, 0.0
    %v2282 = vmax.f32 %v2230, 0.0
    %v2283 = vmax.f32 %v2235, 0.0
    %v2284 = vmax.f32 %v2238, 0.0
    %v2285 = vmax.f32 %v2243, 0.0
    %v2286 = vmax.f32 %v2246, 0.0
    %v2287 = vld [vmem:[%s7] sm:$0xf]
    %v2288 = vld [vmem:[%s7 + $0x4] sm:$0xf]
    %v2289 = vld [vmem:[%s7 + $0x8] sm:$0xf]
    %v2290 = vld [vmem:[%s7 + $0xc] sm:$0xf]
    %v2291 = vld [vmem:[%s7 + $0x10] sm:$0xf]
    %v2292 = vld [vmem:[%s7 + $0x14] sm:$0xf]
    %v2293 = vld [vmem:[%s7 + $0x18] sm:$0xf]
    %v2294 = vld [vmem:[%s7 + $0x1c] sm:$0xf]
    %v2295 = vld [vmem:[%s7 + $0x20] sm:$0xf]
    %v2296 = vld [vmem:[%s7 + $0x24] sm:$0xf]
    %v2297 = vld [vmem:[%s7 + $0x28] sm:$0xf]
    %v2298 = vld [vmem:[%s7 + $0x2c] sm:$0xf]
    %v2299 = vld [vmem:[%s7 + $0x30] sm:$0xf]
    %v2300 = vld [vmem:[%s7 + $0x34] sm:$0xf]
    %v2301 = vld [vmem:[%s7 + $0x38] sm:$0xf]
    %v2302 = vld [vmem:[%s7 + $0x3c] sm:$0xf]
    %v2303 = vld [vmem:[%s8] sm:$0x1]
    %v2304 = vpack.c.bf16 %v2250, %v2249
    %v2305 = vpack.c.bf16 %v2252, %v2251
    %v2306 = vpack.c.bf16 %v2254, %v2253
    %v2307 = vpack.c.bf16 %v2256, %v2255
    %v2308 = vpack.c.bf16 %v2258, %v2257
    %v2309 = vpack.c.bf16 %v2260, %v2259
    %v2310 = vpack.c.bf16 %v2262, %v2261
    %v2311 = vpack.c.bf16 %v2264, %v2263
    %v2312 = vpack.c.bf16 %v2266, %v2265
    %v2313 = vpack.c.bf16 %v2268, %v2267
    %v2314 = vpack.c.bf16 %v2270, %v2269
    %v2315 = vpack.c.bf16 %v2272, %v2271
    %v2316 = vpack.c.bf16 %v2274, %v2273
    %v2317 = vpack.c.bf16 %v2276, %v2275
    %v2318 = vpack.c.bf16 %v2278, %v2277
    %v2319 = vpack.c.bf16 %v2280, %v2279
    %v2320 = vpack.c.bf16 %v2282, %v2281
    %v2321 = vpack.c.bf16 %v2284, %v2283
    %v2322 = vpack.c.bf16 %v2286, %v2285
    %v2324 = vlaneseq
    %v2325 = vshrl.u32 %v2324, 7
    %v2326 = vsub.s32 0, %v2325
    %v2327 = vrot.slane %v2303, %v2326
    %v2345 = vunpack.c.l.b16 %v2287
    %v2346 = vunpack.c.l.b16 %v2288
    %v2347 = vunpack.c.l.b16 %v2289
    %v2348 = vunpack.c.l.b16 %v2290
    %v2349 = vunpack.c.l.b16 %v2291
    %v2350 = vunpack.c.l.b16 %v2292
    %v2351 = vunpack.c.l.b16 %v2293
    %v2352 = vunpack.c.l.b16 %v2294
    %v2353 = vunpack.c.l.b16 %v2295
    %v2354 = vunpack.c.l.b16 %v2296
    %v2355 = vunpack.c.l.b16 %v2297
    %v2356 = vunpack.c.l.b16 %v2298
    %v2357 = vunpack.c.l.b16 %v2299
    %v2358 = vunpack.c.l.b16 %v2300
    %v2359 = vunpack.c.l.b16 %v2301
    %v2360 = vunpack.c.l.b16 %v2302
    %v2361 = vpack.c.b16 %v2346, %v2345
    %v2362 = vpack.c.b16 %v2348, %v2347
    %v2363 = vpack.c.b16 %v2350, %v2349
    %v2364 = vpack.c.b16 %v2352, %v2351
    %v2365 = vpack.c.b16 %v2354, %v2353
    %v2366 = vpack.c.b16 %v2356, %v2355
    %v2367 = vpack.c.b16 %v2358, %v2357
    %v2368 = vpack.c.b16 %v2360, %v2359
    %2377 = vmatprep.subr.bf16.mxu0 0
    %2378 = vmatpush1.bf16.msra.mxu0 %v2361
    %2379 = vmatprep.subr.bf16.mxu0 0
    %2380 = vmatpush1.bf16.msra.mxu0 %v2362
    %2381 = vmatprep.subr.bf16.mxu0 0
    %2382 = vmatpush1.bf16.msra.mxu0 %v2363
    %2383 = vmatprep.subr.bf16.mxu0 0
    %2384 = vmatpush1.bf16.msra.mxu0 %v2364
    %2385 = vmatprep.subr.bf16.mxu0 0
    %2386 = vmatpush1.bf16.msra.mxu0 %v2365
    %2387 = vmatprep.subr.bf16.mxu0 0
    %2388 = vmatpush1.bf16.msra.mxu0 %v2366
    %2389 = vmatprep.subr.bf16.mxu0 0
    %2390 = vmatpush1.bf16.msra.mxu0 %v2367
    %2391 = vmatprep.subr.bf16.mxu0 0
    %2392 = vmatpush1.bf16.msra.mxu0 %v2368
    %2393 = vmatprep.subr.bf16.mxu0 0
    %2394 = vmatpush1.bf16.msra.mxu0 0
    %2395 = vmatprep.subr.bf16.mxu0 0
    %2396 = vmatpush1.bf16.msra.mxu0 0
    %2397 = vmatprep.subr.bf16.mxu0 0
    %2398 = vmatpush1.bf16.msra.mxu0 0
    %2399 = vmatprep.subr.bf16.mxu0 0
    %2400 = vmatpush1.bf16.msra.mxu0 0
    %2401 = vmatprep.subr.bf16.mxu0 0
    %2402 = vmatpush1.bf16.msra.mxu0 0
    %2403 = vmatprep.subr.bf16.mxu0 0
    %2404 = vmatpush1.bf16.msra.mxu0 0
    %2405 = vmatprep.subr.bf16.mxu0 0
    %2406 = vmatpush1.bf16.msra.mxu0 0
    %2407 = vmatprep.subr.bf16.mxu0 0
    %2408 = vmatpush1.bf16.msra.mxu0 0
    %2409 = vmatprep.mubr.bf16.mxu0 0
    %2410 = vmatmul.mubr.bf16.gmra.mrb[0].mxu0 %v2304
    %v2411 = vpop.f32.mrb[0].mxu0
    %v2412 = vadd.f32 %v2327, %v2411
    %v2413 = vpop.f32.mrb[0].mxu0
    %v2414 = vpop.f32.mrb[0].mxu0
    %v2415 = vadd.f32 %v2327, %v2414
    %v2416 = vpop.f32.mrb[0].mxu0
    %2417 = vmatprep.mubr.bf16.mxu0 0
    %2418 = vmatmul.mubr.bf16.gmra.mrb[0].mxu0 %v2305
    %v2419 = vpop.f32.mrb[0].mxu0
    %v2420 = vadd.f32 %v2327, %v2419
    %v2421 = vpop.f32.mrb[0].mxu0
    %v2422 = vpop.f32.mrb[0].mxu0
    %v2423 = vadd.f32 %v2327, %v2422
    %v2424 = vpop.f32.mrb[0].mxu0
    %2425 = vmatprep.mubr.bf16.mxu0 0
    %2426 = vmatmul.mubr.bf16.gmra.mrb[0].mxu0 %v2306
    %v2427 = vpop.f32.mrb[0].mxu0
    %v2428 = vadd.f32 %v2327, %v2427
    %v2429 = vpop.f32.mrb[0].mxu0
    %v2430 = vpop.f32.mrb[0].mxu0
    %v2431 = vadd.f32 %v2327, %v2430
    %v2432 = vpop.f32.mrb[0].mxu0
    %2433 = vmatprep.mubr.bf16.mxu0 0
    %2434 = vmatmul.mubr.bf16.gmra.mrb[0].mxu0 %v2307
    %v2435 = vpop.f32.mrb[0].mxu0
    %v2436 = vadd.f32 %v2327, %v2435
    %v2437 = vpop.f32.mrb[0].mxu0
    %v2438 = vpop.f32.mrb[0].mxu0
    %v2439 = vadd.f32 %v2327, %v2438
    %v2440 = vpop.f32.mrb[0].mxu0
    %2441 = vmatprep.mubr.bf16.mxu0 0
    %2442 = vmatmul.mubr.bf16.gmra.mrb[0].mxu0 %v2308
    %v2443 = vpop.f32.mrb[0].mxu0
    %v2444 = vadd.f32 %v2327, %v2443
    %v2445 = vpop.f32.mrb[0].mxu0
    %v2446 = vpop.f32.mrb[0].mxu0
    %v2447 = vadd.f32 %v2327, %v2446
    %v2448 = vpop.f32.mrb[0].mxu0
    %2449 = vmatprep.mubr.bf16.mxu0 0
    %2450 = vmatmul.mubr.bf16.gmra.mrb[0].mxu0 %v2309
    %v2451 = vpop.f32.mrb[0].mxu0
    %v2452 = vadd.f32 %v2327, %v2451
    %v2453 = vpop.f32.mrb[0].mxu0
    %v2454 = vpop.f32.mrb[0].mxu0
    %v2455 = vadd.f32 %v2327, %v2454
    %v2456 = vpop.f32.mrb[0].mxu0
    %2457 = vmatprep.mubr.bf16.mxu0 0
    %2458 = vmatmul.mubr.bf16.gmra.mrb[0].mxu0 %v2310
    %v2459 = vpop.f32.mrb[0].mxu0
    %v2460 = vadd.f32 %v2327, %v2459
    %v2461 = vpop.f32.mrb[0].mxu0
    %v2462 = vpop.f32.mrb[0].mxu0
    %v2463 = vadd.f32 %v2327, %v2462
    %v2464 = vpop.f32.mrb[0].mxu0
    %2465 = vmatprep.mubr.bf16.mxu0 0
    %2466 = vmatmul.mubr.bf16.gmra.mrb[0].mxu0 %v2311
    %v2467 = vpop.f32.mrb[0].mxu0
    %v2468 = vadd.f32 %v2327, %v2467
    %v2469 = vpop.f32.mrb[0].mxu0
    %v2470 = vpop.f32.mrb[0].mxu0
    %v2471 = vadd.f32 %v2327, %v2470
    %v2472 = vpop.f32.mrb[0].mxu0
    %2473 = vmatprep.mubr.bf16.mxu0 0
    %2474 = vmatmul.mubr.bf16.gmra.mrb[0].mxu0 %v2312
    %v2475 = vpop.f32.mrb[0].mxu0
    %v2476 = vadd.f32 %v2327, %v2475
    %v2477 = vpop.f32.mrb[0].mxu0
    %v2478 = vpop.f32.mrb[0].mxu0
    %v2479 = vadd.f32 %v2327, %v2478
    %v2480 = vpop.f32.mrb[0].mxu0
    %2481 = vmatprep.mubr.bf16.mxu0 0
    %2482 = vmatmul.mubr.bf16.gmra.mrb[0].mxu0 %v2313
    %v2483 = vpop.f32.mrb[0].mxu0
    %v2484 = vadd.f32 %v2327, %v2483
    %v2485 = vpop.f32.mrb[0].mxu0
    %v2486 = vpop.f32.mrb[0].mxu0
    %v2487 = vadd.f32 %v2327, %v2486
    %v2488 = vpop.f32.mrb[0].mxu0
    %2489 = vmatprep.mubr.bf16.mxu0 0
    %2490 = vmatmul.mubr.bf16.gmra.mrb[0].mxu0 %v2314
    %v2491 = vpop.f32.mrb[0].mxu0
    %v2492 = vadd.f32 %v2327, %v2491
    %v2493 = vpop.f32.mrb[0].mxu0
    %v2494 = vpop.f32.mrb[0].mxu0
    %v2495 = vadd.f32 %v2327, %v2494
    %v2496 = vpop.f32.mrb[0].mxu0
    %2497 = vmatprep.mubr.bf16.mxu0 0
    %2498 = vmatmul.mubr.bf16.gmra.mrb[0].mxu0 %v2315
    %v2499 = vpop.f32.mrb[0].mxu0
    %v2500 = vadd.f32 %v2327, %v2499
    %v2501 = vpop.f32.mrb[0].mxu0
    %v2502 = vpop.f32.mrb[0].mxu0
    %v2503 = vadd.f32 %v2327, %v2502
    %v2504 = vpop.f32.mrb[0].mxu0
    %2505 = vmatprep.mubr.bf16.mxu0 0
    %2506 = vmatmul.mubr.bf16.gmra.mrb[0].mxu0 %v2316
    %v2507 = vpop.f32.mrb[0].mxu0
    %v2508 = vadd.f32 %v2327, %v2507
    %v2509 = vpop.f32.mrb[0].mxu0
    %v2510 = vpop.f32.mrb[0].mxu0
    %v2511 = vadd.f32 %v2327, %v2510
    %v2512 = vpop.f32.mrb[0].mxu0
    %2513 = vmatprep.mubr.bf16.mxu0 0
    %2514 = vmatmul.mubr.bf16.gmra.mrb[0].mxu0 %v2317
    %v2515 = vpop.f32.mrb[0].mxu0
    %v2516 = vadd.f32 %v2327, %v2515
    %v2517 = vpop.f32.mrb[0].mxu0
    %v2518 = vpop.f32.mrb[0].mxu0
    %v2519 = vadd.f32 %v2327, %v2518
    %v2520 = vpop.f32.mrb[0].mxu0
    %2521 = vmatprep.mubr.bf16.mxu0 0
    %2522 = vmatmul.mubr.bf16.gmra.mrb[0].mxu0 %v2318
    %v2523 = vpop.f32.mrb[0].mxu0
    %v2524 = vadd.f32 %v2327, %v2523
    %v2525 = vpop.f32.mrb[0].mxu0
    %v2526 = vpop.f32.mrb[0].mxu0
    %v2527 = vadd.f32 %v2327, %v2526
    %v2528 = vpop.f32.mrb[0].mxu0
    %2529 = vmatprep.mubr.bf16.mxu0 0
    %2530 = vmatmul.mubr.bf16.gmra.mrb[0].mxu0 %v2319
    %v2531 = vpop.f32.mrb[0].mxu0
    %v2532 = vadd.f32 %v2327, %v2531
    %v2533 = vpop.f32.mrb[0].mxu0
    %v2534 = vpop.f32.mrb[0].mxu0
    %v2535 = vadd.f32 %v2327, %v2534
    %v2536 = vpop.f32.mrb[0].mxu0
    %2537 = vmatprep.mubr.bf16.mxu0 0
    %2538 = vmatmul.mubr.bf16.gmra.mrb[0].mxu0 %v2320
    %v2539 = vpop.f32.mrb[0].mxu0
    %v2540 = vadd.f32 %v2327, %v2539
    %v2541 = vpop.f32.mrb[0].mxu0
    %v2542 = vpop.f32.mrb[0].mxu0
    %v2543 = vadd.f32 %v2327, %v2542
    %v2544 = vpop.f32.mrb[0].mxu0
    %2545 = vmatprep.mubr.bf16.mxu0 0
    %2546 = vmatmul.mubr.bf16.gmra.mrb[0].mxu0 %v2321
    %v2547 = vpop.f32.mrb[0].mxu0
    %v2548 = vadd.f32 %v2327, %v2547
    %v2549 = vpop.f32.mrb[0].mxu0
    %v2550 = vpop.f32.mrb[0].mxu0
    %v2551 = vadd.f32 %v2327, %v2550
    %v2552 = vpop.f32.mrb[0].mxu0
    %2553 = vmatprep.mubr.bf16.mxu0 0
    %2554 = vmatmul.mubr.bf16.gmra.mrb[0].mxu0 %v2322
    %v2555 = vpop.f32.mrb[0].mxu0
    %v2556 = vadd.f32 %v2327, %v2555
    %v2557 = vpop.f32.mrb[0].mxu0
    %v2558 = vpop.f32.mrb[0].mxu0
    %v2559 = vadd.f32 %v2327, %v2558
    %v2560 = vpop.f32.mrb[0].mxu0
    %2561 = vdwg.mxu0
    %v2562 = vld [vmem:[%s9] sm:$0xf]
    %v2563 = vld [vmem:[%s9 + $0x4] sm:$0xf]
    %v2564 = vld [vmem:[%s9 + $0x8] sm:$0xf]
    %v2565 = vld [vmem:[%s9 + $0xc] sm:$0xf]
    %v2566 = vld [vmem:[%s9 + $0x10] sm:$0xf]
    %v2567 = vld [vmem:[%s9 + $0x14] sm:$0xf]
    %v2568 = vld [vmem:[%s9 + $0x18] sm:$0xf]
    %v2569 = vld [vmem:[%s9 + $0x1c] sm:$0xf]
    %v2570 = vld [vmem:[%s9 + $0x20] sm:$0xf]
    %v2571 = vld [vmem:[%s9 + $0x24] sm:$0xf]
    %v2572 = vld [vmem:[%s9 + $0x28] sm:$0xf]
    %v2573 = vld [vmem:[%s9 + $0x2c] sm:$0xf]
    %v2574 = vld [vmem:[%s9 + $0x30] sm:$0xf]
    %v2575 = vld [vmem:[%s9 + $0x34] sm:$0xf]
    %v2576 = vld [vmem:[%s9 + $0x38] sm:$0xf]
    %v2577 = vld [vmem:[%s9 + $0x3c] sm:$0xf]
    %v2578 = vld [vmem:[%s10] sm:$0x1]
    %v2579 = vpack.c.bf16 %v2415, %v2412
    %v2580 = vpack.c.bf16 %v2423, %v2420
    %v2581 = vpack.c.bf16 %v2431, %v2428
    %v2582 = vpack.c.bf16 %v2439, %v2436
    %v2583 = vpack.c.bf16 %v2447, %v2444
    %v2584 = vpack.c.bf16 %v2455, %v2452
    %v2585 = vpack.c.bf16 %v2463, %v2460
    %v2586 = vpack.c.bf16 %v2471, %v2468
    %v2587 = vpack.c.bf16 %v2479, %v2476
    %v2588 = vpack.c.bf16 %v2487, %v2484
    %v2589 = vpack.c.bf16 %v2495, %v2492
    %v2590 = vpack.c.bf16 %v2503, %v2500
    %v2591 = vpack.c.bf16 %v2511, %v2508
    %v2592 = vpack.c.bf16 %v2519, %v2516
    %v2593 = vpack.c.bf16 %v2527, %v2524
    %v2594 = vpack.c.bf16 %v2535, %v2532
    %v2595 = vpack.c.bf16 %v2543, %v2540
    %v2596 = vpack.c.bf16 %v2551, %v2548
    %v2597 = vpack.c.bf16 %v2559, %v2556
    %v2599 = vlaneseq
    %v2600 = vshrl.u32 %v2599, 7
    %v2601 = vsub.s32 0, %v2600
    %v2602 = vrot.slane %v2578, %v2601
    %v2620 = vunpack.c.l.b16 %v2562
    %v2621 = vunpack.c.l.b16 %v2563
    %v2622 = vunpack.c.l.b16 %v2564
    %v2623 = vunpack.c.l.b16 %v2565
    %v2624 = vunpack.c.l.b16 %v2566
    %v2625 = vunpack.c.l.b16 %v2567
    %v2626 = vunpack.c.l.b16 %v2568
    %v2627 = vunpack.c.l.b16 %v2569
    %v2628 = vunpack.c.l.b16 %v2570
    %v2629 = vunpack.c.l.b16 %v2571
    %v2630 = vunpack.c.l.b16 %v2572
    %v2631 = vunpack.c.l.b16 %v2573
    %v2632 = vunpack.c.l.b16 %v2574
    %v2633 = vunpack.c.l.b16 %v2575
    %v2634 = vunpack.c.l.b16 %v2576
    %v2635 = vunpack.c.l.b16 %v2577
    %v2636 = vpack.c.b16 %v2621, %v2620
    %v2637 = vpack.c.b16 %v2623, %v2622
    %v2638 = vpack.c.b16 %v2625, %v2624
    %v2639 = vpack.c.b16 %v2627, %v2626
    %v2640 = vpack.c.b16 %v2629, %v2628
    %v2641 = vpack.c.b16 %v2631, %v2630
    %v2642 = vpack.c.b16 %v2633, %v2632
    %v2643 = vpack.c.b16 %v2635, %v2634
    %2652 = vmatprep.subr.bf16.mxu0 0
    %2653 = vmatpush1.bf16.msra.mxu0 %v2636
    %2654 = vmatprep.subr.bf16.mxu0 0
    %2655 = vmatpush1.bf16.msra.mxu0 %v2637
    %2656 = vmatprep.subr.bf16.mxu0 0
    %2657 = vmatpush1.bf16.msra.mxu0 %v2638
    %2658 = vmatprep.subr.bf16.mxu0 0
    %2659 = vmatpush1.bf16.msra.mxu0 %v2639
    %2660 = vmatprep.subr.bf16.mxu0 0
    %2661 = vmatpush1.bf16.msra.mxu0 %v2640
    %2662 = vmatprep.subr.bf16.mxu0 0
    %2663 = vmatpush1.bf16.msra.mxu0 %v2641
    %2664 = vmatprep.subr.bf16.mxu0 0
    %2665 = vmatpush1.bf16.msra.mxu0 %v2642
    %2666 = vmatprep.subr.bf16.mxu0 0
    %2667 = vmatpush1.bf16.msra.mxu0 %v2643
    %2668 = vmatprep.subr.bf16.mxu0 0
    %2669 = vmatpush1.bf16.msra.mxu0 0
    %2670 = vmatprep.subr.bf16.mxu0 0
    %2671 = vmatpush1.bf16.msra.mxu0 0
    %2672 = vmatprep.subr.bf16.mxu0 0
    %2673 = vmatpush1.bf16.msra.mxu0 0
    %2674 = vmatprep.subr.bf16.mxu0 0
    %2675 = vmatpush1.bf16.msra.mxu0 0
    %2676 = vmatprep.subr.bf16.mxu0 0
    %2677 = vmatpush1.bf16.msra.mxu0 0
    %2678 = vmatprep.subr.bf16.mxu0 0
    %2679 = vmatpush1.bf16.msra.mxu0 0
    %2680 = vmatprep.subr.bf16.mxu0 0
    %2681 = vmatpush1.bf16.msra.mxu0 0
    %2682 = vmatprep.subr.bf16.mxu0 0
    %2683 = vmatpush1.bf16.msra.mxu0 0
    %2684 = vmatprep.mubr.bf16.mxu0 0
    %2685 = vmatmul.mubr.bf16.gmra.mrb[0].mxu0 %v2579
    %v2686 = vpop.f32.mrb[0].mxu0
    %v2687 = vadd.f32 %v2602, %v2686
    %v2688 = vpop.f32.mrb[0].mxu0
    %v2689 = vpop.f32.mrb[0].mxu0
    %v2690 = vadd.f32 %v2602, %v2689
    %v2691 = vpop.f32.mrb[0].mxu0
    %2692 = vmatprep.mubr.bf16.mxu0 0
    %2693 = vmatmul.mubr.bf16.gmra.mrb[0].mxu0 %v2580
    %v2694 = vpop.f32.mrb[0].mxu0
    %v2695 = vadd.f32 %v2602, %v2694
    %v2696 = vpop.f32.mrb[0].mxu0
    %v2697 = vpop.f32.mrb[0].mxu0
    %v2698 = vadd.f32 %v2602, %v2697
    %v2699 = vpop.f32.mrb[0].mxu0
    %2700 = vmatprep.mubr.bf16.mxu0 0
    %2701 = vmatmul.mubr.bf16.gmra.mrb[0].mxu0 %v2581
    %v2702 = vpop.f32.mrb[0].mxu0
    %v2703 = vadd.f32 %v2602, %v2702
    %v2704 = vpop.f32.mrb[0].mxu0
    %v2705 = vpop.f32.mrb[0].mxu0
    %v2706 = vadd.f32 %v2602, %v2705
    %v2707 = vpop.f32.mrb[0].mxu0
    %2708 = vmatprep.mubr.bf16.mxu0 0
    %2709 = vmatmul.mubr.bf16.gmra.mrb[0].mxu0 %v2582
    %v2710 = vpop.f32.mrb[0].mxu0
    %v2711 = vadd.f32 %v2602, %v2710
    %v2712 = vpop.f32.mrb[0].mxu0
    %v2713 = vpop.f32.mrb[0].mxu0
    %v2714 = vadd.f32 %v2602, %v2713
    %v2715 = vpop.f32.mrb[0].mxu0
    %2716 = vmatprep.mubr.bf16.mxu0 0
    %2717 = vmatmul.mubr.bf16.gmra.mrb[0].mxu0 %v2583
    %v2718 = vpop.f32.mrb[0].mxu0
    %v2719 = vadd.f32 %v2602, %v2718
    %v2720 = vpop.f32.mrb[0].mxu0
    %v2721 = vpop.f32.mrb[0].mxu0
    %v2722 = vadd.f32 %v2602, %v2721
    %v2723 = vpop.f32.mrb[0].mxu0
    %2724 = vmatprep.mubr.bf16.mxu0 0
    %2725 = vmatmul.mubr.bf16.gmra.mrb[0].mxu0 %v2584
    %v2726 = vpop.f32.mrb[0].mxu0
    %v2727 = vadd.f32 %v2602, %v2726
    %v2728 = vpop.f32.mrb[0].mxu0
    %v2729 = vpop.f32.mrb[0].mxu0
    %v2730 = vadd.f32 %v2602, %v2729
    %v2731 = vpop.f32.mrb[0].mxu0
    %2732 = vmatprep.mubr.bf16.mxu0 0
    %2733 = vmatmul.mubr.bf16.gmra.mrb[0].mxu0 %v2585
    %v2734 = vpop.f32.mrb[0].mxu0
    %v2735 = vadd.f32 %v2602, %v2734
    %v2736 = vpop.f32.mrb[0].mxu0
    %v2737 = vpop.f32.mrb[0].mxu0
    %v2738 = vadd.f32 %v2602, %v2737
    %v2739 = vpop.f32.mrb[0].mxu0
    %2740 = vmatprep.mubr.bf16.mxu0 0
    %2741 = vmatmul.mubr.bf16.gmra.mrb[0].mxu0 %v2586
    %v2742 = vpop.f32.mrb[0].mxu0
    %v2743 = vadd.f32 %v2602, %v2742
    %v2744 = vpop.f32.mrb[0].mxu0
    %v2745 = vpop.f32.mrb[0].mxu0
    %v2746 = vadd.f32 %v2602, %v2745
    %v2747 = vpop.f32.mrb[0].mxu0
    %2748 = vmatprep.mubr.bf16.mxu0 0
    %2749 = vmatmul.mubr.bf16.gmra.mrb[0].mxu0 %v2587
    %v2750 = vpop.f32.mrb[0].mxu0
    %v2751 = vadd.f32 %v2602, %v2750
    %v2752 = vpop.f32.mrb[0].mxu0
    %v2753 = vpop.f32.mrb[0].mxu0
    %v2754 = vadd.f32 %v2602, %v2753
    %v2755 = vpop.f32.mrb[0].mxu0
    %2756 = vmatprep.mubr.bf16.mxu0 0
    %2757 = vmatmul.mubr.bf16.gmra.mrb[0].mxu0 %v2588
    %v2758 = vpop.f32.mrb[0].mxu0
    %v2759 = vadd.f32 %v2602, %v2758
    %v2760 = vpop.f32.mrb[0].mxu0
    %v2761 = vpop.f32.mrb[0].mxu0
    %v2762 = vadd.f32 %v2602, %v2761
    %v2763 = vpop.f32.mrb[0].mxu0
    %2764 = vmatprep.mubr.bf16.mxu0 0
    %2765 = vmatmul.mubr.bf16.gmra.mrb[0].mxu0 %v2589
    %v2766 = vpop.f32.mrb[0].mxu0
    %v2767 = vadd.f32 %v2602, %v2766
    %v2768 = vpop.f32.mrb[0].mxu0
    %v2769 = vpop.f32.mrb[0].mxu0
    %v2770 = vadd.f32 %v2602, %v2769
    %v2771 = vpop.f32.mrb[0].mxu0
    %2772 = vmatprep.mubr.bf16.mxu0 0
    %2773 = vmatmul.mubr.bf16.gmra.mrb[0].mxu0 %v2590
    %v2774 = vpop.f32.mrb[0].mxu0
    %v2775 = vadd.f32 %v2602, %v2774
    %v2776 = vpop.f32.mrb[0].mxu0
    %v2777 = vpop.f32.mrb[0].mxu0
    %v2778 = vadd.f32 %v2602, %v2777
    %v2779 = vpop.f32.mrb[0].mxu0
    %2780 = vmatprep.mubr.bf16.mxu0 0
    %2781 = vmatmul.mubr.bf16.gmra.mrb[0].mxu0 %v2591
    %v2782 = vpop.f32.mrb[0].mxu0
    %v2783 = vadd.f32 %v2602, %v2782
    %v2784 = vpop.f32.mrb[0].mxu0
    %v2785 = vpop.f32.mrb[0].mxu0
    %v2786 = vadd.f32 %v2602, %v2785
    %v2787 = vpop.f32.mrb[0].mxu0
    %2788 = vmatprep.mubr.bf16.mxu0 0
    %2789 = vmatmul.mubr.bf16.gmra.mrb[0].mxu0 %v2592
    %v2790 = vpop.f32.mrb[0].mxu0
    %v2791 = vadd.f32 %v2602, %v2790
    %v2792 = vpop.f32.mrb[0].mxu0
    %v2793 = vpop.f32.mrb[0].mxu0
    %v2794 = vadd.f32 %v2602, %v2793
    %v2795 = vpop.f32.mrb[0].mxu0
    %2796 = vmatprep.mubr.bf16.mxu0 0
    %2797 = vmatmul.mubr.bf16.gmra.mrb[0].mxu0 %v2593
    %v2798 = vpop.f32.mrb[0].mxu0
    %v2799 = vadd.f32 %v2602, %v2798
    %v2800 = vpop.f32.mrb[0].mxu0
    %v2801 = vpop.f32.mrb[0].mxu0
    %v2802 = vadd.f32 %v2602, %v2801
    %v2803 = vpop.f32.mrb[0].mxu0
    %2804 = vmatprep.mubr.bf16.mxu0 0
    %2805 = vmatmul.mubr.bf16.gmra.mrb[0].mxu0 %v2594
    %v2806 = vpop.f32.mrb[0].mxu0
    %v2807 = vadd.f32 %v2602, %v2806
    %v2808 = vpop.f32.mrb[0].mxu0
    %v2809 = vpop.f32.mrb[0].mxu0
    %v2810 = vadd.f32 %v2602, %v2809
    %v2811 = vpop.f32.mrb[0].mxu0
    %2812 = vmatprep.mubr.bf16.mxu0 0
    %2813 = vmatmul.mubr.bf16.gmra.mrb[0].mxu0 %v2595
    %v2814 = vpop.f32.mrb[0].mxu0
    %v2815 = vadd.f32 %v2602, %v2814
    %v2816 = vpop.f32.mrb[0].mxu0
    %v2817 = vpop.f32.mrb[0].mxu0
    %v2818 = vadd.f32 %v2602, %v2817
    %v2819 = vpop.f32.mrb[0].mxu0
    %2820 = vmatprep.mubr.bf16.mxu0 0
    %2821 = vmatmul.mubr.bf16.gmra.mrb[0].mxu0 %v2596
    %v2822 = vpop.f32.mrb[0].mxu0
    %v2823 = vadd.f32 %v2602, %v2822
    %v2824 = vpop.f32.mrb[0].mxu0
    %v2825 = vpop.f32.mrb[0].mxu0
    %v2826 = vadd.f32 %v2602, %v2825
    %v2827 = vpop.f32.mrb[0].mxu0
    %2828 = vmatprep.mubr.bf16.mxu0 0
    %2829 = vmatmul.mubr.bf16.gmra.mrb[0].mxu0 %v2597
    %v2830 = vpop.f32.mrb[0].mxu0
    %v2831 = vadd.f32 %v2602, %v2830
    %v2832 = vpop.f32.mrb[0].mxu0
    %v2833 = vpop.f32.mrb[0].mxu0
    %v2834 = vadd.f32 %v2602, %v2833
    %v2835 = vpop.f32.mrb[0].mxu0
    %2836 = vdwg.mxu0
    %v2837 = vmax.f32 %v2687, 0.0
    %v2838 = vmax.f32 %v2690, 0.0
    %v2839 = vmax.f32 %v2695, 0.0
    %v2840 = vmax.f32 %v2698, 0.0
    %v2841 = vmax.f32 %v2703, 0.0
    %v2842 = vmax.f32 %v2706, 0.0
    %v2843 = vmax.f32 %v2711, 0.0
    %v2844 = vmax.f32 %v2714, 0.0
    %v2845 = vmax.f32 %v2719, 0.0
    %v2846 = vmax.f32 %v2722, 0.0
    %v2847 = vmax.f32 %v2727, 0.0
    %v2848 = vmax.f32 %v2730, 0.0
    %v2849 = vmax.f32 %v2735, 0.0
    %v2850 = vmax.f32 %v2738, 0.0
    %v2851 = vmax.f32 %v2743, 0.0
    %v2852 = vmax.f32 %v2746, 0.0
    %v2853 = vmax.f32 %v2751, 0.0
    %v2854 = vmax.f32 %v2754, 0.0
    %v2855 = vmax.f32 %v2759, 0.0
    %v2856 = vmax.f32 %v2762, 0.0
    %v2857 = vmax.f32 %v2767, 0.0
    %v2858 = vmax.f32 %v2770, 0.0
    %v2859 = vmax.f32 %v2775, 0.0
    %v2860 = vmax.f32 %v2778, 0.0
    %v2861 = vmax.f32 %v2783, 0.0
    %v2862 = vmax.f32 %v2786, 0.0
    %v2863 = vmax.f32 %v2791, 0.0
    %v2864 = vmax.f32 %v2794, 0.0
    %v2865 = vmax.f32 %v2799, 0.0
    %v2866 = vmax.f32 %v2802, 0.0
    %v2867 = vmax.f32 %v2807, 0.0
    %v2868 = vmax.f32 %v2810, 0.0
    %v2869 = vmax.f32 %v2815, 0.0
    %v2870 = vmax.f32 %v2818, 0.0
    %v2871 = vmax.f32 %v2823, 0.0
    %v2872 = vmax.f32 %v2826, 0.0
    %v2873 = vmax.f32 %v2831, 0.0
    %v2874 = vmax.f32 %v2834, 0.0
    %v2875 = vld [vmem:[%s11] sm:$0xf]
    %v2876 = vld [vmem:[%s11 + $0x4] sm:$0xf]
    %v2877 = vld [vmem:[%s11 + $0x8] sm:$0xf]
    %v2878 = vld [vmem:[%s11 + $0xc] sm:$0xf]
    %v2879 = vld [vmem:[%s11 + $0x10] sm:$0xf]
    %v2880 = vld [vmem:[%s11 + $0x14] sm:$0xf]
    %v2881 = vld [vmem:[%s11 + $0x18] sm:$0xf]
    %v2882 = vld [vmem:[%s11 + $0x1c] sm:$0xf]
    %v2883 = vld [vmem:[%s11 + $0x20] sm:$0xf]
    %v2884 = vld [vmem:[%s11 + $0x24] sm:$0xf]
    %v2885 = vld [vmem:[%s11 + $0x28] sm:$0xf]
    %v2886 = vld [vmem:[%s11 + $0x2c] sm:$0xf]
    %v2887 = vld [vmem:[%s11 + $0x30] sm:$0xf]
    %v2888 = vld [vmem:[%s11 + $0x34] sm:$0xf]
    %v2889 = vld [vmem:[%s11 + $0x38] sm:$0xf]
    %v2890 = vld [vmem:[%s11 + $0x3c] sm:$0xf]
    %v2891 = vld [vmem:[%s12] sm:$0x1]
    %v2892 = vpack.c.bf16 %v2838, %v2837
    %v2893 = vpack.c.bf16 %v2840, %v2839
    %v2894 = vpack.c.bf16 %v2842, %v2841
    %v2895 = vpack.c.bf16 %v2844, %v2843
    %v2896 = vpack.c.bf16 %v2846, %v2845
    %v2897 = vpack.c.bf16 %v2848, %v2847
    %v2898 = vpack.c.bf16 %v2850, %v2849
    %v2899 = vpack.c.bf16 %v2852, %v2851
    %v2900 = vpack.c.bf16 %v2854, %v2853
    %v2901 = vpack.c.bf16 %v2856, %v2855
    %v2902 = vpack.c.bf16 %v2858, %v2857
    %v2903 = vpack.c.bf16 %v2860, %v2859
    %v2904 = vpack.c.bf16 %v2862, %v2861
    %v2905 = vpack.c.bf16 %v2864, %v2863
    %v2906 = vpack.c.bf16 %v2866, %v2865
    %v2907 = vpack.c.bf16 %v2868, %v2867
    %v2908 = vpack.c.bf16 %v2870, %v2869
    %v2909 = vpack.c.bf16 %v2872, %v2871
    %v2910 = vpack.c.bf16 %v2874, %v2873
    %v2912 = vlaneseq
    %v2913 = vshrl.u32 %v2912, 7
    %v2914 = vsub.s32 0, %v2913
    %v2915 = vrot.slane %v2891, %v2914
    %v2933 = vunpack.c.l.b16 %v2875
    %v2934 = vunpack.c.l.b16 %v2876
    %v2935 = vunpack.c.l.b16 %v2877
    %v2936 = vunpack.c.l.b16 %v2878
    %v2937 = vunpack.c.l.b16 %v2879
    %v2938 = vunpack.c.l.b16 %v2880
    %v2939 = vunpack.c.l.b16 %v2881
    %v2940 = vunpack.c.l.b16 %v2882
    %v2941 = vunpack.c.l.b16 %v2883
    %v2942 = vunpack.c.l.b16 %v2884
    %v2943 = vunpack.c.l.b16 %v2885
    %v2944 = vunpack.c.l.b16 %v2886
    %v2945 = vunpack.c.l.b16 %v2887
    %v2946 = vunpack.c.l.b16 %v2888
    %v2947 = vunpack.c.l.b16 %v2889
    %v2948 = vunpack.c.l.b16 %v2890
    %v2949 = vpack.c.b16 %v2934, %v2933
    %v2950 = vpack.c.b16 %v2936, %v2935
    %v2951 = vpack.c.b16 %v2938, %v2937
    %v2952 = vpack.c.b16 %v2940, %v2939
    %v2953 = vpack.c.b16 %v2942, %v2941
    %v2954 = vpack.c.b16 %v2944, %v2943
    %v2955 = vpack.c.b16 %v2946, %v2945
    %v2956 = vpack.c.b16 %v2948, %v2947
    %2965 = vmatprep.subr.bf16.mxu0 0
    %2966 = vmatpush1.bf16.msra.mxu0 %v2949
    %2967 = vmatprep.subr.bf16.mxu0 0
    %2968 = vmatpush1.bf16.msra.mxu0 %v2950
    %2969 = vmatprep.subr.bf16.mxu0 0
    %2970 = vmatpush1.bf16.msra.mxu0 %v2951
    %2971 = vmatprep.subr.bf16.mxu0 0
    %2972 = vmatpush1.bf16.msra.mxu0 %v2952
    %2973 = vmatprep.subr.bf16.mxu0 0
    %2974 = vmatpush1.bf16.msra.mxu0 %v2953
    %2975 = vmatprep.subr.bf16.mxu0 0
    %2976 = vmatpush1.bf16.msra.mxu0 %v2954
    %2977 = vmatprep.subr.bf16.mxu0 0
    %2978 = vmatpush1.bf16.msra.mxu0 %v2955
    %2979 = vmatprep.subr.bf16.mxu0 0
    %2980 = vmatpush1.bf16.msra.mxu0 %v2956
    %2981 = vmatprep.subr.bf16.mxu0 0
    %2982 = vmatpush1.bf16.msra.mxu0 0
    %2983 = vmatprep.subr.bf16.mxu0 0
    %2984 = vmatpush1.bf16.msra.mxu0 0
    %2985 = vmatprep.subr.bf16.mxu0 0
    %2986 = vmatpush1.bf16.msra.mxu0 0
    %2987 = vmatprep.subr.bf16.mxu0 0
    %2988 = vmatpush1.bf16.msra.mxu0 0
    %2989 = vmatprep.subr.bf16.mxu0 0
    %2990 = vmatpush1.bf16.msra.mxu0 0
    %2991 = vmatprep.subr.bf16.mxu0 0
    %2992 = vmatpush1.bf16.msra.mxu0 0
    %2993 = vmatprep.subr.bf16.mxu0 0
    %2994 = vmatpush1.bf16.msra.mxu0 0
    %2995 = vmatprep.subr.bf16.mxu0 0
    %2996 = vmatpush1.bf16.msra.mxu0 0
    %2997 = vmatprep.mubr.bf16.mxu0 0
    %2998 = vmatmul.mubr.bf16.gmra.mrb[0].mxu0 %v2892
    %v2999 = vpop.f32.mrb[0].mxu0
    %v3000 = vadd.f32 %v2915, %v2999
    %v3001 = vpop.f32.mrb[0].mxu0
    %v3002 = vpop.f32.mrb[0].mxu0
    %v3003 = vadd.f32 %v2915, %v3002
    %v3004 = vpop.f32.mrb[0].mxu0
    %3005 = vmatprep.mubr.bf16.mxu0 0
    %3006 = vmatmul.mubr.bf16.gmra.mrb[0].mxu0 %v2893
    %v3007 = vpop.f32.mrb[0].mxu0
    %v3008 = vadd.f32 %v2915, %v3007
    %v3009 = vpop.f32.mrb[0].mxu0
    %v3010 = vpop.f32.mrb[0].mxu0
    %v3011 = vadd.f32 %v2915, %v3010
    %v3012 = vpop.f32.mrb[0].mxu0
    %3013 = vmatprep.mubr.bf16.mxu0 0
    %3014 = vmatmul.mubr.bf16.gmra.mrb[0].mxu0 %v2894
    %v3015 = vpop.f32.mrb[0].mxu0
    %v3016 = vadd.f32 %v2915, %v3015
    %v3017 = vpop.f32.mrb[0].mxu0
    %v3018 = vpop.f32.mrb[0].mxu0
    %v3019 = vadd.f32 %v2915, %v3018
    %v3020 = vpop.f32.mrb[0].mxu0
    %3021 = vmatprep.mubr.bf16.mxu0 0
    %3022 = vmatmul.mubr.bf16.gmra.mrb[0].mxu0 %v2895
    %v3023 = vpop.f32.mrb[0].mxu0
    %v3024 = vadd.f32 %v2915, %v3023
    %v3025 = vpop.f32.mrb[0].mxu0
    %v3026 = vpop.f32.mrb[0].mxu0
    %v3027 = vadd.f32 %v2915, %v3026
    %v3028 = vpop.f32.mrb[0].mxu0
    %3029 = vmatprep.mubr.bf16.mxu0 0
    %3030 = vmatmul.mubr.bf16.gmra.mrb[0].mxu0 %v2896
    %v3031 = vpop.f32.mrb[0].mxu0
    %v3032 = vadd.f32 %v2915, %v3031
    %v3033 = vpop.f32.mrb[0].mxu0
    %v3034 = vpop.f32.mrb[0].mxu0
    %v3035 = vadd.f32 %v2915, %v3034
    %v3036 = vpop.f32.mrb[0].mxu0
    %3037 = vmatprep.mubr.bf16.mxu0 0
    %3038 = vmatmul.mubr.bf16.gmra.mrb[0].mxu0 %v2897
    %v3039 = vpop.f32.mrb[0].mxu0
    %v3040 = vadd.f32 %v2915, %v3039
    %v3041 = vpop.f32.mrb[0].mxu0
    %v3042 = vpop.f32.mrb[0].mxu0
    %v3043 = vadd.f32 %v2915, %v3042
    %v3044 = vpop.f32.mrb[0].mxu0
    %3045 = vmatprep.mubr.bf16.mxu0 0
    %3046 = vmatmul.mubr.bf16.gmra.mrb[0].mxu0 %v2898
    %v3047 = vpop.f32.mrb[0].mxu0
    %v3048 = vadd.f32 %v2915, %v3047
    %v3049 = vpop.f32.mrb[0].mxu0
    %v3050 = vpop.f32.mrb[0].mxu0
    %v3051 = vadd.f32 %v2915, %v3050
    %v3052 = vpop.f32.mrb[0].mxu0
    %3053 = vmatprep.mubr.bf16.mxu0 0
    %3054 = vmatmul.mubr.bf16.gmra.mrb[0].mxu0 %v2899
    %v3055 = vpop.f32.mrb[0].mxu0
    %v3056 = vadd.f32 %v2915, %v3055
    %v3057 = vpop.f32.mrb[0].mxu0
    %v3058 = vpop.f32.mrb[0].mxu0
    %v3059 = vadd.f32 %v2915, %v3058
    %v3060 = vpop.f32.mrb[0].mxu0
    %3061 = vmatprep.mubr.bf16.mxu0 0
    %3062 = vmatmul.mubr.bf16.gmra.mrb[0].mxu0 %v2900
    %v3063 = vpop.f32.mrb[0].mxu0
    %v3064 = vadd.f32 %v2915, %v3063
    %v3065 = vpop.f32.mrb[0].mxu0
    %v3066 = vpop.f32.mrb[0].mxu0
    %v3067 = vadd.f32 %v2915, %v3066
    %v3068 = vpop.f32.mrb[0].mxu0
    %3069 = vmatprep.mubr.bf16.mxu0 0
    %3070 = vmatmul.mubr.bf16.gmra.mrb[0].mxu0 %v2901
    %v3071 = vpop.f32.mrb[0].mxu0
    %v3072 = vadd.f32 %v2915, %v3071
    %v3073 = vpop.f32.mrb[0].mxu0
    %v3074 = vpop.f32.mrb[0].mxu0
    %v3075 = vadd.f32 %v2915, %v3074
    %v3076 = vpop.f32.mrb[0].mxu0
    %3077 = vmatprep.mubr.bf16.mxu0 0
    %3078 = vmatmul.mubr.bf16.gmra.mrb[0].mxu0 %v2902
    %v3079 = vpop.f32.mrb[0].mxu0
    %v3080 = vadd.f32 %v2915, %v3079
    %v3081 = vpop.f32.mrb[0].mxu0
    %v3082 = vpop.f32.mrb[0].mxu0
    %v3083 = vadd.f32 %v2915, %v3082
    %v3084 = vpop.f32.mrb[0].mxu0
    %3085 = vmatprep.mubr.bf16.mxu0 0
    %3086 = vmatmul.mubr.bf16.gmra.mrb[0].mxu0 %v2903
    %v3087 = vpop.f32.mrb[0].mxu0
    %v3088 = vadd.f32 %v2915, %v3087
    %v3089 = vpop.f32.mrb[0].mxu0
    %v3090 = vpop.f32.mrb[0].mxu0
    %v3091 = vadd.f32 %v2915, %v3090
    %v3092 = vpop.f32.mrb[0].mxu0
    %3093 = vmatprep.mubr.bf16.mxu0 0
    %3094 = vmatmul.mubr.bf16.gmra.mrb[0].mxu0 %v2904
    %v3095 = vpop.f32.mrb[0].mxu0
    %v3096 = vadd.f32 %v2915, %v3095
    %v3097 = vpop.f32.mrb[0].mxu0
    %v3098 = vpop.f32.mrb[0].mxu0
    %v3099 = vadd.f32 %v2915, %v3098
    %v3100 = vpop.f32.mrb[0].mxu0
    %3101 = vmatprep.mubr.bf16.mxu0 0
    %3102 = vmatmul.mubr.bf16.gmra.mrb[0].mxu0 %v2905
    %v3103 = vpop.f32.mrb[0].mxu0
    %v3104 = vadd.f32 %v2915, %v3103
    %v3105 = vpop.f32.mrb[0].mxu0
    %v3106 = vpop.f32.mrb[0].mxu0
    %v3107 = vadd.f32 %v2915, %v3106
    %v3108 = vpop.f32.mrb[0].mxu0
    %3109 = vmatprep.mubr.bf16.mxu0 0
    %3110 = vmatmul.mubr.bf16.gmra.mrb[0].mxu0 %v2906
    %v3111 = vpop.f32.mrb[0].mxu0
    %v3112 = vadd.f32 %v2915, %v3111
    %v3113 = vpop.f32.mrb[0].mxu0
    %v3114 = vpop.f32.mrb[0].mxu0
    %v3115 = vadd.f32 %v2915, %v3114
    %v3116 = vpop.f32.mrb[0].mxu0
    %3117 = vmatprep.mubr.bf16.mxu0 0
    %3118 = vmatmul.mubr.bf16.gmra.mrb[0].mxu0 %v2907
    %v3119 = vpop.f32.mrb[0].mxu0
    %v3120 = vadd.f32 %v2915, %v3119
    %v3121 = vpop.f32.mrb[0].mxu0
    %v3122 = vpop.f32.mrb[0].mxu0
    %v3123 = vadd.f32 %v2915, %v3122
    %v3124 = vpop.f32.mrb[0].mxu0
    %3125 = vmatprep.mubr.bf16.mxu0 0
    %3126 = vmatmul.mubr.bf16.gmra.mrb[0].mxu0 %v2908
    %v3127 = vpop.f32.mrb[0].mxu0
    %v3128 = vadd.f32 %v2915, %v3127
    %v3129 = vpop.f32.mrb[0].mxu0
    %v3130 = vpop.f32.mrb[0].mxu0
    %v3131 = vadd.f32 %v2915, %v3130
    %v3132 = vpop.f32.mrb[0].mxu0
    %3133 = vmatprep.mubr.bf16.mxu0 0
    %3134 = vmatmul.mubr.bf16.gmra.mrb[0].mxu0 %v2909
    %v3135 = vpop.f32.mrb[0].mxu0
    %v3136 = vadd.f32 %v2915, %v3135
    %v3137 = vpop.f32.mrb[0].mxu0
    %v3138 = vpop.f32.mrb[0].mxu0
    %v3139 = vadd.f32 %v2915, %v3138
    %v3140 = vpop.f32.mrb[0].mxu0
    %3141 = vmatprep.mubr.bf16.mxu0 0
    %3142 = vmatmul.mubr.bf16.gmra.mrb[0].mxu0 %v2910
    %v3143 = vpop.f32.mrb[0].mxu0
    %v3144 = vadd.f32 %v2915, %v3143
    %v3145 = vpop.f32.mrb[0].mxu0
    %v3146 = vpop.f32.mrb[0].mxu0
    %v3147 = vadd.f32 %v2915, %v3146
    %v3148 = vpop.f32.mrb[0].mxu0
    %3149 = vdwg.mxu0
    %v3150 = vmax.f32 %v3000, 0.0
    %v3151 = vmax.f32 %v3003, 0.0
    %v3152 = vmax.f32 %v3008, 0.0
    %v3153 = vmax.f32 %v3011, 0.0
    %v3154 = vmax.f32 %v3016, 0.0
    %v3155 = vmax.f32 %v3019, 0.0
    %v3156 = vmax.f32 %v3024, 0.0
    %v3157 = vmax.f32 %v3027, 0.0
    %v3158 = vmax.f32 %v3032, 0.0
    %v3159 = vmax.f32 %v3035, 0.0
    %v3160 = vmax.f32 %v3040, 0.0
    %v3161 = vmax.f32 %v3043, 0.0
    %v3162 = vmax.f32 %v3048, 0.0
    %v3163 = vmax.f32 %v3051, 0.0
    %v3164 = vmax.f32 %v3056, 0.0
    %v3165 = vmax.f32 %v3059, 0.0
    %v3166 = vmax.f32 %v3064, 0.0
    %v3167 = vmax.f32 %v3067, 0.0
    %v3168 = vmax.f32 %v3072, 0.0
    %v3169 = vmax.f32 %v3075, 0.0
    %v3170 = vmax.f32 %v3080, 0.0
    %v3171 = vmax.f32 %v3083, 0.0
    %v3172 = vmax.f32 %v3088, 0.0
    %v3173 = vmax.f32 %v3091, 0.0
    %v3174 = vmax.f32 %v3096, 0.0
    %v3175 = vmax.f32 %v3099, 0.0
    %v3176 = vmax.f32 %v3104, 0.0
    %v3177 = vmax.f32 %v3107, 0.0
    %v3178 = vmax.f32 %v3112, 0.0
    %v3179 = vmax.f32 %v3115, 0.0
    %v3180 = vmax.f32 %v3120, 0.0
    %v3181 = vmax.f32 %v3123, 0.0
    %v3182 = vmax.f32 %v3128, 0.0
    %v3183 = vmax.f32 %v3131, 0.0
    %v3184 = vmax.f32 %v3136, 0.0
    %v3185 = vmax.f32 %v3139, 0.0
    %v3186 = vmax.f32 %v3144, 0.0
    %v3187 = vmax.f32 %v3147, 0.0
    %v3188 = vld [vmem:[%s13] sm:$0xff]
    %v3189 = vld [vmem:[%s13 + $0x8] sm:$0xff]
    %v3190 = vld [vmem:[%s13 + $0x10] sm:$0xff]
    %v3191 = vld [vmem:[%s13 + $0x18] sm:$0xff]
    %v3192 = vld [vmem:[%s13 + $0x20] sm:$0xff]
    %v3193 = vld [vmem:[%s13 + $0x28] sm:$0xff]
    %v3194 = vld [vmem:[%s13 + $0x30] sm:$0xff]
    %v3195 = vld [vmem:[%s13 + $0x38] sm:$0xff]
    %v3196 = vld [vmem:[%s13 + $0x40] sm:$0xff]
    %v3197 = vld [vmem:[%s13 + $0x48] sm:$0xff]
    %v3198 = vld [vmem:[%s13 + $0x50] sm:$0xff]
    %v3199 = vld [vmem:[%s13 + $0x58] sm:$0xff]
    %v3200 = vld [vmem:[%s13 + $0x60] sm:$0xff]
    %v3201 = vld [vmem:[%s13 + $0x68] sm:$0xff]
    %v3202 = vld [vmem:[%s13 + $0x70] sm:$0xff]
    %v3203 = vld [vmem:[%s13 + $0x78] sm:$0xff]
    %v3204 = vld [vmem:[%s14] sm:$0x3]
    %v3205 = vpack.c.bf16 %v3151, %v3150
    %v3206 = vpack.c.bf16 %v3153, %v3152
    %v3207 = vpack.c.bf16 %v3155, %v3154
    %v3208 = vpack.c.bf16 %v3157, %v3156
    %v3209 = vpack.c.bf16 %v3159, %v3158
    %v3210 = vpack.c.bf16 %v3161, %v3160
    %v3211 = vpack.c.bf16 %v3163, %v3162
    %v3212 = vpack.c.bf16 %v3165, %v3164
    %v3213 = vpack.c.bf16 %v3167, %v3166
    %v3214 = vpack.c.bf16 %v3169, %v3168
    %v3215 = vpack.c.bf16 %v3171, %v3170
    %v3216 = vpack.c.bf16 %v3173, %v3172
    %v3217 = vpack.c.bf16 %v3175, %v3174
    %v3218 = vpack.c.bf16 %v3177, %v3176
    %v3219 = vpack.c.bf16 %v3179, %v3178
    %v3220 = vpack.c.bf16 %v3181, %v3180
    %v3221 = vpack.c.bf16 %v3183, %v3182
    %v3222 = vpack.c.bf16 %v3185, %v3184
    %v3223 = vpack.c.bf16 %v3187, %v3186
    %v3225 = vlaneseq
    %v3226 = vshrl.u32 %v3225, 7
    %v3227 = vsub.s32 0, %v3226
    %v3228 = vrot.slane %v3204, %v3227
    %v3229 = vlaneseq
    %v3230 = vshrl.u32 %v3229, 7
    %v3231 = vsub.s32 1, %v3230
    %v3232 = vrot.slane %v3204, %v3231
    %v3251 = vunpack.c.l.b16 %v3188
    %v3252 = vunpack.c.h.b16 %v3188
    %v3253 = vunpack.c.l.b16 %v3189
    %v3254 = vunpack.c.h.b16 %v3189
    %v3255 = vunpack.c.l.b16 %v3190
    %v3256 = vunpack.c.h.b16 %v3190
    %v3257 = vunpack.c.l.b16 %v3191
    %v3258 = vunpack.c.h.b16 %v3191
    %v3259 = vunpack.c.l.b16 %v3192
    %v3260 = vunpack.c.h.b16 %v3192
    %v3261 = vunpack.c.l.b16 %v3193
    %v3262 = vunpack.c.h.b16 %v3193
    %v3263 = vunpack.c.l.b16 %v3194
    %v3264 = vunpack.c.h.b16 %v3194
    %v3265 = vunpack.c.l.b16 %v3195
    %v3266 = vunpack.c.h.b16 %v3195
    %v3267 = vunpack.c.l.b16 %v3196
    %v3268 = vunpack.c.h.b16 %v3196
    %v3269 = vunpack.c.l.b16 %v3197
    %v3270 = vunpack.c.h.b16 %v3197
    %v3271 = vunpack.c.l.b16 %v3198
    %v3272 = vunpack.c.h.b16 %v3198
    %v3273 = vunpack.c.l.b16 %v3199
    %v3274 = vunpack.c.h.b16 %v3199
    %v3275 = vunpack.c.l.b16 %v3200
    %v3276 = vunpack.c.h.b16 %v3200
    %v3277 = vunpack.c.l.b16 %v3201
    %v3278 = vunpack.c.h.b16 %v3201
    %v3279 = vunpack.c.l.b16 %v3202
    %v3280 = vunpack.c.h.b16 %v3202
    %v3281 = vunpack.c.l.b16 %v3203
    %v3282 = vunpack.c.h.b16 %v3203
    %v3283 = vpack.c.b16 %v3253, %v3251
    %v3284 = vpack.c.b16 %v3254, %v3252
    %v3285 = vpack.c.b16 %v3257, %v3255
    %v3286 = vpack.c.b16 %v3258, %v3256
    %v3287 = vpack.c.b16 %v3261, %v3259
    %v3288 = vpack.c.b16 %v3262, %v3260
    %v3289 = vpack.c.b16 %v3265, %v3263
    %v3290 = vpack.c.b16 %v3266, %v3264
    %v3291 = vpack.c.b16 %v3269, %v3267
    %v3292 = vpack.c.b16 %v3270, %v3268
    %v3293 = vpack.c.b16 %v3273, %v3271
    %v3294 = vpack.c.b16 %v3274, %v3272
    %v3295 = vpack.c.b16 %v3277, %v3275
    %v3296 = vpack.c.b16 %v3278, %v3276
    %v3297 = vpack.c.b16 %v3281, %v3279
    %v3298 = vpack.c.b16 %v3282, %v3280
    %3315 = vmatprep.subr.bf16.mxu0 %v3284
    %3316 = vmatpush1.bf16.msra.mxu0 %v3283
    %3317 = vmatprep.subr.bf16.mxu0 %v3286
    %3318 = vmatpush1.bf16.msra.mxu0 %v3285
    %3319 = vmatprep.subr.bf16.mxu0 %v3288
    %3320 = vmatpush1.bf16.msra.mxu0 %v3287
    %3321 = vmatprep.subr.bf16.mxu0 %v3290
    %3322 = vmatpush1.bf16.msra.mxu0 %v3289
    %3323 = vmatprep.subr.bf16.mxu0 %v3292
    %3324 = vmatpush1.bf16.msra.mxu0 %v3291
    %3325 = vmatprep.subr.bf16.mxu0 %v3294
    %3326 = vmatpush1.bf16.msra.mxu0 %v3293
    %3327 = vmatprep.subr.bf16.mxu0 %v3296
    %3328 = vmatpush1.bf16.msra.mxu0 %v3295
    %3329 = vmatprep.subr.bf16.mxu0 %v3298
    %3330 = vmatpush1.bf16.msra.mxu0 %v3297
    %3331 = vmatprep.subr.bf16.mxu0 0
    %3332 = vmatpush1.bf16.msra.mxu0 0
    %3333 = vmatprep.subr.bf16.mxu0 0
    %3334 = vmatpush1.bf16.msra.mxu0 0
    %3335 = vmatprep.subr.bf16.mxu0 0
    %3336 = vmatpush1.bf16.msra.mxu0 0
    %3337 = vmatprep.subr.bf16.mxu0 0
    %3338 = vmatpush1.bf16.msra.mxu0 0
    %3339 = vmatprep.subr.bf16.mxu0 0
    %3340 = vmatpush1.bf16.msra.mxu0 0
    %3341 = vmatprep.subr.bf16.mxu0 0
    %3342 = vmatpush1.bf16.msra.mxu0 0
    %3343 = vmatprep.subr.bf16.mxu0 0
    %3344 = vmatpush1.bf16.msra.mxu0 0
    %3345 = vmatprep.subr.bf16.mxu0 0
    %3346 = vmatpush1.bf16.msra.mxu0 0
    %3347 = vmatprep.mubr.bf16.mxu0 0
    %3348 = vmatmul.mubr.bf16.gmra.mrb[0].mxu0 %v3205
    %v3349 = vpop.f32.mrb[0].mxu0
    %v3350 = vadd.f32 %v3228, %v3349
    %v3351 = vpop.f32.mrb[0].mxu0
    %v3352 = vadd.f32 %v3232, %v3351
    %v3353 = vpop.f32.mrb[0].mxu0
    %v3354 = vadd.f32 %v3228, %v3353
    %v3355 = vpop.f32.mrb[0].mxu0
    %v3356 = vadd.f32 %v3232, %v3355
    %3357 = vmatprep.mubr.bf16.mxu0 0
    %3358 = vmatmul.mubr.bf16.gmra.mrb[0].mxu0 %v3206
    %v3359 = vpop.f32.mrb[0].mxu0
    %v3360 = vadd.f32 %v3228, %v3359
    %v3361 = vpop.f32.mrb[0].mxu0
    %v3362 = vadd.f32 %v3232, %v3361
    %v3363 = vpop.f32.mrb[0].mxu0
    %v3364 = vadd.f32 %v3228, %v3363
    %v3365 = vpop.f32.mrb[0].mxu0
    %v3366 = vadd.f32 %v3232, %v3365
    %3367 = vmatprep.mubr.bf16.mxu0 0
    %3368 = vmatmul.mubr.bf16.gmra.mrb[0].mxu0 %v3207
    %v3369 = vpop.f32.mrb[0].mxu0
    %v3370 = vadd.f32 %v3228, %v3369
    %v3371 = vpop.f32.mrb[0].mxu0
    %v3372 = vadd.f32 %v3232, %v3371
    %v3373 = vpop.f32.mrb[0].mxu0
    %v3374 = vadd.f32 %v3228, %v3373
    %v3375 = vpop.f32.mrb[0].mxu0
    %v3376 = vadd.f32 %v3232, %v3375
    %3377 = vmatprep.mubr.bf16.mxu0 0
    %3378 = vmatmul.mubr.bf16.gmra.mrb[0].mxu0 %v3208
    %v3379 = vpop.f32.mrb[0].mxu0
    %v3380 = vadd.f32 %v3228, %v3379
    %v3381 = vpop.f32.mrb[0].mxu0
    %v3382 = vadd.f32 %v3232, %v3381
    %v3383 = vpop.f32.mrb[0].mxu0
    %v3384 = vadd.f32 %v3228, %v3383
    %v3385 = vpop.f32.mrb[0].mxu0
    %v3386 = vadd.f32 %v3232, %v3385
    %3387 = vmatprep.mubr.bf16.mxu0 0
    %3388 = vmatmul.mubr.bf16.gmra.mrb[0].mxu0 %v3209
    %v3389 = vpop.f32.mrb[0].mxu0
    %v3390 = vadd.f32 %v3228, %v3389
    %v3391 = vpop.f32.mrb[0].mxu0
    %v3392 = vadd.f32 %v3232, %v3391
    %v3393 = vpop.f32.mrb[0].mxu0
    %v3394 = vadd.f32 %v3228, %v3393
    %v3395 = vpop.f32.mrb[0].mxu0
    %v3396 = vadd.f32 %v3232, %v3395
    %3397 = vmatprep.mubr.bf16.mxu0 0
    %3398 = vmatmul.mubr.bf16.gmra.mrb[0].mxu0 %v3210
    %v3399 = vpop.f32.mrb[0].mxu0
    %v3400 = vadd.f32 %v3228, %v3399
    %v3401 = vpop.f32.mrb[0].mxu0
    %v3402 = vadd.f32 %v3232, %v3401
    %v3403 = vpop.f32.mrb[0].mxu0
    %v3404 = vadd.f32 %v3228, %v3403
    %v3405 = vpop.f32.mrb[0].mxu0
    %v3406 = vadd.f32 %v3232, %v3405
    %3407 = vmatprep.mubr.bf16.mxu0 0
    %3408 = vmatmul.mubr.bf16.gmra.mrb[0].mxu0 %v3211
    %v3409 = vpop.f32.mrb[0].mxu0
    %v3410 = vadd.f32 %v3228, %v3409
    %v3411 = vpop.f32.mrb[0].mxu0
    %v3412 = vadd.f32 %v3232, %v3411
    %v3413 = vpop.f32.mrb[0].mxu0
    %v3414 = vadd.f32 %v3228, %v3413
    %v3415 = vpop.f32.mrb[0].mxu0
    %v3416 = vadd.f32 %v3232, %v3415
    %3417 = vmatprep.mubr.bf16.mxu0 0
    %3418 = vmatmul.mubr.bf16.gmra.mrb[0].mxu0 %v3212
    %v3419 = vpop.f32.mrb[0].mxu0
    %v3420 = vadd.f32 %v3228, %v3419
    %v3421 = vpop.f32.mrb[0].mxu0
    %v3422 = vadd.f32 %v3232, %v3421
    %v3423 = vpop.f32.mrb[0].mxu0
    %v3424 = vadd.f32 %v3228, %v3423
    %v3425 = vpop.f32.mrb[0].mxu0
    %v3426 = vadd.f32 %v3232, %v3425
    %3427 = vmatprep.mubr.bf16.mxu0 0
    %3428 = vmatmul.mubr.bf16.gmra.mrb[0].mxu0 %v3213
    %v3429 = vpop.f32.mrb[0].mxu0
    %v3430 = vadd.f32 %v3228, %v3429
    %v3431 = vpop.f32.mrb[0].mxu0
    %v3432 = vadd.f32 %v3232, %v3431
    %v3433 = vpop.f32.mrb[0].mxu0
    %v3434 = vadd.f32 %v3228, %v3433
    %v3435 = vpop.f32.mrb[0].mxu0
    %v3436 = vadd.f32 %v3232, %v3435
    %3437 = vmatprep.mubr.bf16.mxu0 0
    %3438 = vmatmul.mubr.bf16.gmra.mrb[0].mxu0 %v3214
    %v3439 = vpop.f32.mrb[0].mxu0
    %v3440 = vadd.f32 %v3228, %v3439
    %v3441 = vpop.f32.mrb[0].mxu0
    %v3442 = vadd.f32 %v3232, %v3441
    %v3443 = vpop.f32.mrb[0].mxu0
    %v3444 = vadd.f32 %v3228, %v3443
    %v3445 = vpop.f32.mrb[0].mxu0
    %v3446 = vadd.f32 %v3232, %v3445
    %3447 = vmatprep.mubr.bf16.mxu0 0
    %3448 = vmatmul.mubr.bf16.gmra.mrb[0].mxu0 %v3215
    %v3449 = vpop.f32.mrb[0].mxu0
    %v3450 = vadd.f32 %v3228, %v3449
    %v3451 = vpop.f32.mrb[0].mxu0
    %v3452 = vadd.f32 %v3232, %v3451
    %v3453 = vpop.f32.mrb[0].mxu0
    %v3454 = vadd.f32 %v3228, %v3453
    %v3455 = vpop.f32.mrb[0].mxu0
    %v3456 = vadd.f32 %v3232, %v3455
    %3457 = vmatprep.mubr.bf16.mxu0 0
    %3458 = vmatmul.mubr.bf16.gmra.mrb[0].mxu0 %v3216
    %v3459 = vpop.f32.mrb[0].mxu0
    %v3460 = vadd.f32 %v3228, %v3459
    %v3461 = vpop.f32.mrb[0].mxu0
    %v3462 = vadd.f32 %v3232, %v3461
    %v3463 = vpop.f32.mrb[0].mxu0
    %v3464 = vadd.f32 %v3228, %v3463
    %v3465 = vpop.f32.mrb[0].mxu0
    %v3466 = vadd.f32 %v3232, %v3465
    %3467 = vmatprep.mubr.bf16.mxu0 0
    %3468 = vmatmul.mubr.bf16.gmra.mrb[0].mxu0 %v3217
    %v3469 = vpop.f32.mrb[0].mxu0
    %v3470 = vadd.f32 %v3228, %v3469
    %v3471 = vpop.f32.mrb[0].mxu0
    %v3472 = vadd.f32 %v3232, %v3471
    %v3473 = vpop.f32.mrb[0].mxu0
    %v3474 = vadd.f32 %v3228, %v3473
    %v3475 = vpop.f32.mrb[0].mxu0
    %v3476 = vadd.f32 %v3232, %v3475
    %3477 = vmatprep.mubr.bf16.mxu0 0
    %3478 = vmatmul.mubr.bf16.gmra.mrb[0].mxu0 %v3218
    %v3479 = vpop.f32.mrb[0].mxu0
    %v3480 = vadd.f32 %v3228, %v3479
    %v3481 = vpop.f32.mrb[0].mxu0
    %v3482 = vadd.f32 %v3232, %v3481
    %v3483 = vpop.f32.mrb[0].mxu0
    %v3484 = vadd.f32 %v3228, %v3483
    %v3485 = vpop.f32.mrb[0].mxu0
    %v3486 = vadd.f32 %v3232, %v3485
    %3487 = vmatprep.mubr.bf16.mxu0 0
    %3488 = vmatmul.mubr.bf16.gmra.mrb[0].mxu0 %v3219
    %v3489 = vpop.f32.mrb[0].mxu0
    %v3490 = vadd.f32 %v3228, %v3489
    %v3491 = vpop.f32.mrb[0].mxu0
    %v3492 = vadd.f32 %v3232, %v3491
    %v3493 = vpop.f32.mrb[0].mxu0
    %v3494 = vadd.f32 %v3228, %v3493
    %v3495 = vpop.f32.mrb[0].mxu0
    %v3496 = vadd.f32 %v3232, %v3495
    %3497 = vmatprep.mubr.bf16.mxu0 0
    %3498 = vmatmul.mubr.bf16.gmra.mrb[0].mxu0 %v3220
    %v3499 = vpop.f32.mrb[0].mxu0
    %v3500 = vadd.f32 %v3228, %v3499
    %v3501 = vpop.f32.mrb[0].mxu0
    %v3502 = vadd.f32 %v3232, %v3501
    %v3503 = vpop.f32.mrb[0].mxu0
    %v3504 = vadd.f32 %v3228, %v3503
    %v3505 = vpop.f32.mrb[0].mxu0
    %v3506 = vadd.f32 %v3232, %v3505
    %3507 = vmatprep.mubr.bf16.mxu0 0
    %3508 = vmatmul.mubr.bf16.gmra.mrb[0].mxu0 %v3221
    %v3509 = vpop.f32.mrb[0].mxu0
    %v3510 = vadd.f32 %v3228, %v3509
    %v3511 = vpop.f32.mrb[0].mxu0
    %v3512 = vadd.f32 %v3232, %v3511
    %v3513 = vpop.f32.mrb[0].mxu0
    %v3514 = vadd.f32 %v3228, %v3513
    %v3515 = vpop.f32.mrb[0].mxu0
    %v3516 = vadd.f32 %v3232, %v3515
    %3517 = vmatprep.mubr.bf16.mxu0 0
    %3518 = vmatmul.mubr.bf16.gmra.mrb[0].mxu0 %v3222
    %v3519 = vpop.f32.mrb[0].mxu0
    %v3520 = vadd.f32 %v3228, %v3519
    %v3521 = vpop.f32.mrb[0].mxu0
    %v3522 = vadd.f32 %v3232, %v3521
    %v3523 = vpop.f32.mrb[0].mxu0
    %v3524 = vadd.f32 %v3228, %v3523
    %v3525 = vpop.f32.mrb[0].mxu0
    %v3526 = vadd.f32 %v3232, %v3525
    %3527 = vmatprep.mubr.bf16.mxu0 0
    %3528 = vmatmul.mubr.bf16.gmra.mrb[0].mxu0 %v3223
    %v3529 = vpop.f32.mrb[0].mxu0
    %v3530 = vadd.f32 %v3228, %v3529
    %v3531 = vpop.f32.mrb[0].mxu0
    %v3532 = vadd.f32 %v3232, %v3531
    %v3533 = vpop.f32.mrb[0].mxu0
    %v3534 = vadd.f32 %v3228, %v3533
    %v3535 = vpop.f32.mrb[0].mxu0
    %v3536 = vadd.f32 %v3232, %v3535
    %3537 = vdwg.mxu0
    %v3538 = vmax.f32 %v3350, 0.0
    %v3539 = vmax.f32 %v3352, 0.0
    %v3540 = vmax.f32 %v3354, 0.0
    %v3541 = vmax.f32 %v3356, 0.0
    %v3542 = vmax.f32 %v3360, 0.0
    %v3543 = vmax.f32 %v3362, 0.0
    %v3544 = vmax.f32 %v3364, 0.0
    %v3545 = vmax.f32 %v3366, 0.0
    %v3546 = vmax.f32 %v3370, 0.0
    %v3547 = vmax.f32 %v3372, 0.0
    %v3548 = vmax.f32 %v3374, 0.0
    %v3549 = vmax.f32 %v3376, 0.0
    %v3550 = vmax.f32 %v3380, 0.0
    %v3551 = vmax.f32 %v3382, 0.0
    %v3552 = vmax.f32 %v3384, 0.0
    %v3553 = vmax.f32 %v3386, 0.0
    %v3554 = vmax.f32 %v3390, 0.0
    %v3555 = vmax.f32 %v3392, 0.0
    %v3556 = vmax.f32 %v3394, 0.0
    %v3557 = vmax.f32 %v3396, 0.0
    %v3558 = vmax.f32 %v3400, 0.0
    %v3559 = vmax.f32 %v3402, 0.0
    %v3560 = vmax.f32 %v3404, 0.0
    %v3561 = vmax.f32 %v3406, 0.0
    %v3562 = vmax.f32 %v3410, 0.0
    %v3563 = vmax.f32 %v3412, 0.0
    %v3564 = vmax.f32 %v3414, 0.0
    %v3565 = vmax.f32 %v3416, 0.0
    %v3566 = vmax.f32 %v3420, 0.0
    %v3567 = vmax.f32 %v3422, 0.0
    %v3568 = vmax.f32 %v3424, 0.0
    %v3569 = vmax.f32 %v3426, 0.0
    %v3570 = vmax.f32 %v3430, 0.0
    %v3571 = vmax.f32 %v3432, 0.0
    %v3572 = vmax.f32 %v3434, 0.0
    %v3573 = vmax.f32 %v3436, 0.0
    %v3574 = vmax.f32 %v3440, 0.0
    %v3575 = vmax.f32 %v3442, 0.0
    %v3576 = vmax.f32 %v3444, 0.0
    %v3577 = vmax.f32 %v3446, 0.0
    %v3578 = vmax.f32 %v3450, 0.0
    %v3579 = vmax.f32 %v3452, 0.0
    %v3580 = vmax.f32 %v3454, 0.0
    %v3581 = vmax.f32 %v3456, 0.0
    %v3582 = vmax.f32 %v3460, 0.0
    %v3583 = vmax.f32 %v3462, 0.0
    %v3584 = vmax.f32 %v3464, 0.0
    %v3585 = vmax.f32 %v3466, 0.0
    %v3586 = vmax.f32 %v3470, 0.0
    %v3587 = vmax.f32 %v3472, 0.0
    %v3588 = vmax.f32 %v3474, 0.0
    %v3589 = vmax.f32 %v3476, 0.0
    %v3590 = vmax.f32 %v3480, 0.0
    %v3591 = vmax.f32 %v3482, 0.0
    %v3592 = vmax.f32 %v3484, 0.0
    %v3593 = vmax.f32 %v3486, 0.0
    %v3594 = vmax.f32 %v3490, 0.0
    %v3595 = vmax.f32 %v3492, 0.0
    %v3596 = vmax.f32 %v3494, 0.0
    %v3597 = vmax.f32 %v3496, 0.0
    %v3598 = vmax.f32 %v3500, 0.0
    %v3599 = vmax.f32 %v3502, 0.0
    %v3600 = vmax.f32 %v3504, 0.0
    %v3601 = vmax.f32 %v3506, 0.0
    %v3602 = vmax.f32 %v3510, 0.0
    %v3603 = vmax.f32 %v3512, 0.0
    %v3604 = vmax.f32 %v3514, 0.0
    %v3605 = vmax.f32 %v3516, 0.0
    %v3606 = vmax.f32 %v3520, 0.0
    %v3607 = vmax.f32 %v3522, 0.0
    %v3608 = vmax.f32 %v3524, 0.0
    %v3609 = vmax.f32 %v3526, 0.0
    %v3610 = vmax.f32 %v3530, 0.0
    %v3611 = vmax.f32 %v3532, 0.0
    %v3612 = vmax.f32 %v3534, 0.0
    %v3613 = vmax.f32 %v3536, 0.0
    %v3614 = vld [vmem:[%s15] sm:$0xff]
    %v3615 = vld [vmem:[%s15 + $0x8] sm:$0xff]
    %v3616 = vld [vmem:[%s15 + $0x10] sm:$0xf]
    %v3617 = vld [vmem:[%s15 + $0x14] sm:$0xff]
    %v3618 = vld [vmem:[%s15 + $0x1c] sm:$0xff]
    %v3619 = vld [vmem:[%s15 + $0x24] sm:$0xf]
    %v3620 = vld [vmem:[%s15 + $0x28] sm:$0xff]
    %v3621 = vld [vmem:[%s15 + $0x30] sm:$0xff]
    %v3622 = vld [vmem:[%s15 + $0x38] sm:$0xf]
    %v3623 = vld [vmem:[%s15 + $0x3c] sm:$0xff]
    %v3624 = vld [vmem:[%s15 + $0x44] sm:$0xff]
    %v3625 = vld [vmem:[%s15 + $0x4c] sm:$0xf]
    %v3626 = vld [vmem:[%s15 + $0x50] sm:$0xff]
    %v3627 = vld [vmem:[%s15 + $0x58] sm:$0xff]
    %v3628 = vld [vmem:[%s15 + $0x60] sm:$0xf]
    %v3629 = vld [vmem:[%s15 + $0x64] sm:$0xff]
    %v3630 = vld [vmem:[%s15 + $0x6c] sm:$0xff]
    %v3631 = vld [vmem:[%s15 + $0x74] sm:$0xf]
    %v3632 = vld [vmem:[%s15 + $0x78] sm:$0xff]
    %v3633 = vld [vmem:[%s15 + $0x80] sm:$0xff]
    %v3634 = vld [vmem:[%s15 + $0x88] sm:$0xf]
    %v3635 = vld [vmem:[%s15 + $0x8c] sm:$0xff]
    %v3636 = vld [vmem:[%s15 + $0x94] sm:$0xff]
    %v3637 = vld [vmem:[%s15 + $0x9c] sm:$0xf]
    %v3638 = vld [vmem:[%s15 + $0xa0] sm:$0xff]
    %v3639 = vld [vmem:[%s15 + $0xa8] sm:$0xff]
    %v3640 = vld [vmem:[%s15 + $0xb0] sm:$0xf]
    %v3641 = vld [vmem:[%s15 + $0xb4] sm:$0xff]
    %v3642 = vld [vmem:[%s15 + $0xbc] sm:$0xff]
    %v3643 = vld [vmem:[%s15 + $0xc4] sm:$0xf]
    %v3644 = vld [vmem:[%s15 + $0xc8] sm:$0xff]
    %v3645 = vld [vmem:[%s15 + $0xd0] sm:$0xff]
    %v3646 = vld [vmem:[%s15 + $0xd8] sm:$0xf]
    %v3647 = vld [vmem:[%s15 + $0xdc] sm:$0xff]
    %v3648 = vld [vmem:[%s15 + $0xe4] sm:$0xff]
    %v3649 = vld [vmem:[%s15 + $0xec] sm:$0xf]
    %v3650 = vld [vmem:[%s15 + $0xf0] sm:$0xff]
    %v3651 = vld [vmem:[%s15 + $0xf8] sm:$0xff]
    %v3652 = vld [vmem:[%s15 + $0x100] sm:$0xf]
    %v3653 = vld [vmem:[%s15 + $0x104] sm:$0xff]
    %v3654 = vld [vmem:[%s15 + $0x10c] sm:$0xff]
    %v3655 = vld [vmem:[%s15 + $0x114] sm:$0xf]
    %v3656 = vld [vmem:[%s15 + $0x118] sm:$0xff]
    %v3657 = vld [vmem:[%s15 + $0x120] sm:$0xff]
    %v3658 = vld [vmem:[%s15 + $0x128] sm:$0xf]
    %v3659 = vld [vmem:[%s15 + $0x12c] sm:$0xff]
    %v3660 = vld [vmem:[%s15 + $0x134] sm:$0xff]
    %v3661 = vld [vmem:[%s15 + $0x13c] sm:$0xf]
    %v3662 = vld [vmem:[%s15 + $0x140] sm:$0xff]
    %v3663 = vld [vmem:[%s15 + $0x148] sm:$0xff]
    %v3664 = vld [vmem:[%s15 + $0x150] sm:$0xf]
    %v3665 = vld [vmem:[%s15 + $0x154] sm:$0xff]
    %v3666 = vld [vmem:[%s15 + $0x15c] sm:$0xff]
    %v3667 = vld [vmem:[%s15 + $0x164] sm:$0xf]
    %v3668 = vld [vmem:[%s15 + $0x168] sm:$0xff]
    %v3669 = vld [vmem:[%s15 + $0x170] sm:$0xff]
    %v3670 = vld [vmem:[%s15 + $0x178] sm:$0xf]
    %v3671 = vld [vmem:[%s15 + $0x17c] sm:$0xff]
    %v3672 = vld [vmem:[%s15 + $0x184] sm:$0xff]
    %v3673 = vld [vmem:[%s15 + $0x18c] sm:$0xf]
    %v3674 = vld [vmem:[%s15 + $0x190] sm:$0xff]
    %v3675 = vld [vmem:[%s15 + $0x198] sm:$0xff]
    %v3676 = vld [vmem:[%s15 + $0x1a0] sm:$0xf]
    %v3677 = vld [vmem:[%s15 + $0x1a4] sm:$0xff]
    %v3678 = vld [vmem:[%s15 + $0x1ac] sm:$0xff]
    %v3679 = vld [vmem:[%s15 + $0x1b4] sm:$0xf]
    %v3680 = vld [vmem:[%s15 + $0x1b8] sm:$0xff]
    %v3681 = vld [vmem:[%s15 + $0x1c0] sm:$0xff]
    %v3682 = vld [vmem:[%s15 + $0x1c8] sm:$0xf]
    %v3683 = vld [vmem:[%s15 + $0x1cc] sm:$0xff]
    %v3684 = vld [vmem:[%s15 + $0x1d4] sm:$0xff]
    %v3685 = vld [vmem:[%s15 + $0x1dc] sm:$0xf]
    %v3686 = vld [vmem:[%s15 + $0x1e0] sm:$0xff]
    %v3687 = vld [vmem:[%s15 + $0x1e8] sm:$0xff]
    %v3688 = vld [vmem:[%s15 + $0x1f0] sm:$0xf]
    %v3689 = vld [vmem:[%s15 + $0x1f4] sm:$0xff]
    %v3690 = vld [vmem:[%s15 + $0x1fc] sm:$0xff]
    %v3691 = vld [vmem:[%s15 + $0x204] sm:$0xf]
    %v3692 = vld [vmem:[%s15 + $0x208] sm:$0xff]
    %v3693 = vld [vmem:[%s15 + $0x210] sm:$0xff]
    %v3694 = vld [vmem:[%s15 + $0x218] sm:$0xf]
    %v3695 = vld [vmem:[%s15 + $0x21c] sm:$0xff]
    %v3696 = vld [vmem:[%s15 + $0x224] sm:$0xff]
    %v3697 = vld [vmem:[%s15 + $0x22c] sm:$0xf]
    %v3698 = vld [vmem:[%s15 + $0x230] sm:$0xff]
    %v3699 = vld [vmem:[%s15 + $0x238] sm:$0xff]
    %v3700 = vld [vmem:[%s15 + $0x240] sm:$0xf]
    %v3701 = vld [vmem:[%s15 + $0x244] sm:$0xff]
    %v3702 = vld [vmem:[%s15 + $0x24c] sm:$0xff]
    %v3703 = vld [vmem:[%s15 + $0x254] sm:$0xf]
    %v3704 = vld [vmem:[%s15 + $0x258] sm:$0xff]
    %v3705 = vld [vmem:[%s15 + $0x260] sm:$0xff]
    %v3706 = vld [vmem:[%s15 + $0x268] sm:$0xf]
    %v3707 = vld [vmem:[%s15 + $0x26c] sm:$0xff]
    %v3708 = vld [vmem:[%s15 + $0x274] sm:$0xff]
    %v3709 = vld [vmem:[%s15 + $0x27c] sm:$0xf]
    %v3710 = vld [vmem:[%s16] sm:$0x1f]
    %v3711 = vpack.c.bf16 %v3540, %v3538
    %v3712 = vpack.c.bf16 %v3541, %v3539
    %v3713 = vpack.c.bf16 %v3544, %v3542
    %v3714 = vpack.c.bf16 %v3545, %v3543
    %v3715 = vpack.c.bf16 %v3548, %v3546
    %v3716 = vpack.c.bf16 %v3549, %v3547
    %v3717 = vpack.c.bf16 %v3552, %v3550
    %v3718 = vpack.c.bf16 %v3553, %v3551
    %v3719 = vpack.c.bf16 %v3556, %v3554
    %v3720 = vpack.c.bf16 %v3557, %v3555
    %v3721 = vpack.c.bf16 %v3560, %v3558
    %v3722 = vpack.c.bf16 %v3561, %v3559
    %v3723 = vpack.c.bf16 %v3564, %v3562
    %v3724 = vpack.c.bf16 %v3565, %v3563
    %v3725 = vpack.c.bf16 %v3568, %v3566
    %v3726 = vpack.c.bf16 %v3569, %v3567
    %v3727 = vpack.c.bf16 %v3572, %v3570
    %v3728 = vpack.c.bf16 %v3573, %v3571
    %v3729 = vpack.c.bf16 %v3576, %v3574
    %v3730 = vpack.c.bf16 %v3577, %v3575
    %v3731 = vpack.c.bf16 %v3580, %v3578
    %v3732 = vpack.c.bf16 %v3581, %v3579
    %v3733 = vpack.c.bf16 %v3584, %v3582
    %v3734 = vpack.c.bf16 %v3585, %v3583
    %v3735 = vpack.c.bf16 %v3588, %v3586
    %v3736 = vpack.c.bf16 %v3589, %v3587
    %v3737 = vpack.c.bf16 %v3592, %v3590
    %v3738 = vpack.c.bf16 %v3593, %v3591
    %v3739 = vpack.c.bf16 %v3596, %v3594
    %v3740 = vpack.c.bf16 %v3597, %v3595
    %v3741 = vpack.c.bf16 %v3600, %v3598
    %v3742 = vpack.c.bf16 %v3601, %v3599
    %v3743 = vpack.c.bf16 %v3604, %v3602
    %v3744 = vpack.c.bf16 %v3605, %v3603
    %v3745 = vpack.c.bf16 %v3608, %v3606
    %v3746 = vpack.c.bf16 %v3609, %v3607
    %v3747 = vpack.c.bf16 %v3612, %v3610
    %v3748 = vpack.c.bf16 %v3613, %v3611
    %v3750 = vlaneseq
    %v3751 = vshrl.u32 %v3750, 7
    %v3752 = vsub.s32 0, %v3751
    %v3753 = vrot.slane %v3710, %v3752
    %v3754 = vlaneseq
    %v3755 = vshrl.u32 %v3754, 7
    %v3756 = vsub.s32 1, %v3755
    %v3757 = vrot.slane %v3710, %v3756
    %v3758 = vlaneseq
    %v3759 = vshrl.u32 %v3758, 7
    %v3760 = vsub.s32 2, %v3759
    %v3761 = vrot.slane %v3710, %v3760
    %v3762 = vlaneseq
    %v3763 = vshrl.u32 %v3762, 7
    %v3764 = vsub.s32 3, %v3763
    %v3765 = vrot.slane %v3710, %v3764
    %v3766 = vlaneseq
    %v3767 = vshrl.u32 %v3766, 7
    %v3768 = vsub.s32 4, %v3767
    %v3769 = vrot.slane %v3710, %v3768
    %v3871 = vunpack.c.l.b16 %v3614
    %v3872 = vunpack.c.h.b16 %v3614
    %v3873 = vunpack.c.l.b16 %v3615
    %v3874 = vunpack.c.h.b16 %v3615
    %v3875 = vunpack.c.l.b16 %v3616
    %v3876 = vunpack.c.l.b16 %v3617
    %v3877 = vunpack.c.h.b16 %v3617
    %v3878 = vunpack.c.l.b16 %v3618
    %v3879 = vunpack.c.h.b16 %v3618
    %v3880 = vunpack.c.l.b16 %v3619
    %v3881 = vunpack.c.l.b16 %v3620
    %v3882 = vunpack.c.h.b16 %v3620
    %v3883 = vunpack.c.l.b16 %v3621
    %v3884 = vunpack.c.h.b16 %v3621
    %v3885 = vunpack.c.l.b16 %v3622
    %v3886 = vunpack.c.l.b16 %v3623
    %v3887 = vunpack.c.h.b16 %v3623
    %v3888 = vunpack.c.l.b16 %v3624
    %v3889 = vunpack.c.h.b16 %v3624
    %v3890 = vunpack.c.l.b16 %v3625
    %v3891 = vunpack.c.l.b16 %v3626
    %v3892 = vunpack.c.h.b16 %v3626
    %v3893 = vunpack.c.l.b16 %v3627
    %v3894 = vunpack.c.h.b16 %v3627
    %v3895 = vunpack.c.l.b16 %v3628
    %v3896 = vunpack.c.l.b16 %v3629
    %v3897 = vunpack.c.h.b16 %v3629
    %v3898 = vunpack.c.l.b16 %v3630
    %v3899 = vunpack.c.h.b16 %v3630
    %v3900 = vunpack.c.l.b16 %v3631
    %v3901 = vunpack.c.l.b16 %v3632
    %v3902 = vunpack.c.h.b16 %v3632
    %v3903 = vunpack.c.l.b16 %v3633
    %v3904 = vunpack.c.h.b16 %v3633
    %v3905 = vunpack.c.l.b16 %v3634
    %v3906 = vunpack.c.l.b16 %v3635
    %v3907 = vunpack.c.h.b16 %v3635
    %v3908 = vunpack.c.l.b16 %v3636
    %v3909 = vunpack.c.h.b16 %v3636
    %v3910 = vunpack.c.l.b16 %v3637
    %v3911 = vunpack.c.l.b16 %v3638
    %v3912 = vunpack.c.h.b16 %v3638
    %v3913 = vunpack.c.l.b16 %v3639
    %v3914 = vunpack.c.h.b16 %v3639
    %v3915 = vunpack.c.l.b16 %v3640
    %v3916 = vunpack.c.l.b16 %v3641
    %v3917 = vunpack.c.h.b16 %v3641
    %v3918 = vunpack.c.l.b16 %v3642
    %v3919 = vunpack.c.h.b16 %v3642
    %v3920 = vunpack.c.l.b16 %v3643
    %v3921 = vunpack.c.l.b16 %v3644
    %v3922 = vunpack.c.h.b16 %v3644
    %v3923 = vunpack.c.l.b16 %v3645
    %v3924 = vunpack.c.h.b16 %v3645
    %v3925 = vunpack.c.l.b16 %v3646
    %v3926 = vunpack.c.l.b16 %v3647
    %v3927 = vunpack.c.h.b16 %v3647
    %v3928 = vunpack.c.l.b16 %v3648
    %v3929 = vunpack.c.h.b16 %v3648
    %v3930 = vunpack.c.l.b16 %v3649
    %v3931 = vunpack.c.l.b16 %v3650
    %v3932 = vunpack.c.h.b16 %v3650
    %v3933 = vunpack.c.l.b16 %v3651
    %v3934 = vunpack.c.h.b16 %v3651
    %v3935 = vunpack.c.l.b16 %v3652
    %v3936 = vunpack.c.l.b16 %v3653
    %v3937 = vunpack.c.h.b16 %v3653
    %v3938 = vunpack.c.l.b16 %v3654
    %v3939 = vunpack.c.h.b16 %v3654
    %v3940 = vunpack.c.l.b16 %v3655
    %v3941 = vunpack.c.l.b16 %v3656
    %v3942 = vunpack.c.h.b16 %v3656
    %v3943 = vunpack.c.l.b16 %v3657
    %v3944 = vunpack.c.h.b16 %v3657
    %v3945 = vunpack.c.l.b16 %v3658
    %v3946 = vunpack.c.l.b16 %v3659
    %v3947 = vunpack.c.h.b16 %v3659
    %v3948 = vunpack.c.l.b16 %v3660
    %v3949 = vunpack.c.h.b16 %v3660
    %v3950 = vunpack.c.l.b16 %v3661
    %v3951 = vunpack.c.l.b16 %v3662
    %v3952 = vunpack.c.h.b16 %v3662
    %v3953 = vunpack.c.l.b16 %v3663
    %v3954 = vunpack.c.h.b16 %v3663
    %v3955 = vunpack.c.l.b16 %v3664
    %v3956 = vunpack.c.l.b16 %v3665
    %v3957 = vunpack.c.h.b16 %v3665
    %v3958 = vunpack.c.l.b16 %v3666
    %v3959 = vunpack.c.h.b16 %v3666
    %v3960 = vunpack.c.l.b16 %v3667
    %v3961 = vunpack.c.l.b16 %v3668
    %v3962 = vunpack.c.h.b16 %v3668
    %v3963 = vunpack.c.l.b16 %v3669
    %v3964 = vunpack.c.h.b16 %v3669
    %v3965 = vunpack.c.l.b16 %v3670
    %v3966 = vunpack.c.l.b16 %v3671
    %v3967 = vunpack.c.h.b16 %v3671
    %v3968 = vunpack.c.l.b16 %v3672
    %v3969 = vunpack.c.h.b16 %v3672
    %v3970 = vunpack.c.l.b16 %v3673
    %v3971 = vunpack.c.l.b16 %v3674
    %v3972 = vunpack.c.h.b16 %v3674
    %v3973 = vunpack.c.l.b16 %v3675
    %v3974 = vunpack.c.h.b16 %v3675
    %v3975 = vunpack.c.l.b16 %v3676
    %v3976 = vunpack.c.l.b16 %v3677
    %v3977 = vunpack.c.h.b16 %v3677
    %v3978 = vunpack.c.l.b16 %v3678
    %v3979 = vunpack.c.h.b16 %v3678
    %v3980 = vunpack.c.l.b16 %v3679
    %v3981 = vunpack.c.l.b16 %v3680
    %v3982 = vunpack.c.h.b16 %v3680
    %v3983 = vunpack.c.l.b16 %v3681
    %v3984 = vunpack.c.h.b16 %v3681
    %v3985 = vunpack.c.l.b16 %v3682
    %v3986 = vunpack.c.l.b16 %v3683
    %v3987 = vunpack.c.h.b16 %v3683
    %v3988 = vunpack.c.l.b16 %v3684
    %v3989 = vunpack.c.h.b16 %v3684
    %v3990 = vunpack.c.l.b16 %v3685
    %v3991 = vunpack.c.l.b16 %v3686
    %v3992 = vunpack.c.h.b16 %v3686
    %v3993 = vunpack.c.l.b16 %v3687
    %v3994 = vunpack.c.h.b16 %v3687
    %v3995 = vunpack.c.l.b16 %v3688
    %v3996 = vunpack.c.l.b16 %v3689
    %v3997 = vunpack.c.h.b16 %v3689
    %v3998 = vunpack.c.l.b16 %v3690
    %v3999 = vunpack.c.h.b16 %v3690
    %v4000 = vunpack.c.l.b16 %v3691
    %v4001 = vunpack.c.l.b16 %v3692
    %v4002 = vunpack.c.h.b16 %v3692
    %v4003 = vunpack.c.l.b16 %v3693
    %v4004 = vunpack.c.h.b16 %v3693
    %v4005 = vunpack.c.l.b16 %v3694
    %v4006 = vunpack.c.l.b16 %v3695
    %v4007 = vunpack.c.h.b16 %v3695
    %v4008 = vunpack.c.l.b16 %v3696
    %v4009 = vunpack.c.h.b16 %v3696
    %v4010 = vunpack.c.l.b16 %v3697
    %v4011 = vunpack.c.l.b16 %v3698
    %v4012 = vunpack.c.h.b16 %v3698
    %v4013 = vunpack.c.l.b16 %v3699
    %v4014 = vunpack.c.h.b16 %v3699
    %v4015 = vunpack.c.l.b16 %v3700
    %v4016 = vunpack.c.l.b16 %v3701
    %v4017 = vunpack.c.h.b16 %v3701
    %v4018 = vunpack.c.l.b16 %v3702
    %v4019 = vunpack.c.h.b16 %v3702
    %v4020 = vunpack.c.l.b16 %v3703
    %v4021 = vunpack.c.l.b16 %v3704
    %v4022 = vunpack.c.h.b16 %v3704
    %v4023 = vunpack.c.l.b16 %v3705
    %v4024 = vunpack.c.h.b16 %v3705
    %v4025 = vunpack.c.l.b16 %v3706
    %v4026 = vunpack.c.l.b16 %v3707
    %v4027 = vunpack.c.h.b16 %v3707
    %v4028 = vunpack.c.l.b16 %v3708
    %v4029 = vunpack.c.h.b16 %v3708
    %v4030 = vunpack.c.l.b16 %v3709
    %v4031 = vpack.c.b16 %v3876, %v3871
    %v4032 = vpack.c.b16 %v3877, %v3872
    %v4033 = vpack.c.b16 %v3878, %v3873
    %v4034 = vpack.c.b16 %v3879, %v3874
    %v4035 = vpack.c.b16 %v3880, %v3875
    %v4036 = vpack.c.b16 %v3886, %v3881
    %v4037 = vpack.c.b16 %v3887, %v3882
    %v4038 = vpack.c.b16 %v3888, %v3883
    %v4039 = vpack.c.b16 %v3889, %v3884
    %v4040 = vpack.c.b16 %v3890, %v3885
    %v4041 = vpack.c.b16 %v3896, %v3891
    %v4042 = vpack.c.b16 %v3897, %v3892
    %v4043 = vpack.c.b16 %v3898, %v3893
    %v4044 = vpack.c.b16 %v3899, %v3894
    %v4045 = vpack.c.b16 %v3900, %v3895
    %v4046 = vpack.c.b16 %v3906, %v3901
    %v4047 = vpack.c.b16 %v3907, %v3902
    %v4048 = vpack.c.b16 %v3908, %v3903
    %v4049 = vpack.c.b16 %v3909, %v3904
    %v4050 = vpack.c.b16 %v3910, %v3905
    %v4051 = vpack.c.b16 %v3916, %v3911
    %v4052 = vpack.c.b16 %v3917, %v3912
    %v4053 = vpack.c.b16 %v3918, %v3913
    %v4054 = vpack.c.b16 %v3919, %v3914
    %v4055 = vpack.c.b16 %v3920, %v3915
    %v4056 = vpack.c.b16 %v3926, %v3921
    %v4057 = vpack.c.b16 %v3927, %v3922
    %v4058 = vpack.c.b16 %v3928, %v3923
    %v4059 = vpack.c.b16 %v3929, %v3924
    %v4060 = vpack.c.b16 %v3930, %v3925
    %v4061 = vpack.c.b16 %v3936, %v3931
    %v4062 = vpack.c.b16 %v3937, %v3932
    %v4063 = vpack.c.b16 %v3938, %v3933
    %v4064 = vpack.c.b16 %v3939, %v3934
    %v4065 = vpack.c.b16 %v3940, %v3935
    %v4066 = vpack.c.b16 %v3946, %v3941
    %v4067 = vpack.c.b16 %v3947, %v3942
    %v4068 = vpack.c.b16 %v3948, %v3943
    %v4069 = vpack.c.b16 %v3949, %v3944
    %v4070 = vpack.c.b16 %v3950, %v3945
    %v4071 = vpack.c.b16 %v3956, %v3951
    %v4072 = vpack.c.b16 %v3957, %v3952
    %v4073 = vpack.c.b16 %v3958, %v3953
    %v4074 = vpack.c.b16 %v3959, %v3954
    %v4075 = vpack.c.b16 %v3960, %v3955
    %v4076 = vpack.c.b16 %v3966, %v3961
    %v4077 = vpack.c.b16 %v3967, %v3962
    %v4078 = vpack.c.b16 %v3968, %v3963
    %v4079 = vpack.c.b16 %v3969, %v3964
    %v4080 = vpack.c.b16 %v3970, %v3965
    %v4081 = vpack.c.b16 %v3976, %v3971
    %v4082 = vpack.c.b16 %v3977, %v3972
    %v4083 = vpack.c.b16 %v3978, %v3973
    %v4084 = vpack.c.b16 %v3979, %v3974
    %v4085 = vpack.c.b16 %v3980, %v3975
    %v4086 = vpack.c.b16 %v3986, %v3981
    %v4087 = vpack.c.b16 %v3987, %v3982
    %v4088 = vpack.c.b16 %v3988, %v3983
    %v4089 = vpack.c.b16 %v3989, %v3984
    %v4090 = vpack.c.b16 %v3990, %v3985
    %v4091 = vpack.c.b16 %v3996, %v3991
    %v4092 = vpack.c.b16 %v3997, %v3992
    %v4093 = vpack.c.b16 %v3998, %v3993
    %v4094 = vpack.c.b16 %v3999, %v3994
    %v4095 = vpack.c.b16 %v4000, %v3995
    %v4096 = vpack.c.b16 %v4006, %v4001
    %v4097 = vpack.c.b16 %v4007, %v4002
    %v4098 = vpack.c.b16 %v4008, %v4003
    %v4099 = vpack.c.b16 %v4009, %v4004
    %v4100 = vpack.c.b16 %v4010, %v4005
    %v4101 = vpack.c.b16 %v4016, %v4011
    %v4102 = vpack.c.b16 %v4017, %v4012
    %v4103 = vpack.c.b16 %v4018, %v4013
    %v4104 = vpack.c.b16 %v4019, %v4014
    %v4105 = vpack.c.b16 %v4020, %v4015
    %v4106 = vpack.c.b16 %v4026, %v4021
    %v4107 = vpack.c.b16 %v4027, %v4022
    %v4108 = vpack.c.b16 %v4028, %v4023
    %v4109 = vpack.c.b16 %v4029, %v4024
    %v4110 = vpack.c.b16 %v4030, %v4025
    %4191 = vmatprep.subr.bf16.mxu0 %v4032
    %4192 = vmatpush1.bf16.msra.mxu0 %v4031
    %4193 = vmatprep.subr.bf16.mxu0 %v4037
    %4194 = vmatpush1.bf16.msra.mxu0 %v4036
    %4195 = vmatprep.subr.bf16.mxu0 %v4042
    %4196 = vmatpush1.bf16.msra.mxu0 %v4041
    %4197 = vmatprep.subr.bf16.mxu0 %v4047
    %4198 = vmatpush1.bf16.msra.mxu0 %v4046
    %4199 = vmatprep.subr.bf16.mxu0 %v4052
    %4200 = vmatpush1.bf16.msra.mxu0 %v4051
    %4201 = vmatprep.subr.bf16.mxu0 %v4057
    %4202 = vmatpush1.bf16.msra.mxu0 %v4056
    %4203 = vmatprep.subr.bf16.mxu0 %v4062
    %4204 = vmatpush1.bf16.msra.mxu0 %v4061
    %4205 = vmatprep.subr.bf16.mxu0 %v4067
    %4206 = vmatpush1.bf16.msra.mxu0 %v4066
    %4207 = vmatprep.subr.bf16.mxu0 %v4072
    %4208 = vmatpush1.bf16.msra.mxu0 %v4071
    %4209 = vmatprep.subr.bf16.mxu0 %v4077
    %4210 = vmatpush1.bf16.msra.mxu0 %v4076
    %4211 = vmatprep.subr.bf16.mxu0 %v4082
    %4212 = vmatpush1.bf16.msra.mxu0 %v4081
    %4213 = vmatprep.subr.bf16.mxu0 %v4087
    %4214 = vmatpush1.bf16.msra.mxu0 %v4086
    %4215 = vmatprep.subr.bf16.mxu0 %v4092
    %4216 = vmatpush1.bf16.msra.mxu0 %v4091
    %4217 = vmatprep.subr.bf16.mxu0 %v4097
    %4218 = vmatpush1.bf16.msra.mxu0 %v4096
    %4219 = vmatprep.subr.bf16.mxu0 %v4102
    %4220 = vmatpush1.bf16.msra.mxu0 %v4101
    %4221 = vmatprep.subr.bf16.mxu0 %v4107
    %4222 = vmatpush1.bf16.msra.mxu0 %v4106
    %4223 = vmatprep.mubr.bf16.mxu0 %v3712
    %4224 = vmatmul.mubr.bf16.gmra.mrb[0].mxu0 %v3711
    %v4225 = vpop.f32.mrb[0].mxu0
    %v4226 = vadd.f32 %v3753, %v4225
    %v4227 = vpop.f32.mrb[0].mxu0
    %v4228 = vadd.f32 %v3757, %v4227
    %v4229 = vpop.f32.mrb[0].mxu0
    %v4230 = vadd.f32 %v3753, %v4229
    %v4231 = vpop.f32.mrb[0].mxu0
    %v4232 = vadd.f32 %v3757, %v4231
    %4233 = vmatprep.mubr.bf16.mxu0 %v3714
    %4234 = vmatmul.mubr.bf16.gmra.mrb[0].mxu0 %v3713
    %v4235 = vpop.f32.mrb[0].mxu0
    %v4236 = vadd.f32 %v3753, %v4235
    %v4237 = vpop.f32.mrb[0].mxu0
    %v4238 = vadd.f32 %v3757, %v4237
    %v4239 = vpop.f32.mrb[0].mxu0
    %v4240 = vadd.f32 %v3753, %v4239
    %v4241 = vpop.f32.mrb[0].mxu0
    %v4242 = vadd.f32 %v3757, %v4241
    %4243 = vmatprep.mubr.bf16.mxu0 %v3716
    %4244 = vmatmul.mubr.bf16.gmra.mrb[0].mxu0 %v3715
    %v4245 = vpop.f32.mrb[0].mxu0
    %v4246 = vadd.f32 %v3753, %v4245
    %v4247 = vpop.f32.mrb[0].mxu0
    %v4248 = vadd.f32 %v3757, %v4247
    %v4249 = vpop.f32.mrb[0].mxu0
    %v4250 = vadd.f32 %v3753, %v4249
    %v4251 = vpop.f32.mrb[0].mxu0
    %v4252 = vadd.f32 %v3757, %v4251
    %4253 = vmatprep.mubr.bf16.mxu0 %v3718
    %4254 = vmatmul.mubr.bf16.gmra.mrb[0].mxu0 %v3717
    %v4255 = vpop.f32.mrb[0].mxu0
    %v4256 = vadd.f32 %v3753, %v4255
    %v4257 = vpop.f32.mrb[0].mxu0
    %v4258 = vadd.f32 %v3757, %v4257
    %v4259 = vpop.f32.mrb[0].mxu0
    %v4260 = vadd.f32 %v3753, %v4259
    %v4261 = vpop.f32.mrb[0].mxu0
    %v4262 = vadd.f32 %v3757, %v4261
    %4263 = vmatprep.mubr.bf16.mxu0 %v3720
    %4264 = vmatmul.mubr.bf16.gmra.mrb[0].mxu0 %v3719
    %v4265 = vpop.f32.mrb[0].mxu0
    %v4266 = vadd.f32 %v3753, %v4265
    %v4267 = vpop.f32.mrb[0].mxu0
    %v4268 = vadd.f32 %v3757, %v4267
    %v4269 = vpop.f32.mrb[0].mxu0
    %v4270 = vadd.f32 %v3753, %v4269
    %v4271 = vpop.f32.mrb[0].mxu0
    %v4272 = vadd.f32 %v3757, %v4271
    %4273 = vmatprep.mubr.bf16.mxu0 %v3722
    %4274 = vmatmul.mubr.bf16.gmra.mrb[0].mxu0 %v3721
    %v4275 = vpop.f32.mrb[0].mxu0
    %v4276 = vadd.f32 %v3753, %v4275
    %v4277 = vpop.f32.mrb[0].mxu0
    %v4278 = vadd.f32 %v3757, %v4277
    %v4279 = vpop.f32.mrb[0].mxu0
    %v4280 = vadd.f32 %v3753, %v4279
    %v4281 = vpop.f32.mrb[0].mxu0
    %v4282 = vadd.f32 %v3757, %v4281
    %4283 = vmatprep.mubr.bf16.mxu0 %v3724
    %4284 = vmatmul.mubr.bf16.gmra.mrb[0].mxu0 %v3723
    %v4285 = vpop.f32.mrb[0].mxu0
    %v4286 = vadd.f32 %v3753, %v4285
    %v4287 = vpop.f32.mrb[0].mxu0
    %v4288 = vadd.f32 %v3757, %v4287
    %v4289 = vpop.f32.mrb[0].mxu0
    %v4290 = vadd.f32 %v3753, %v4289
    %v4291 = vpop.f32.mrb[0].mxu0
    %v4292 = vadd.f32 %v3757, %v4291
    %4293 = vmatprep.mubr.bf16.mxu0 %v3726
    %4294 = vmatmul.mubr.bf16.gmra.mrb[0].mxu0 %v3725
    %v4295 = vpop.f32.mrb[0].mxu0
    %v4296 = vadd.f32 %v3753, %v4295
    %v4297 = vpop.f32.mrb[0].mxu0
    %v4298 = vadd.f32 %v3757, %v4297
    %v4299 = vpop.f32.mrb[0].mxu0
    %v4300 = vadd.f32 %v3753, %v4299
    %v4301 = vpop.f32.mrb[0].mxu0
    %v4302 = vadd.f32 %v3757, %v4301
    %4303 = vmatprep.mubr.bf16.mxu0 %v3728
    %4304 = vmatmul.mubr.bf16.gmra.mrb[0].mxu0 %v3727
    %v4305 = vpop.f32.mrb[0].mxu0
    %v4306 = vadd.f32 %v3753, %v4305
    %v4307 = vpop.f32.mrb[0].mxu0
    %v4308 = vadd.f32 %v3757, %v4307
    %v4309 = vpop.f32.mrb[0].mxu0
    %v4310 = vadd.f32 %v3753, %v4309
    %v4311 = vpop.f32.mrb[0].mxu0
    %v4312 = vadd.f32 %v3757, %v4311
    %4313 = vmatprep.mubr.bf16.mxu0 %v3730
    %4314 = vmatmul.mubr.bf16.gmra.mrb[0].mxu0 %v3729
    %v4315 = vpop.f32.mrb[0].mxu0
    %v4316 = vadd.f32 %v3753, %v4315
    %v4317 = vpop.f32.mrb[0].mxu0
    %v4318 = vadd.f32 %v3757, %v4317
    %v4319 = vpop.f32.mrb[0].mxu0
    %v4320 = vadd.f32 %v3753, %v4319
    %v4321 = vpop.f32.mrb[0].mxu0
    %v4322 = vadd.f32 %v3757, %v4321
    %4323 = vmatprep.mubr.bf16.mxu0 %v3732
    %4324 = vmatmul.mubr.bf16.gmra.mrb[0].mxu0 %v3731
    %v4325 = vpop.f32.mrb[0].mxu0
    %v4326 = vadd.f32 %v3753, %v4325
    %v4327 = vpop.f32.mrb[0].mxu0
    %v4328 = vadd.f32 %v3757, %v4327
    %v4329 = vpop.f32.mrb[0].mxu0
    %v4330 = vadd.f32 %v3753, %v4329
    %v4331 = vpop.f32.mrb[0].mxu0
    %v4332 = vadd.f32 %v3757, %v4331
    %4333 = vmatprep.mubr.bf16.mxu0 %v3734
    %4334 = vmatmul.mubr.bf16.gmra.mrb[0].mxu0 %v3733
    %v4335 = vpop.f32.mrb[0].mxu0
    %v4336 = vadd.f32 %v3753, %v4335
    %v4337 = vpop.f32.mrb[0].mxu0
    %v4338 = vadd.f32 %v3757, %v4337
    %v4339 = vpop.f32.mrb[0].mxu0
    %v4340 = vadd.f32 %v3753, %v4339
    %v4341 = vpop.f32.mrb[0].mxu0
    %v4342 = vadd.f32 %v3757, %v4341
    %4343 = vmatprep.mubr.bf16.mxu0 %v3736
    %4344 = vmatmul.mubr.bf16.gmra.mrb[0].mxu0 %v3735
    %v4345 = vpop.f32.mrb[0].mxu0
    %v4346 = vadd.f32 %v3753, %v4345
    %v4347 = vpop.f32.mrb[0].mxu0
    %v4348 = vadd.f32 %v3757, %v4347
    %v4349 = vpop.f32.mrb[0].mxu0
    %v4350 = vadd.f32 %v3753, %v4349
    %v4351 = vpop.f32.mrb[0].mxu0
    %v4352 = vadd.f32 %v3757, %v4351
    %4353 = vmatprep.mubr.bf16.mxu0 %v3738
    %4354 = vmatmul.mubr.bf16.gmra.mrb[0].mxu0 %v3737
    %v4355 = vpop.f32.mrb[0].mxu0
    %v4356 = vadd.f32 %v3753, %v4355
    %v4357 = vpop.f32.mrb[0].mxu0
    %v4358 = vadd.f32 %v3757, %v4357
    %v4359 = vpop.f32.mrb[0].mxu0
    %v4360 = vadd.f32 %v3753, %v4359
    %v4361 = vpop.f32.mrb[0].mxu0
    %v4362 = vadd.f32 %v3757, %v4361
    %4363 = vmatprep.mubr.bf16.mxu0 %v3740
    %4364 = vmatmul.mubr.bf16.gmra.mrb[0].mxu0 %v3739
    %v4365 = vpop.f32.mrb[0].mxu0
    %v4366 = vadd.f32 %v3753, %v4365
    %v4367 = vpop.f32.mrb[0].mxu0
    %v4368 = vadd.f32 %v3757, %v4367
    %v4369 = vpop.f32.mrb[0].mxu0
    %v4370 = vadd.f32 %v3753, %v4369
    %v4371 = vpop.f32.mrb[0].mxu0
    %v4372 = vadd.f32 %v3757, %v4371
    %4373 = vmatprep.mubr.bf16.mxu0 %v3742
    %4374 = vmatmul.mubr.bf16.gmra.mrb[0].mxu0 %v3741
    %v4375 = vpop.f32.mrb[0].mxu0
    %v4376 = vadd.f32 %v3753, %v4375
    %v4377 = vpop.f32.mrb[0].mxu0
    %v4378 = vadd.f32 %v3757, %v4377
    %v4379 = vpop.f32.mrb[0].mxu0
    %v4380 = vadd.f32 %v3753, %v4379
    %v4381 = vpop.f32.mrb[0].mxu0
    %v4382 = vadd.f32 %v3757, %v4381
    %4383 = vmatprep.mubr.bf16.mxu0 %v3744
    %4384 = vmatmul.mubr.bf16.gmra.mrb[0].mxu0 %v3743
    %v4385 = vpop.f32.mrb[0].mxu0
    %v4386 = vadd.f32 %v3753, %v4385
    %v4387 = vpop.f32.mrb[0].mxu0
    %v4388 = vadd.f32 %v3757, %v4387
    %v4389 = vpop.f32.mrb[0].mxu0
    %v4390 = vadd.f32 %v3753, %v4389
    %v4391 = vpop.f32.mrb[0].mxu0
    %v4392 = vadd.f32 %v3757, %v4391
    %4393 = vmatprep.mubr.bf16.mxu0 %v3746
    %4394 = vmatmul.mubr.bf16.gmra.mrb[0].mxu0 %v3745
    %v4395 = vpop.f32.mrb[0].mxu0
    %v4396 = vadd.f32 %v3753, %v4395
    %v4397 = vpop.f32.mrb[0].mxu0
    %v4398 = vadd.f32 %v3757, %v4397
    %v4399 = vpop.f32.mrb[0].mxu0
    %v4400 = vadd.f32 %v3753, %v4399
    %v4401 = vpop.f32.mrb[0].mxu0
    %v4402 = vadd.f32 %v3757, %v4401
    %4403 = vmatprep.mubr.bf16.mxu0 %v3748
    %4404 = vmatmul.mubr.bf16.gmra.mrb[0].mxu0 %v3747
    %v4405 = vpop.f32.mrb[0].mxu0
    %v4406 = vadd.f32 %v3753, %v4405
    %v4407 = vpop.f32.mrb[0].mxu0
    %v4408 = vadd.f32 %v3757, %v4407
    %v4409 = vpop.f32.mrb[0].mxu0
    %v4410 = vadd.f32 %v3753, %v4409
    %v4411 = vpop.f32.mrb[0].mxu0
    %v4412 = vadd.f32 %v3757, %v4411
    %4413 = vdwg.mxu0
    %4414 = vmatprep.subr.bf16.mxu0 %v4034
    %4415 = vmatpush1.bf16.msra.mxu0 %v4033
    %4416 = vmatprep.subr.bf16.mxu0 %v4039
    %4417 = vmatpush1.bf16.msra.mxu0 %v4038
    %4418 = vmatprep.subr.bf16.mxu0 %v4044
    %4419 = vmatpush1.bf16.msra.mxu0 %v4043
    %4420 = vmatprep.subr.bf16.mxu0 %v4049
    %4421 = vmatpush1.bf16.msra.mxu0 %v4048
    %4422 = vmatprep.subr.bf16.mxu0 %v4054
    %4423 = vmatpush1.bf16.msra.mxu0 %v4053
    %4424 = vmatprep.subr.bf16.mxu0 %v4059
    %4425 = vmatpush1.bf16.msra.mxu0 %v4058
    %4426 = vmatprep.subr.bf16.mxu0 %v4064
    %4427 = vmatpush1.bf16.msra.mxu0 %v4063
    %4428 = vmatprep.subr.bf16.mxu0 %v4069
    %4429 = vmatpush1.bf16.msra.mxu0 %v4068
    %4430 = vmatprep.subr.bf16.mxu0 %v4074
    %4431 = vmatpush1.bf16.msra.mxu0 %v4073
    %4432 = vmatprep.subr.bf16.mxu0 %v4079
    %4433 = vmatpush1.bf16.msra.mxu0 %v4078
    %4434 = vmatprep.subr.bf16.mxu0 %v4084
    %4435 = vmatpush1.bf16.msra.mxu0 %v4083
    %4436 = vmatprep.subr.bf16.mxu0 %v4089
    %4437 = vmatpush1.bf16.msra.mxu0 %v4088
    %4438 = vmatprep.subr.bf16.mxu0 %v4094
    %4439 = vmatpush1.bf16.msra.mxu0 %v4093
    %4440 = vmatprep.subr.bf16.mxu0 %v4099
    %4441 = vmatpush1.bf16.msra.mxu0 %v4098
    %4442 = vmatprep.subr.bf16.mxu0 %v4104
    %4443 = vmatpush1.bf16.msra.mxu0 %v4103
    %4444 = vmatprep.subr.bf16.mxu0 %v4109
    %4445 = vmatpush1.bf16.msra.mxu0 %v4108
    %4446 = vmatprep.mubr.bf16.mxu0 %v3712
    %4447 = vmatmul.mubr.bf16.gmra.mrb[0].mxu0 %v3711
    %v4448 = vpop.f32.mrb[0].mxu0
    %v4449 = vadd.f32 %v3761, %v4448
    %v4450 = vpop.f32.mrb[0].mxu0
    %v4451 = vadd.f32 %v3765, %v4450
    %v4452 = vpop.f32.mrb[0].mxu0
    %v4453 = vadd.f32 %v3761, %v4452
    %v4454 = vpop.f32.mrb[0].mxu0
    %v4455 = vadd.f32 %v3765, %v4454
    %4456 = vmatprep.mubr.bf16.mxu0 %v3714
    %4457 = vmatmul.mubr.bf16.gmra.mrb[0].mxu0 %v3713
    %v4458 = vpop.f32.mrb[0].mxu0
    %v4459 = vadd.f32 %v3761, %v4458
    %v4460 = vpop.f32.mrb[0].mxu0
    %v4461 = vadd.f32 %v3765, %v4460
    %v4462 = vpop.f32.mrb[0].mxu0
    %v4463 = vadd.f32 %v3761, %v4462
    %v4464 = vpop.f32.mrb[0].mxu0
    %v4465 = vadd.f32 %v3765, %v4464
    %4466 = vmatprep.mubr.bf16.mxu0 %v3716
    %4467 = vmatmul.mubr.bf16.gmra.mrb[0].mxu0 %v3715
    %v4468 = vpop.f32.mrb[0].mxu0
    %v4469 = vadd.f32 %v3761, %v4468
    %v4470 = vpop.f32.mrb[0].mxu0
    %v4471 = vadd.f32 %v3765, %v4470
    %v4472 = vpop.f32.mrb[0].mxu0
    %v4473 = vadd.f32 %v3761, %v4472
    %v4474 = vpop.f32.mrb[0].mxu0
    %v4475 = vadd.f32 %v3765, %v4474
    %4476 = vmatprep.mubr.bf16.mxu0 %v3718
    %4477 = vmatmul.mubr.bf16.gmra.mrb[0].mxu0 %v3717
    %v4478 = vpop.f32.mrb[0].mxu0
    %v4479 = vadd.f32 %v3761, %v4478
    %v4480 = vpop.f32.mrb[0].mxu0
    %v4481 = vadd.f32 %v3765, %v4480
    %v4482 = vpop.f32.mrb[0].mxu0
    %v4483 = vadd.f32 %v3761, %v4482
    %v4484 = vpop.f32.mrb[0].mxu0
    %v4485 = vadd.f32 %v3765, %v4484
    %4486 = vmatprep.mubr.bf16.mxu0 %v3720
    %4487 = vmatmul.mubr.bf16.gmra.mrb[0].mxu0 %v3719
    %v4488 = vpop.f32.mrb[0].mxu0
    %v4489 = vadd.f32 %v3761, %v4488
    %v4490 = vpop.f32.mrb[0].mxu0
    %v4491 = vadd.f32 %v3765, %v4490
    %v4492 = vpop.f32.mrb[0].mxu0
    %v4493 = vadd.f32 %v3761, %v4492
    %v4494 = vpop.f32.mrb[0].mxu0
    %v4495 = vadd.f32 %v3765, %v4494
    %4496 = vmatprep.mubr.bf16.mxu0 %v3722
    %4497 = vmatmul.mubr.bf16.gmra.mrb[0].mxu0 %v3721
    %v4498 = vpop.f32.mrb[0].mxu0
    %v4499 = vadd.f32 %v3761, %v4498
    %v4500 = vpop.f32.mrb[0].mxu0
    %v4501 = vadd.f32 %v3765, %v4500
    %v4502 = vpop.f32.mrb[0].mxu0
    %v4503 = vadd.f32 %v3761, %v4502
    %v4504 = vpop.f32.mrb[0].mxu0
    %v4505 = vadd.f32 %v3765, %v4504
    %4506 = vmatprep.mubr.bf16.mxu0 %v3724
    %4507 = vmatmul.mubr.bf16.gmra.mrb[0].mxu0 %v3723
    %v4508 = vpop.f32.mrb[0].mxu0
    %v4509 = vadd.f32 %v3761, %v4508
    %v4510 = vpop.f32.mrb[0].mxu0
    %v4511 = vadd.f32 %v3765, %v4510
    %v4512 = vpop.f32.mrb[0].mxu0
    %v4513 = vadd.f32 %v3761, %v4512
    %v4514 = vpop.f32.mrb[0].mxu0
    %v4515 = vadd.f32 %v3765, %v4514
    %4516 = vmatprep.mubr.bf16.mxu0 %v3726
    %4517 = vmatmul.mubr.bf16.gmra.mrb[0].mxu0 %v3725
    %v4518 = vpop.f32.mrb[0].mxu0
    %v4519 = vadd.f32 %v3761, %v4518
    %v4520 = vpop.f32.mrb[0].mxu0
    %v4521 = vadd.f32 %v3765, %v4520
    %v4522 = vpop.f32.mrb[0].mxu0
    %v4523 = vadd.f32 %v3761, %v4522
    %v4524 = vpop.f32.mrb[0].mxu0
    %v4525 = vadd.f32 %v3765, %v4524
    %4526 = vmatprep.mubr.bf16.mxu0 %v3728
    %4527 = vmatmul.mubr.bf16.gmra.mrb[0].mxu0 %v3727
    %v4528 = vpop.f32.mrb[0].mxu0
    %v4529 = vadd.f32 %v3761, %v4528
    %v4530 = vpop.f32.mrb[0].mxu0
    %v4531 = vadd.f32 %v3765, %v4530
    %v4532 = vpop.f32.mrb[0].mxu0
    %v4533 = vadd.f32 %v3761, %v4532
    %v4534 = vpop.f32.mrb[0].mxu0
    %v4535 = vadd.f32 %v3765, %v4534
    %4536 = vmatprep.mubr.bf16.mxu0 %v3730
    %4537 = vmatmul.mubr.bf16.gmra.mrb[0].mxu0 %v3729
    %v4538 = vpop.f32.mrb[0].mxu0
    %v4539 = vadd.f32 %v3761, %v4538
    %v4540 = vpop.f32.mrb[0].mxu0
    %v4541 = vadd.f32 %v3765, %v4540
    %v4542 = vpop.f32.mrb[0].mxu0
    %v4543 = vadd.f32 %v3761, %v4542
    %v4544 = vpop.f32.mrb[0].mxu0
    %v4545 = vadd.f32 %v3765, %v4544
    %4546 = vmatprep.mubr.bf16.mxu0 %v3732
    %4547 = vmatmul.mubr.bf16.gmra.mrb[0].mxu0 %v3731
    %v4548 = vpop.f32.mrb[0].mxu0
    %v4549 = vadd.f32 %v3761, %v4548
    %v4550 = vpop.f32.mrb[0].mxu0
    %v4551 = vadd.f32 %v3765, %v4550
    %v4552 = vpop.f32.mrb[0].mxu0
    %v4553 = vadd.f32 %v3761, %v4552
    %v4554 = vpop.f32.mrb[0].mxu0
    %v4555 = vadd.f32 %v3765, %v4554
    %4556 = vmatprep.mubr.bf16.mxu0 %v3734
    %4557 = vmatmul.mubr.bf16.gmra.mrb[0].mxu0 %v3733
    %v4558 = vpop.f32.mrb[0].mxu0
    %v4559 = vadd.f32 %v3761, %v4558
    %v4560 = vpop.f32.mrb[0].mxu0
    %v4561 = vadd.f32 %v3765, %v4560
    %v4562 = vpop.f32.mrb[0].mxu0
    %v4563 = vadd.f32 %v3761, %v4562
    %v4564 = vpop.f32.mrb[0].mxu0
    %v4565 = vadd.f32 %v3765, %v4564
    %4566 = vmatprep.mubr.bf16.mxu0 %v3736
    %4567 = vmatmul.mubr.bf16.gmra.mrb[0].mxu0 %v3735
    %v4568 = vpop.f32.mrb[0].mxu0
    %v4569 = vadd.f32 %v3761, %v4568
    %v4570 = vpop.f32.mrb[0].mxu0
    %v4571 = vadd.f32 %v3765, %v4570
    %v4572 = vpop.f32.mrb[0].mxu0
    %v4573 = vadd.f32 %v3761, %v4572
    %v4574 = vpop.f32.mrb[0].mxu0
    %v4575 = vadd.f32 %v3765, %v4574
    %4576 = vmatprep.mubr.bf16.mxu0 %v3738
    %4577 = vmatmul.mubr.bf16.gmra.mrb[0].mxu0 %v3737
    %v4578 = vpop.f32.mrb[0].mxu0
    %v4579 = vadd.f32 %v3761, %v4578
    %v4580 = vpop.f32.mrb[0].mxu0
    %v4581 = vadd.f32 %v3765, %v4580
    %v4582 = vpop.f32.mrb[0].mxu0
    %v4583 = vadd.f32 %v3761, %v4582
    %v4584 = vpop.f32.mrb[0].mxu0
    %v4585 = vadd.f32 %v3765, %v4584
    %4586 = vmatprep.mubr.bf16.mxu0 %v3740
    %4587 = vmatmul.mubr.bf16.gmra.mrb[0].mxu0 %v3739
    %v4588 = vpop.f32.mrb[0].mxu0
    %v4589 = vadd.f32 %v3761, %v4588
    %v4590 = vpop.f32.mrb[0].mxu0
    %v4591 = vadd.f32 %v3765, %v4590
    %v4592 = vpop.f32.mrb[0].mxu0
    %v4593 = vadd.f32 %v3761, %v4592
    %v4594 = vpop.f32.mrb[0].mxu0
    %v4595 = vadd.f32 %v3765, %v4594
    %4596 = vmatprep.mubr.bf16.mxu0 %v3742
    %4597 = vmatmul.mubr.bf16.gmra.mrb[0].mxu0 %v3741
    %v4598 = vpop.f32.mrb[0].mxu0
    %v4599 = vadd.f32 %v3761, %v4598
    %v4600 = vpop.f32.mrb[0].mxu0
    %v4601 = vadd.f32 %v3765, %v4600
    %v4602 = vpop.f32.mrb[0].mxu0
    %v4603 = vadd.f32 %v3761, %v4602
    %v4604 = vpop.f32.mrb[0].mxu0
    %v4605 = vadd.f32 %v3765, %v4604
    %4606 = vmatprep.mubr.bf16.mxu0 %v3744
    %4607 = vmatmul.mubr.bf16.gmra.mrb[0].mxu0 %v3743
    %v4608 = vpop.f32.mrb[0].mxu0
    %v4609 = vadd.f32 %v3761, %v4608
    %v4610 = vpop.f32.mrb[0].mxu0
    %v4611 = vadd.f32 %v3765, %v4610
    %v4612 = vpop.f32.mrb[0].mxu0
    %v4613 = vadd.f32 %v3761, %v4612
    %v4614 = vpop.f32.mrb[0].mxu0
    %v4615 = vadd.f32 %v3765, %v4614
    %4616 = vmatprep.mubr.bf16.mxu0 %v3746
    %4617 = vmatmul.mubr.bf16.gmra.mrb[0].mxu0 %v3745
    %v4618 = vpop.f32.mrb[0].mxu0
    %v4619 = vadd.f32 %v3761, %v4618
    %v4620 = vpop.f32.mrb[0].mxu0
    %v4621 = vadd.f32 %v3765, %v4620
    %v4622 = vpop.f32.mrb[0].mxu0
    %v4623 = vadd.f32 %v3761, %v4622
    %v4624 = vpop.f32.mrb[0].mxu0
    %v4625 = vadd.f32 %v3765, %v4624
    %4626 = vmatprep.mubr.bf16.mxu0 %v3748
    %4627 = vmatmul.mubr.bf16.gmra.mrb[0].mxu0 %v3747
    %v4628 = vpop.f32.mrb[0].mxu0
    %v4629 = vadd.f32 %v3761, %v4628
    %v4630 = vpop.f32.mrb[0].mxu0
    %v4631 = vadd.f32 %v3765, %v4630
    %v4632 = vpop.f32.mrb[0].mxu0
    %v4633 = vadd.f32 %v3761, %v4632
    %v4634 = vpop.f32.mrb[0].mxu0
    %v4635 = vadd.f32 %v3765, %v4634
    %4636 = vdwg.mxu0
    %4637 = vmatprep.subr.bf16.mxu0 0
    %4638 = vmatpush1.bf16.msra.mxu0 %v4035
    %4639 = vmatprep.subr.bf16.mxu0 0
    %4640 = vmatpush1.bf16.msra.mxu0 %v4040
    %4641 = vmatprep.subr.bf16.mxu0 0
    %4642 = vmatpush1.bf16.msra.mxu0 %v4045
    %4643 = vmatprep.subr.bf16.mxu0 0
    %4644 = vmatpush1.bf16.msra.mxu0 %v4050
    %4645 = vmatprep.subr.bf16.mxu0 0
    %4646 = vmatpush1.bf16.msra.mxu0 %v4055
    %4647 = vmatprep.subr.bf16.mxu0 0
    %4648 = vmatpush1.bf16.msra.mxu0 %v4060
    %4649 = vmatprep.subr.bf16.mxu0 0
    %4650 = vmatpush1.bf16.msra.mxu0 %v4065
    %4651 = vmatprep.subr.bf16.mxu0 0
    %4652 = vmatpush1.bf16.msra.mxu0 %v4070
    %4653 = vmatprep.subr.bf16.mxu0 0
    %4654 = vmatpush1.bf16.msra.mxu0 %v4075
    %4655 = vmatprep.subr.bf16.mxu0 0
    %4656 = vmatpush1.bf16.msra.mxu0 %v4080
    %4657 = vmatprep.subr.bf16.mxu0 0
    %4658 = vmatpush1.bf16.msra.mxu0 %v4085
    %4659 = vmatprep.subr.bf16.mxu0 0
    %4660 = vmatpush1.bf16.msra.mxu0 %v4090
    %4661 = vmatprep.subr.bf16.mxu0 0
    %4662 = vmatpush1.bf16.msra.mxu0 %v4095
    %4663 = vmatprep.subr.bf16.mxu0 0
    %4664 = vmatpush1.bf16.msra.mxu0 %v4100
    %4665 = vmatprep.subr.bf16.mxu0 0
    %4666 = vmatpush1.bf16.msra.mxu0 %v4105
    %4667 = vmatprep.subr.bf16.mxu0 0
    %4668 = vmatpush1.bf16.msra.mxu0 %v4110
    %4669 = vmatprep.mubr.bf16.mxu0 %v3712
    %4670 = vmatmul.mubr.bf16.gmra.mrb[0].mxu0 %v3711
    %v4671 = vpop.f32.mrb[0].mxu0
    %v4672 = vadd.f32 %v3769, %v4671
    %v4673 = vpop.f32.mrb[0].mxu0
    %v4674 = vpop.f32.mrb[0].mxu0
    %v4675 = vadd.f32 %v3769, %v4674
    %v4676 = vpop.f32.mrb[0].mxu0
    %4677 = vmatprep.mubr.bf16.mxu0 %v3714
    %4678 = vmatmul.mubr.bf16.gmra.mrb[0].mxu0 %v3713
    %v4679 = vpop.f32.mrb[0].mxu0
    %v4680 = vadd.f32 %v3769, %v4679
    %v4681 = vpop.f32.mrb[0].mxu0
    %v4682 = vpop.f32.mrb[0].mxu0
    %v4683 = vadd.f32 %v3769, %v4682
    %v4684 = vpop.f32.mrb[0].mxu0
    %4685 = vmatprep.mubr.bf16.mxu0 %v3716
    %4686 = vmatmul.mubr.bf16.gmra.mrb[0].mxu0 %v3715
    %v4687 = vpop.f32.mrb[0].mxu0
    %v4688 = vadd.f32 %v3769, %v4687
    %v4689 = vpop.f32.mrb[0].mxu0
    %v4690 = vpop.f32.mrb[0].mxu0
    %v4691 = vadd.f32 %v3769, %v4690
    %v4692 = vpop.f32.mrb[0].mxu0
    %4693 = vmatprep.mubr.bf16.mxu0 %v3718
    %4694 = vmatmul.mubr.bf16.gmra.mrb[0].mxu0 %v3717
    %v4695 = vpop.f32.mrb[0].mxu0
    %v4696 = vadd.f32 %v3769, %v4695
    %v4697 = vpop.f32.mrb[0].mxu0
    %v4698 = vpop.f32.mrb[0].mxu0
    %v4699 = vadd.f32 %v3769, %v4698
    %v4700 = vpop.f32.mrb[0].mxu0
    %4701 = vmatprep.mubr.bf16.mxu0 %v3720
    %4702 = vmatmul.mubr.bf16.gmra.mrb[0].mxu0 %v3719
    %v4703 = vpop.f32.mrb[0].mxu0
    %v4704 = vadd.f32 %v3769, %v4703
    %v4705 = vpop.f32.mrb[0].mxu0
    %v4706 = vpop.f32.mrb[0].mxu0
    %v4707 = vadd.f32 %v3769, %v4706
    %v4708 = vpop.f32.mrb[0].mxu0
    %4709 = vmatprep.mubr.bf16.mxu0 %v3722
    %4710 = vmatmul.mubr.bf16.gmra.mrb[0].mxu0 %v3721
    %v4711 = vpop.f32.mrb[0].mxu0
    %v4712 = vadd.f32 %v3769, %v4711
    %v4713 = vpop.f32.mrb[0].mxu0
    %v4714 = vpop.f32.mrb[0].mxu0
    %v4715 = vadd.f32 %v3769, %v4714
    %v4716 = vpop.f32.mrb[0].mxu0
    %4717 = vmatprep.mubr.bf16.mxu0 %v3724
    %4718 = vmatmul.mubr.bf16.gmra.mrb[0].mxu0 %v3723
    %v4719 = vpop.f32.mrb[0].mxu0
    %v4720 = vadd.f32 %v3769, %v4719
    %v4721 = vpop.f32.mrb[0].mxu0
    %v4722 = vpop.f32.mrb[0].mxu0
    %v4723 = vadd.f32 %v3769, %v4722
    %v4724 = vpop.f32.mrb[0].mxu0
    %4725 = vmatprep.mubr.bf16.mxu0 %v3726
    %4726 = vmatmul.mubr.bf16.gmra.mrb[0].mxu0 %v3725
    %v4727 = vpop.f32.mrb[0].mxu0
    %v4728 = vadd.f32 %v3769, %v4727
    %v4729 = vpop.f32.mrb[0].mxu0
    %v4730 = vpop.f32.mrb[0].mxu0
    %v4731 = vadd.f32 %v3769, %v4730
    %v4732 = vpop.f32.mrb[0].mxu0
    %4733 = vmatprep.mubr.bf16.mxu0 %v3728
    %4734 = vmatmul.mubr.bf16.gmra.mrb[0].mxu0 %v3727
    %v4735 = vpop.f32.mrb[0].mxu0
    %v4736 = vadd.f32 %v3769, %v4735
    %v4737 = vpop.f32.mrb[0].mxu0
    %v4738 = vpop.f32.mrb[0].mxu0
    %v4739 = vadd.f32 %v3769, %v4738
    %v4740 = vpop.f32.mrb[0].mxu0
    %4741 = vmatprep.mubr.bf16.mxu0 %v3730
    %4742 = vmatmul.mubr.bf16.gmra.mrb[0].mxu0 %v3729
    %v4743 = vpop.f32.mrb[0].mxu0
    %v4744 = vadd.f32 %v3769, %v4743
    %v4745 = vpop.f32.mrb[0].mxu0
    %v4746 = vpop.f32.mrb[0].mxu0
    %v4747 = vadd.f32 %v3769, %v4746
    %v4748 = vpop.f32.mrb[0].mxu0
    %4749 = vmatprep.mubr.bf16.mxu0 %v3732
    %4750 = vmatmul.mubr.bf16.gmra.mrb[0].mxu0 %v3731
    %v4751 = vpop.f32.mrb[0].mxu0
    %v4752 = vadd.f32 %v3769, %v4751
    %v4753 = vpop.f32.mrb[0].mxu0
    %v4754 = vpop.f32.mrb[0].mxu0
    %v4755 = vadd.f32 %v3769, %v4754
    %v4756 = vpop.f32.mrb[0].mxu0
    %4757 = vmatprep.mubr.bf16.mxu0 %v3734
    %4758 = vmatmul.mubr.bf16.gmra.mrb[0].mxu0 %v3733
    %v4759 = vpop.f32.mrb[0].mxu0
    %v4760 = vadd.f32 %v3769, %v4759
    %v4761 = vpop.f32.mrb[0].mxu0
    %v4762 = vpop.f32.mrb[0].mxu0
    %v4763 = vadd.f32 %v3769, %v4762
    %v4764 = vpop.f32.mrb[0].mxu0
    %4765 = vmatprep.mubr.bf16.mxu0 %v3736
    %4766 = vmatmul.mubr.bf16.gmra.mrb[0].mxu0 %v3735
    %v4767 = vpop.f32.mrb[0].mxu0
    %v4768 = vadd.f32 %v3769, %v4767
    %v4769 = vpop.f32.mrb[0].mxu0
    %v4770 = vpop.f32.mrb[0].mxu0
    %v4771 = vadd.f32 %v3769, %v4770
    %v4772 = vpop.f32.mrb[0].mxu0
    %4773 = vmatprep.mubr.bf16.mxu0 %v3738
    %4774 = vmatmul.mubr.bf16.gmra.mrb[0].mxu0 %v3737
    %v4775 = vpop.f32.mrb[0].mxu0
    %v4776 = vadd.f32 %v3769, %v4775
    %v4777 = vpop.f32.mrb[0].mxu0
    %v4778 = vpop.f32.mrb[0].mxu0
    %v4779 = vadd.f32 %v3769, %v4778
    %v4780 = vpop.f32.mrb[0].mxu0
    %4781 = vmatprep.mubr.bf16.mxu0 %v3740
    %4782 = vmatmul.mubr.bf16.gmra.mrb[0].mxu0 %v3739
    %v4783 = vpop.f32.mrb[0].mxu0
    %v4784 = vadd.f32 %v3769, %v4783
    %v4785 = vpop.f32.mrb[0].mxu0
    %v4786 = vpop.f32.mrb[0].mxu0
    %v4787 = vadd.f32 %v3769, %v4786
    %v4788 = vpop.f32.mrb[0].mxu0
    %4789 = vmatprep.mubr.bf16.mxu0 %v3742
    %4790 = vmatmul.mubr.bf16.gmra.mrb[0].mxu0 %v3741
    %v4791 = vpop.f32.mrb[0].mxu0
    %v4792 = vadd.f32 %v3769, %v4791
    %v4793 = vpop.f32.mrb[0].mxu0
    %v4794 = vpop.f32.mrb[0].mxu0
    %v4795 = vadd.f32 %v3769, %v4794
    %v4796 = vpop.f32.mrb[0].mxu0
    %4797 = vmatprep.mubr.bf16.mxu0 %v3744
    %4798 = vmatmul.mubr.bf16.gmra.mrb[0].mxu0 %v3743
    %v4799 = vpop.f32.mrb[0].mxu0
    %v4800 = vadd.f32 %v3769, %v4799
    %v4801 = vpop.f32.mrb[0].mxu0
    %v4802 = vpop.f32.mrb[0].mxu0
    %v4803 = vadd.f32 %v3769, %v4802
    %v4804 = vpop.f32.mrb[0].mxu0
    %4805 = vmatprep.mubr.bf16.mxu0 %v3746
    %4806 = vmatmul.mubr.bf16.gmra.mrb[0].mxu0 %v3745
    %v4807 = vpop.f32.mrb[0].mxu0
    %v4808 = vadd.f32 %v3769, %v4807
    %v4809 = vpop.f32.mrb[0].mxu0
    %v4810 = vpop.f32.mrb[0].mxu0
    %v4811 = vadd.f32 %v3769, %v4810
    %v4812 = vpop.f32.mrb[0].mxu0
    %4813 = vmatprep.mubr.bf16.mxu0 %v3748
    %4814 = vmatmul.mubr.bf16.gmra.mrb[0].mxu0 %v3747
    %v4815 = vpop.f32.mrb[0].mxu0
    %v4816 = vadd.f32 %v3769, %v4815
    %v4817 = vpop.f32.mrb[0].mxu0
    %v4818 = vpop.f32.mrb[0].mxu0
    %v4819 = vadd.f32 %v3769, %v4818
    %v4820 = vpop.f32.mrb[0].mxu0
    %4821 = vdwg.mxu0
    %v4822 = vxor.u32 %v4226, 2147483648
    %v4823 = vxor.u32 %v4228, 2147483648
    %v4824 = vxor.u32 %v4449, 2147483648
    %v4825 = vxor.u32 %v4451, 2147483648
    %v4826 = vxor.u32 %v4672, 2147483648
    %v4827 = vxor.u32 %v4230, 2147483648
    %v4828 = vxor.u32 %v4232, 2147483648
    %v4829 = vxor.u32 %v4453, 2147483648
    %v4830 = vxor.u32 %v4455, 2147483648
    %v4831 = vxor.u32 %v4675, 2147483648
    %v4832 = vxor.u32 %v4236, 2147483648
    %v4833 = vxor.u32 %v4238, 2147483648
    %v4834 = vxor.u32 %v4459, 2147483648
    %v4835 = vxor.u32 %v4461, 2147483648
    %v4836 = vxor.u32 %v4680, 2147483648
    %v4837 = vxor.u32 %v4240, 2147483648
    %v4838 = vxor.u32 %v4242, 2147483648
    %v4839 = vxor.u32 %v4463, 2147483648
    %v4840 = vxor.u32 %v4465, 2147483648
    %v4841 = vxor.u32 %v4683, 2147483648
    %v4842 = vxor.u32 %v4246, 2147483648
    %v4843 = vxor.u32 %v4248, 2147483648
    %v4844 = vxor.u32 %v4469, 2147483648
    %v4845 = vxor.u32 %v4471, 2147483648
    %v4846 = vxor.u32 %v4688, 2147483648
    %v4847 = vxor.u32 %v4250, 2147483648
    %v4848 = vxor.u32 %v4252, 2147483648
    %v4849 = vxor.u32 %v4473, 2147483648
    %v4850 = vxor.u32 %v4475, 2147483648
    %v4851 = vxor.u32 %v4691, 2147483648
    %v4852 = vxor.u32 %v4256, 2147483648
    %v4853 = vxor.u32 %v4258, 2147483648
    %v4854 = vxor.u32 %v4479, 2147483648
    %v4855 = vxor.u32 %v4481, 2147483648
    %v4856 = vxor.u32 %v4696, 2147483648
    %v4857 = vxor.u32 %v4260, 2147483648
    %v4858 = vxor.u32 %v4262, 2147483648
    %v4859 = vxor.u32 %v4483, 2147483648
    %v4860 = vxor.u32 %v4485, 2147483648
    %v4861 = vxor.u32 %v4699, 2147483648
    %v4862 = vxor.u32 %v4266, 2147483648
    %v4863 = vxor.u32 %v4268, 2147483648
    %v4864 = vxor.u32 %v4489, 2147483648
    %v4865 = vxor.u32 %v4491, 2147483648
    %v4866 = vxor.u32 %v4704, 2147483648
    %v4867 = vxor.u32 %v4270, 2147483648
    %v4868 = vxor.u32 %v4272, 2147483648
    %v4869 = vxor.u32 %v4493, 2147483648
    %v4870 = vxor.u32 %v4495, 2147483648
    %v4871 = vxor.u32 %v4707, 2147483648
    %v4872 = vxor.u32 %v4276, 2147483648
    %v4873 = vxor.u32 %v4278, 2147483648
    %v4874 = vxor.u32 %v4499, 2147483648
    %v4875 = vxor.u32 %v4501, 2147483648
    %v4876 = vxor.u32 %v4712, 2147483648
    %v4877 = vxor.u32 %v4280, 2147483648
    %v4878 = vxor.u32 %v4282, 2147483648
    %v4879 = vxor.u32 %v4503, 2147483648
    %v4880 = vxor.u32 %v4505, 2147483648
    %v4881 = vxor.u32 %v4715, 2147483648
    %v4882 = vxor.u32 %v4286, 2147483648
    %v4883 = vxor.u32 %v4288, 2147483648
    %v4884 = vxor.u32 %v4509, 2147483648
    %v4885 = vxor.u32 %v4511, 2147483648
    %v4886 = vxor.u32 %v4720, 2147483648
    %v4887 = vxor.u32 %v4290, 2147483648
    %v4888 = vxor.u32 %v4292, 2147483648
    %v4889 = vxor.u32 %v4513, 2147483648
    %v4890 = vxor.u32 %v4515, 2147483648
    %v4891 = vxor.u32 %v4723, 2147483648
    %v4892 = vxor.u32 %v4296, 2147483648
    %v4893 = vxor.u32 %v4298, 2147483648
    %v4894 = vxor.u32 %v4519, 2147483648
    %v4895 = vxor.u32 %v4521, 2147483648
    %v4896 = vxor.u32 %v4728, 2147483648
    %v4897 = vxor.u32 %v4300, 2147483648
    %v4898 = vxor.u32 %v4302, 2147483648
    %v4899 = vxor.u32 %v4523, 2147483648
    %v4900 = vxor.u32 %v4525, 2147483648
    %v4901 = vxor.u32 %v4731, 2147483648
    %v4902 = vxor.u32 %v4306, 2147483648
    %v4903 = vxor.u32 %v4308, 2147483648
    %v4904 = vxor.u32 %v4529, 2147483648
    %v4905 = vxor.u32 %v4531, 2147483648
    %v4906 = vxor.u32 %v4736, 2147483648
    %v4907 = vxor.u32 %v4310, 2147483648
    %v4908 = vxor.u32 %v4312, 2147483648
    %v4909 = vxor.u32 %v4533, 2147483648
    %v4910 = vxor.u32 %v4535, 2147483648
    %v4911 = vxor.u32 %v4739, 2147483648
    %v4912 = vxor.u32 %v4316, 2147483648
    %v4913 = vxor.u32 %v4318, 2147483648
    %v4914 = vxor.u32 %v4539, 2147483648
    %v4915 = vxor.u32 %v4541, 2147483648
    %v4916 = vxor.u32 %v4744, 2147483648
    %v4917 = vxor.u32 %v4320, 2147483648
    %v4918 = vxor.u32 %v4322, 2147483648
    %v4919 = vxor.u32 %v4543, 2147483648
    %v4920 = vxor.u32 %v4545, 2147483648
    %v4921 = vxor.u32 %v4747, 2147483648
    %v4922 = vxor.u32 %v4326, 2147483648
    %v4923 = vxor.u32 %v4328, 2147483648
    %v4924 = vxor.u32 %v4549, 2147483648
    %v4925 = vxor.u32 %v4551, 2147483648
    %v4926 = vxor.u32 %v4752, 2147483648
    %v4927 = vxor.u32 %v4330, 2147483648
    %v4928 = vxor.u32 %v4332, 2147483648
    %v4929 = vxor.u32 %v4553, 2147483648
    %v4930 = vxor.u32 %v4555, 2147483648
    %v4931 = vxor.u32 %v4755, 2147483648
    %v4932 = vxor.u32 %v4336, 2147483648
    %v4933 = vxor.u32 %v4338, 2147483648
    %v4934 = vxor.u32 %v4559, 2147483648
    %v4935 = vxor.u32 %v4561, 2147483648
    %v4936 = vxor.u32 %v4760, 2147483648
    %v4937 = vxor.u32 %v4340, 2147483648
    %v4938 = vxor.u32 %v4342, 2147483648
    %v4939 = vxor.u32 %v4563, 2147483648
    %v4940 = vxor.u32 %v4565, 2147483648
    %v4941 = vxor.u32 %v4763, 2147483648
    %v4942 = vxor.u32 %v4346, 2147483648
    %v4943 = vxor.u32 %v4348, 2147483648
    %v4944 = vxor.u32 %v4569, 2147483648
    %v4945 = vxor.u32 %v4571, 2147483648
    %v4946 = vxor.u32 %v4768, 2147483648
    %v4947 = vxor.u32 %v4350, 2147483648
    %v4948 = vxor.u32 %v4352, 2147483648
    %v4949 = vxor.u32 %v4573, 2147483648
    %v4950 = vxor.u32 %v4575, 2147483648
    %v4951 = vxor.u32 %v4771, 2147483648
    %v4952 = vxor.u32 %v4356, 2147483648
    %v4953 = vxor.u32 %v4358, 2147483648
    %v4954 = vxor.u32 %v4579, 2147483648
    %v4955 = vxor.u32 %v4581, 2147483648
    %v4956 = vxor.u32 %v4776, 2147483648
    %v4957 = vxor.u32 %v4360, 2147483648
    %v4958 = vxor.u32 %v4362, 2147483648
    %v4959 = vxor.u32 %v4583, 2147483648
    %v4960 = vxor.u32 %v4585, 2147483648
    %v4961 = vxor.u32 %v4779, 2147483648
    %v4962 = vxor.u32 %v4366, 2147483648
    %v4963 = vxor.u32 %v4368, 2147483648
    %v4964 = vxor.u32 %v4589, 2147483648
    %v4965 = vxor.u32 %v4591, 2147483648
    %v4966 = vxor.u32 %v4784, 2147483648
    %v4967 = vxor.u32 %v4370, 2147483648
    %v4968 = vxor.u32 %v4372, 2147483648
    %v4969 = vxor.u32 %v4593, 2147483648
    %v4970 = vxor.u32 %v4595, 2147483648
    %v4971 = vxor.u32 %v4787, 2147483648
    %v4972 = vxor.u32 %v4376, 2147483648
    %v4973 = vxor.u32 %v4378, 2147483648
    %v4974 = vxor.u32 %v4599, 2147483648
    %v4975 = vxor.u32 %v4601, 2147483648
    %v4976 = vxor.u32 %v4792, 2147483648
    %v4977 = vxor.u32 %v4380, 2147483648
    %v4978 = vxor.u32 %v4382, 2147483648
    %v4979 = vxor.u32 %v4603, 2147483648
    %v4980 = vxor.u32 %v4605, 2147483648
    %v4981 = vxor.u32 %v4795, 2147483648
    %v4982 = vxor.u32 %v4386, 2147483648
    %v4983 = vxor.u32 %v4388, 2147483648
    %v4984 = vxor.u32 %v4609, 2147483648
    %v4985 = vxor.u32 %v4611, 2147483648
    %v4986 = vxor.u32 %v4800, 2147483648
    %v4987 = vxor.u32 %v4390, 2147483648
    %v4988 = vxor.u32 %v4392, 2147483648
    %v4989 = vxor.u32 %v4613, 2147483648
    %v4990 = vxor.u32 %v4615, 2147483648
    %v4991 = vxor.u32 %v4803, 2147483648
    %v4992 = vxor.u32 %v4396, 2147483648
    %v4993 = vxor.u32 %v4398, 2147483648
    %v4994 = vxor.u32 %v4619, 2147483648
    %v4995 = vxor.u32 %v4621, 2147483648
    %v4996 = vxor.u32 %v4808, 2147483648
    %v4997 = vxor.u32 %v4400, 2147483648
    %v4998 = vxor.u32 %v4402, 2147483648
    %v4999 = vxor.u32 %v4623, 2147483648
    %v5000 = vxor.u32 %v4625, 2147483648
    %v5001 = vxor.u32 %v4811, 2147483648
    %v5002 = vxor.u32 %v4406, 2147483648
    %v5003 = vxor.u32 %v4408, 2147483648
    %v5004 = vxor.u32 %v4629, 2147483648
    %v5005 = vxor.u32 %v4631, 2147483648
    %v5006 = vxor.u32 %v4816, 2147483648
    %v5007 = vxor.u32 %v4410, 2147483648
    %v5008 = vxor.u32 %v4412, 2147483648
    %v5009 = vxor.u32 %v4633, 2147483648
    %v5010 = vxor.u32 %v4635, 2147483648
    %v5011 = vxor.u32 %v4819, 2147483648
    %v5012 = vmul.f32 %v4822, 1.442695
    %v5013 = vpow.pop %v5012
    %v5014 = vmul.f32 %v4823, 1.442695
    %v5015 = vpow.pop %v5014
    %v5016 = vmul.f32 %v4824, 1.442695
    %v5017 = vpow.pop %v5016
    %v5018 = vmul.f32 %v4825, 1.442695
    %v5019 = vpow.pop %v5018
    %v5020 = vmul.f32 %v4826, 1.442695
    %v5021 = vpow.pop %v5020
    %v5022 = vmul.f32 %v4827, 1.442695
    %v5023 = vpow.pop %v5022
    %v5024 = vmul.f32 %v4828, 1.442695
    %v5025 = vpow.pop %v5024
    %v5026 = vmul.f32 %v4829, 1.442695
    %v5027 = vpow.pop %v5026
    %v5028 = vmul.f32 %v4830, 1.442695
    %v5029 = vpow.pop %v5028
    %v5030 = vmul.f32 %v4831, 1.442695
    %v5031 = vpow.pop %v5030
    %v5032 = vmul.f32 %v4832, 1.442695
    %v5033 = vpow.pop %v5032
    %v5034 = vmul.f32 %v4833, 1.442695
    %v5035 = vpow.pop %v5034
    %v5036 = vmul.f32 %v4834, 1.442695
    %v5037 = vpow.pop %v5036
    %v5038 = vmul.f32 %v4835, 1.442695
    %v5039 = vpow.pop %v5038
    %v5040 = vmul.f32 %v4836, 1.442695
    %v5041 = vpow.pop %v5040
    %v5042 = vmul.f32 %v4837, 1.442695
    %v5043 = vpow.pop %v5042
    %v5044 = vmul.f32 %v4838, 1.442695
    %v5045 = vpow.pop %v5044
    %v5046 = vmul.f32 %v4839, 1.442695
    %v5047 = vpow.pop %v5046
    %v5048 = vmul.f32 %v4840, 1.442695
    %v5049 = vpow.pop %v5048
    %v5050 = vmul.f32 %v4841, 1.442695
    %v5051 = vpow.pop %v5050
    %v5052 = vmul.f32 %v4842, 1.442695
    %v5053 = vpow.pop %v5052
    %v5054 = vmul.f32 %v4843, 1.442695
    %v5055 = vpow.pop %v5054
    %v5056 = vmul.f32 %v4844, 1.442695
    %v5057 = vpow.pop %v5056
    %v5058 = vmul.f32 %v4845, 1.442695
    %v5059 = vpow.pop %v5058
    %v5060 = vmul.f32 %v4846, 1.442695
    %v5061 = vpow.pop %v5060
    %v5062 = vmul.f32 %v4847, 1.442695
    %v5063 = vpow.pop %v5062
    %v5064 = vmul.f32 %v4848, 1.442695
    %v5065 = vpow.pop %v5064
    %v5066 = vmul.f32 %v4849, 1.442695
    %v5067 = vpow.pop %v5066
    %v5068 = vmul.f32 %v4850, 1.442695
    %v5069 = vpow.pop %v5068
    %v5070 = vmul.f32 %v4851, 1.442695
    %v5071 = vpow.pop %v5070
    %v5072 = vmul.f32 %v4852, 1.442695
    %v5073 = vpow.pop %v5072
    %v5074 = vmul.f32 %v4853, 1.442695
    %v5075 = vpow.pop %v5074
    %v5076 = vmul.f32 %v4854, 1.442695
    %v5077 = vpow.pop %v5076
    %v5078 = vmul.f32 %v4855, 1.442695
    %v5079 = vpow.pop %v5078
    %v5080 = vmul.f32 %v4856, 1.442695
    %v5081 = vpow.pop %v5080
    %v5082 = vmul.f32 %v4857, 1.442695
    %v5083 = vpow.pop %v5082
    %v5084 = vmul.f32 %v4858, 1.442695
    %v5085 = vpow.pop %v5084
    %v5086 = vmul.f32 %v4859, 1.442695
    %v5087 = vpow.pop %v5086
    %v5088 = vmul.f32 %v4860, 1.442695
    %v5089 = vpow.pop %v5088
    %v5090 = vmul.f32 %v4861, 1.442695
    %v5091 = vpow.pop %v5090
    %v5092 = vmul.f32 %v4862, 1.442695
    %v5093 = vpow.pop %v5092
    %v5094 = vmul.f32 %v4863, 1.442695
    %v5095 = vpow.pop %v5094
    %v5096 = vmul.f32 %v4864, 1.442695
    %v5097 = vpow.pop %v5096
    %v5098 = vmul.f32 %v4865, 1.442695
    %v5099 = vpow.pop %v5098
    %v5100 = vmul.f32 %v4866, 1.442695
    %v5101 = vpow.pop %v5100
    %v5102 = vmul.f32 %v4867, 1.442695
    %v5103 = vpow.pop %v5102
    %v5104 = vmul.f32 %v4868, 1.442695
    %v5105 = vpow.pop %v5104
    %v5106 = vmul.f32 %v4869, 1.442695
    %v5107 = vpow.pop %v5106
    %v5108 = vmul.f32 %v4870, 1.442695
    %v5109 = vpow.pop %v5108
    %v5110 = vmul.f32 %v4871, 1.442695
    %v5111 = vpow.pop %v5110
    %v5112 = vmul.f32 %v4872, 1.442695
    %v5113 = vpow.pop %v5112
    %v5114 = vmul.f32 %v4873, 1.442695
    %v5115 = vpow.pop %v5114
    %v5116 = vmul.f32 %v4874, 1.442695
    %v5117 = vpow.pop %v5116
    %v5118 = vmul.f32 %v4875, 1.442695
    %v5119 = vpow.pop %v5118
    %v5120 = vmul.f32 %v4876, 1.442695
    %v5121 = vpow.pop %v5120
    %v5122 = vmul.f32 %v4877, 1.442695
    %v5123 = vpow.pop %v5122
    %v5124 = vmul.f32 %v4878, 1.442695
    %v5125 = vpow.pop %v5124
    %v5126 = vmul.f32 %v4879, 1.442695
    %v5127 = vpow.pop %v5126
    %v5128 = vmul.f32 %v4880, 1.442695
    %v5129 = vpow.pop %v5128
    %v5130 = vmul.f32 %v4881, 1.442695
    %v5131 = vpow.pop %v5130
    %v5132 = vmul.f32 %v4882, 1.442695
    %v5133 = vpow.pop %v5132
    %v5134 = vmul.f32 %v4883, 1.442695
    %v5135 = vpow.pop %v5134
    %v5136 = vmul.f32 %v4884, 1.442695
    %v5137 = vpow.pop %v5136
    %v5138 = vmul.f32 %v4885, 1.442695
    %v5139 = vpow.pop %v5138
    %v5140 = vmul.f32 %v4886, 1.442695
    %v5141 = vpow.pop %v5140
    %v5142 = vmul.f32 %v4887, 1.442695
    %v5143 = vpow.pop %v5142
    %v5144 = vmul.f32 %v4888, 1.442695
    %v5145 = vpow.pop %v5144
    %v5146 = vmul.f32 %v4889, 1.442695
    %v5147 = vpow.pop %v5146
    %v5148 = vmul.f32 %v4890, 1.442695
    %v5149 = vpow.pop %v5148
    %v5150 = vmul.f32 %v4891, 1.442695
    %v5151 = vpow.pop %v5150
    %v5152 = vmul.f32 %v4892, 1.442695
    %v5153 = vpow.pop %v5152
    %v5154 = vmul.f32 %v4893, 1.442695
    %v5155 = vpow.pop %v5154
    %v5156 = vmul.f32 %v4894, 1.442695
    %v5157 = vpow.pop %v5156
    %v5158 = vmul.f32 %v4895, 1.442695
    %v5159 = vpow.pop %v5158
    %v5160 = vmul.f32 %v4896, 1.442695
    %v5161 = vpow.pop %v5160
    %v5162 = vmul.f32 %v4897, 1.442695
    %v5163 = vpow.pop %v5162
    %v5164 = vmul.f32 %v4898, 1.442695
    %v5165 = vpow.pop %v5164
    %v5166 = vmul.f32 %v4899, 1.442695
    %v5167 = vpow.pop %v5166
    %v5168 = vmul.f32 %v4900, 1.442695
    %v5169 = vpow.pop %v5168
    %v5170 = vmul.f32 %v4901, 1.442695
    %v5171 = vpow.pop %v5170
    %v5172 = vmul.f32 %v4902, 1.442695
    %v5173 = vpow.pop %v5172
    %v5174 = vmul.f32 %v4903, 1.442695
    %v5175 = vpow.pop %v5174
    %v5176 = vmul.f32 %v4904, 1.442695
    %v5177 = vpow.pop %v5176
    %v5178 = vmul.f32 %v4905, 1.442695
    %v5179 = vpow.pop %v5178
    %v5180 = vmul.f32 %v4906, 1.442695
    %v5181 = vpow.pop %v5180
    %v5182 = vmul.f32 %v4907, 1.442695
    %v5183 = vpow.pop %v5182
    %v5184 = vmul.f32 %v4908, 1.442695
    %v5185 = vpow.pop %v5184
    %v5186 = vmul.f32 %v4909, 1.442695
    %v5187 = vpow.pop %v5186
    %v5188 = vmul.f32 %v4910, 1.442695
    %v5189 = vpow.pop %v5188
    %v5190 = vmul.f32 %v4911, 1.442695
    %v5191 = vpow.pop %v5190
    %v5192 = vmul.f32 %v4912, 1.442695
    %v5193 = vpow.pop %v5192
    %v5194 = vmul.f32 %v4913, 1.442695
    %v5195 = vpow.pop %v5194
    %v5196 = vmul.f32 %v4914, 1.442695
    %v5197 = vpow.pop %v5196
    %v5198 = vmul.f32 %v4915, 1.442695
    %v5199 = vpow.pop %v5198
    %v5200 = vmul.f32 %v4916, 1.442695
    %v5201 = vpow.pop %v5200
    %v5202 = vmul.f32 %v4917, 1.442695
    %v5203 = vpow.pop %v5202
    %v5204 = vmul.f32 %v4918, 1.442695
    %v5205 = vpow.pop %v5204
    %v5206 = vmul.f32 %v4919, 1.442695
    %v5207 = vpow.pop %v5206
    %v5208 = vmul.f32 %v4920, 1.442695
    %v5209 = vpow.pop %v5208
    %v5210 = vmul.f32 %v4921, 1.442695
    %v5211 = vpow.pop %v5210
    %v5212 = vmul.f32 %v4922, 1.442695
    %v5213 = vpow.pop %v5212
    %v5214 = vmul.f32 %v4923, 1.442695
    %v5215 = vpow.pop %v5214
    %v5216 = vmul.f32 %v4924, 1.442695
    %v5217 = vpow.pop %v5216
    %v5218 = vmul.f32 %v4925, 1.442695
    %v5219 = vpow.pop %v5218
    %v5220 = vmul.f32 %v4926, 1.442695
    %v5221 = vpow.pop %v5220
    %v5222 = vmul.f32 %v4927, 1.442695
    %v5223 = vpow.pop %v5222
    %v5224 = vmul.f32 %v4928, 1.442695
    %v5225 = vpow.pop %v5224
    %v5226 = vmul.f32 %v4929, 1.442695
    %v5227 = vpow.pop %v5226
    %v5228 = vmul.f32 %v4930, 1.442695
    %v5229 = vpow.pop %v5228
    %v5230 = vmul.f32 %v4931, 1.442695
    %v5231 = vpow.pop %v5230
    %v5232 = vmul.f32 %v4932, 1.442695
    %v5233 = vpow.pop %v5232
    %v5234 = vmul.f32 %v4933, 1.442695
    %v5235 = vpow.pop %v5234
    %v5236 = vmul.f32 %v4934, 1.442695
    %v5237 = vpow.pop %v5236
    %v5238 = vmul.f32 %v4935, 1.442695
    %v5239 = vpow.pop %v5238
    %v5240 = vmul.f32 %v4936, 1.442695
    %v5241 = vpow.pop %v5240
    %v5242 = vmul.f32 %v4937, 1.442695
    %v5243 = vpow.pop %v5242
    %v5244 = vmul.f32 %v4938, 1.442695
    %v5245 = vpow.pop %v5244
    %v5246 = vmul.f32 %v4939, 1.442695
    %v5247 = vpow.pop %v5246
    %v5248 = vmul.f32 %v4940, 1.442695
    %v5249 = vpow.pop %v5248
    %v5250 = vmul.f32 %v4941, 1.442695
    %v5251 = vpow.pop %v5250
    %v5252 = vmul.f32 %v4942, 1.442695
    %v5253 = vpow.pop %v5252
    %v5254 = vmul.f32 %v4943, 1.442695
    %v5255 = vpow.pop %v5254
    %v5256 = vmul.f32 %v4944, 1.442695
    %v5257 = vpow.pop %v5256
    %v5258 = vmul.f32 %v4945, 1.442695
    %v5259 = vpow.pop %v5258
    %v5260 = vmul.f32 %v4946, 1.442695
    %v5261 = vpow.pop %v5260
    %v5262 = vmul.f32 %v4947, 1.442695
    %v5263 = vpow.pop %v5262
    %v5264 = vmul.f32 %v4948, 1.442695
    %v5265 = vpow.pop %v5264
    %v5266 = vmul.f32 %v4949, 1.442695
    %v5267 = vpow.pop %v5266
    %v5268 = vmul.f32 %v4950, 1.442695
    %v5269 = vpow.pop %v5268
    %v5270 = vmul.f32 %v4951, 1.442695
    %v5271 = vpow.pop %v5270
    %v5272 = vmul.f32 %v4952, 1.442695
    %v5273 = vpow.pop %v5272
    %v5274 = vmul.f32 %v4953, 1.442695
    %v5275 = vpow.pop %v5274
    %v5276 = vmul.f32 %v4954, 1.442695
    %v5277 = vpow.pop %v5276
    %v5278 = vmul.f32 %v4955, 1.442695
    %v5279 = vpow.pop %v5278
    %v5280 = vmul.f32 %v4956, 1.442695
    %v5281 = vpow.pop %v5280
    %v5282 = vmul.f32 %v4957, 1.442695
    %v5283 = vpow.pop %v5282
    %v5284 = vmul.f32 %v4958, 1.442695
    %v5285 = vpow.pop %v5284
    %v5286 = vmul.f32 %v4959, 1.442695
    %v5287 = vpow.pop %v5286
    %v5288 = vmul.f32 %v4960, 1.442695
    %v5289 = vpow.pop %v5288
    %v5290 = vmul.f32 %v4961, 1.442695
    %v5291 = vpow.pop %v5290
    %v5292 = vmul.f32 %v4962, 1.442695
    %v5293 = vpow.pop %v5292
    %v5294 = vmul.f32 %v4963, 1.442695
    %v5295 = vpow.pop %v5294
    %v5296 = vmul.f32 %v4964, 1.442695
    %v5297 = vpow.pop %v5296
    %v5298 = vmul.f32 %v4965, 1.442695
    %v5299 = vpow.pop %v5298
    %v5300 = vmul.f32 %v4966, 1.442695
    %v5301 = vpow.pop %v5300
    %v5302 = vmul.f32 %v4967, 1.442695
    %v5303 = vpow.pop %v5302
    %v5304 = vmul.f32 %v4968, 1.442695
    %v5305 = vpow.pop %v5304
    %v5306 = vmul.f32 %v4969, 1.442695
    %v5307 = vpow.pop %v5306
    %v5308 = vmul.f32 %v4970, 1.442695
    %v5309 = vpow.pop %v5308
    %v5310 = vmul.f32 %v4971, 1.442695
    %v5311 = vpow.pop %v5310
    %v5312 = vmul.f32 %v4972, 1.442695
    %v5313 = vpow.pop %v5312
    %v5314 = vmul.f32 %v4973, 1.442695
    %v5315 = vpow.pop %v5314
    %v5316 = vmul.f32 %v4974, 1.442695
    %v5317 = vpow.pop %v5316
    %v5318 = vmul.f32 %v4975, 1.442695
    %v5319 = vpow.pop %v5318
    %v5320 = vmul.f32 %v4976, 1.442695
    %v5321 = vpow.pop %v5320
    %v5322 = vmul.f32 %v4977, 1.442695
    %v5323 = vpow.pop %v5322
    %v5324 = vmul.f32 %v4978, 1.442695
    %v5325 = vpow.pop %v5324
    %v5326 = vmul.f32 %v4979, 1.442695
    %v5327 = vpow.pop %v5326
    %v5328 = vmul.f32 %v4980, 1.442695
    %v5329 = vpow.pop %v5328
    %v5330 = vmul.f32 %v4981, 1.442695
    %v5331 = vpow.pop %v5330
    %v5332 = vmul.f32 %v4982, 1.442695
    %v5333 = vpow.pop %v5332
    %v5334 = vmul.f32 %v4983, 1.442695
    %v5335 = vpow.pop %v5334
    %v5336 = vmul.f32 %v4984, 1.442695
    %v5337 = vpow.pop %v5336
    %v5338 = vmul.f32 %v4985, 1.442695
    %v5339 = vpow.pop %v5338
    %v5340 = vmul.f32 %v4986, 1.442695
    %v5341 = vpow.pop %v5340
    %v5342 = vmul.f32 %v4987, 1.442695
    %v5343 = vpow.pop %v5342
    %v5344 = vmul.f32 %v4988, 1.442695
    %v5345 = vpow.pop %v5344
    %v5346 = vmul.f32 %v4989, 1.442695
    %v5347 = vpow.pop %v5346
    %v5348 = vmul.f32 %v4990, 1.442695
    %v5349 = vpow.pop %v5348
    %v5350 = vmul.f32 %v4991, 1.442695
    %v5351 = vpow.pop %v5350
    %v5352 = vmul.f32 %v4992, 1.442695
    %v5353 = vpow.pop %v5352
    %v5354 = vmul.f32 %v4993, 1.442695
    %v5355 = vpow.pop %v5354
    %v5356 = vmul.f32 %v4994, 1.442695
    %v5357 = vpow.pop %v5356
    %v5358 = vmul.f32 %v4995, 1.442695
    %v5359 = vpow.pop %v5358
    %v5360 = vmul.f32 %v4996, 1.442695
    %v5361 = vpow.pop %v5360
    %v5362 = vmul.f32 %v4997, 1.442695
    %v5363 = vpow.pop %v5362
    %v5364 = vmul.f32 %v4998, 1.442695
    %v5365 = vpow.pop %v5364
    %v5366 = vmul.f32 %v4999, 1.442695
    %v5367 = vpow.pop %v5366
    %v5368 = vmul.f32 %v5000, 1.442695
    %v5369 = vpow.pop %v5368
    %v5370 = vmul.f32 %v5001, 1.442695
    %v5371 = vpow.pop %v5370
    %v5372 = vmul.f32 %v5002, 1.442695
    %v5373 = vpow.pop %v5372
    %v5374 = vmul.f32 %v5003, 1.442695
    %v5375 = vpow.pop %v5374
    %v5376 = vmul.f32 %v5004, 1.442695
    %v5377 = vpow.pop %v5376
    %v5378 = vmul.f32 %v5005, 1.442695
    %v5379 = vpow.pop %v5378
    %v5380 = vmul.f32 %v5006, 1.442695
    %v5381 = vpow.pop %v5380
    %v5382 = vmul.f32 %v5007, 1.442695
    %v5383 = vpow.pop %v5382
    %v5384 = vmul.f32 %v5008, 1.442695
    %v5385 = vpow.pop %v5384
    %v5386 = vmul.f32 %v5009, 1.442695
    %v5387 = vpow.pop %v5386
    %v5388 = vmul.f32 %v5010, 1.442695
    %v5389 = vpow.pop %v5388
    %v5390 = vmul.f32 %v5011, 1.442695
    %v5391 = vpow.pop %v5390
    %v5392 = vadd.f32 %v5013, 1.0
    %v5393 = vadd.f32 %v5015, 1.0
    %v5394 = vadd.f32 %v5017, 1.0
    %v5395 = vadd.f32 %v5019, 1.0
    %v5396 = vadd.f32 %v5021, 1.0
    %v5397 = vadd.f32 %v5023, 1.0
    %v5398 = vadd.f32 %v5025, 1.0
    %v5399 = vadd.f32 %v5027, 1.0
    %v5400 = vadd.f32 %v5029, 1.0
    %v5401 = vadd.f32 %v5031, 1.0
    %v5402 = vadd.f32 %v5033, 1.0
    %v5403 = vadd.f32 %v5035, 1.0
    %v5404 = vadd.f32 %v5037, 1.0
    %v5405 = vadd.f32 %v5039, 1.0
    %v5406 = vadd.f32 %v5041, 1.0
    %v5407 = vadd.f32 %v5043, 1.0
    %v5408 = vadd.f32 %v5045, 1.0
    %v5409 = vadd.f32 %v5047, 1.0
    %v5410 = vadd.f32 %v5049, 1.0
    %v5411 = vadd.f32 %v5051, 1.0
    %v5412 = vadd.f32 %v5053, 1.0
    %v5413 = vadd.f32 %v5055, 1.0
    %v5414 = vadd.f32 %v5057, 1.0
    %v5415 = vadd.f32 %v5059, 1.0
    %v5416 = vadd.f32 %v5061, 1.0
    %v5417 = vadd.f32 %v5063, 1.0
    %v5418 = vadd.f32 %v5065, 1.0
    %v5419 = vadd.f32 %v5067, 1.0
    %v5420 = vadd.f32 %v5069, 1.0
    %v5421 = vadd.f32 %v5071, 1.0
    %v5422 = vadd.f32 %v5073, 1.0
    %v5423 = vadd.f32 %v5075, 1.0
    %v5424 = vadd.f32 %v5077, 1.0
    %v5425 = vadd.f32 %v5079, 1.0
    %v5426 = vadd.f32 %v5081, 1.0
    %v5427 = vadd.f32 %v5083, 1.0
    %v5428 = vadd.f32 %v5085, 1.0
    %v5429 = vadd.f32 %v5087, 1.0
    %v5430 = vadd.f32 %v5089, 1.0
    %v5431 = vadd.f32 %v5091, 1.0
    %v5432 = vadd.f32 %v5093, 1.0
    %v5433 = vadd.f32 %v5095, 1.0
    %v5434 = vadd.f32 %v5097, 1.0
    %v5435 = vadd.f32 %v5099, 1.0
    %v5436 = vadd.f32 %v5101, 1.0
    %v5437 = vadd.f32 %v5103, 1.0
    %v5438 = vadd.f32 %v5105, 1.0
    %v5439 = vadd.f32 %v5107, 1.0
    %v5440 = vadd.f32 %v5109, 1.0
    %v5441 = vadd.f32 %v5111, 1.0
    %v5442 = vadd.f32 %v5113, 1.0
    %v5443 = vadd.f32 %v5115, 1.0
    %v5444 = vadd.f32 %v5117, 1.0
    %v5445 = vadd.f32 %v5119, 1.0
    %v5446 = vadd.f32 %v5121, 1.0
    %v5447 = vadd.f32 %v5123, 1.0
    %v5448 = vadd.f32 %v5125, 1.0
    %v5449 = vadd.f32 %v5127, 1.0
    %v5450 = vadd.f32 %v5129, 1.0
    %v5451 = vadd.f32 %v5131, 1.0
    %v5452 = vadd.f32 %v5133, 1.0
    %v5453 = vadd.f32 %v5135, 1.0
    %v5454 = vadd.f32 %v5137, 1.0
    %v5455 = vadd.f32 %v5139, 1.0
    %v5456 = vadd.f32 %v5141, 1.0
    %v5457 = vadd.f32 %v5143, 1.0
    %v5458 = vadd.f32 %v5145, 1.0
    %v5459 = vadd.f32 %v5147, 1.0
    %v5460 = vadd.f32 %v5149, 1.0
    %v5461 = vadd.f32 %v5151, 1.0
    %v5462 = vadd.f32 %v5153, 1.0
    %v5463 = vadd.f32 %v5155, 1.0
    %v5464 = vadd.f32 %v5157, 1.0
    %v5465 = vadd.f32 %v5159, 1.0
    %v5466 = vadd.f32 %v5161, 1.0
    %v5467 = vadd.f32 %v5163, 1.0
    %v5468 = vadd.f32 %v5165, 1.0
    %v5469 = vadd.f32 %v5167, 1.0
    %v5470 = vadd.f32 %v5169, 1.0
    %v5471 = vadd.f32 %v5171, 1.0
    %v5472 = vadd.f32 %v5173, 1.0
    %v5473 = vadd.f32 %v5175, 1.0
    %v5474 = vadd.f32 %v5177, 1.0
    %v5475 = vadd.f32 %v5179, 1.0
    %v5476 = vadd.f32 %v5181, 1.0
    %v5477 = vadd.f32 %v5183, 1.0
    %v5478 = vadd.f32 %v5185, 1.0
    %v5479 = vadd.f32 %v5187, 1.0
    %v5480 = vadd.f32 %v5189, 1.0
    %v5481 = vadd.f32 %v5191, 1.0
    %v5482 = vadd.f32 %v5193, 1.0
    %v5483 = vadd.f32 %v5195, 1.0
    %v5484 = vadd.f32 %v5197, 1.0
    %v5485 = vadd.f32 %v5199, 1.0
    %v5486 = vadd.f32 %v5201, 1.0
    %v5487 = vadd.f32 %v5203, 1.0
    %v5488 = vadd.f32 %v5205, 1.0
    %v5489 = vadd.f32 %v5207, 1.0
    %v5490 = vadd.f32 %v5209, 1.0
    %v5491 = vadd.f32 %v5211, 1.0
    %v5492 = vadd.f32 %v5213, 1.0
    %v5493 = vadd.f32 %v5215, 1.0
    %v5494 = vadd.f32 %v5217, 1.0
    %v5495 = vadd.f32 %v5219, 1.0
    %v5496 = vadd.f32 %v5221, 1.0
    %v5497 = vadd.f32 %v5223, 1.0
    %v5498 = vadd.f32 %v5225, 1.0
    %v5499 = vadd.f32 %v5227, 1.0
    %v5500 = vadd.f32 %v5229, 1.0
    %v5501 = vadd.f32 %v5231, 1.0
    %v5502 = vadd.f32 %v5233, 1.0
    %v5503 = vadd.f32 %v5235, 1.0
    %v5504 = vadd.f32 %v5237, 1.0
    %v5505 = vadd.f32 %v5239, 1.0
    %v5506 = vadd.f32 %v5241, 1.0
    %v5507 = vadd.f32 %v5243, 1.0
    %v5508 = vadd.f32 %v5245, 1.0
    %v5509 = vadd.f32 %v5247, 1.0
    %v5510 = vadd.f32 %v5249, 1.0
    %v5511 = vadd.f32 %v5251, 1.0
    %v5512 = vadd.f32 %v5253, 1.0
    %v5513 = vadd.f32 %v5255, 1.0
    %v5514 = vadd.f32 %v5257, 1.0
    %v5515 = vadd.f32 %v5259, 1.0
    %v5516 = vadd.f32 %v5261, 1.0
    %v5517 = vadd.f32 %v5263, 1.0
    %v5518 = vadd.f32 %v5265, 1.0
    %v5519 = vadd.f32 %v5267, 1.0
    %v5520 = vadd.f32 %v5269, 1.0
    %v5521 = vadd.f32 %v5271, 1.0
    %v5522 = vadd.f32 %v5273, 1.0
    %v5523 = vadd.f32 %v5275, 1.0
    %v5524 = vadd.f32 %v5277, 1.0
    %v5525 = vadd.f32 %v5279, 1.0
    %v5526 = vadd.f32 %v5281, 1.0
    %v5527 = vadd.f32 %v5283, 1.0
    %v5528 = vadd.f32 %v5285, 1.0
    %v5529 = vadd.f32 %v5287, 1.0
    %v5530 = vadd.f32 %v5289, 1.0
    %v5531 = vadd.f32 %v5291, 1.0
    %v5532 = vadd.f32 %v5293, 1.0
    %v5533 = vadd.f32 %v5295, 1.0
    %v5534 = vadd.f32 %v5297, 1.0
    %v5535 = vadd.f32 %v5299, 1.0
    %v5536 = vadd.f32 %v5301, 1.0
    %v5537 = vadd.f32 %v5303, 1.0
    %v5538 = vadd.f32 %v5305, 1.0
    %v5539 = vadd.f32 %v5307, 1.0
    %v5540 = vadd.f32 %v5309, 1.0
    %v5541 = vadd.f32 %v5311, 1.0
    %v5542 = vadd.f32 %v5313, 1.0
    %v5543 = vadd.f32 %v5315, 1.0
    %v5544 = vadd.f32 %v5317, 1.0
    %v5545 = vadd.f32 %v5319, 1.0
    %v5546 = vadd.f32 %v5321, 1.0
    %v5547 = vadd.f32 %v5323, 1.0
    %v5548 = vadd.f32 %v5325, 1.0
    %v5549 = vadd.f32 %v5327, 1.0
    %v5550 = vadd.f32 %v5329, 1.0
    %v5551 = vadd.f32 %v5331, 1.0
    %v5552 = vadd.f32 %v5333, 1.0
    %v5553 = vadd.f32 %v5335, 1.0
    %v5554 = vadd.f32 %v5337, 1.0
    %v5555 = vadd.f32 %v5339, 1.0
    %v5556 = vadd.f32 %v5341, 1.0
    %v5557 = vadd.f32 %v5343, 1.0
    %v5558 = vadd.f32 %v5345, 1.0
    %v5559 = vadd.f32 %v5347, 1.0
    %v5560 = vadd.f32 %v5349, 1.0
    %v5561 = vadd.f32 %v5351, 1.0
    %v5562 = vadd.f32 %v5353, 1.0
    %v5563 = vadd.f32 %v5355, 1.0
    %v5564 = vadd.f32 %v5357, 1.0
    %v5565 = vadd.f32 %v5359, 1.0
    %v5566 = vadd.f32 %v5361, 1.0
    %v5567 = vadd.f32 %v5363, 1.0
    %v5568 = vadd.f32 %v5365, 1.0
    %v5569 = vadd.f32 %v5367, 1.0
    %v5570 = vadd.f32 %v5369, 1.0
    %v5571 = vadd.f32 %v5371, 1.0
    %v5572 = vadd.f32 %v5373, 1.0
    %v5573 = vadd.f32 %v5375, 1.0
    %v5574 = vadd.f32 %v5377, 1.0
    %v5575 = vadd.f32 %v5379, 1.0
    %v5576 = vadd.f32 %v5381, 1.0
    %v5577 = vadd.f32 %v5383, 1.0
    %v5578 = vadd.f32 %v5385, 1.0
    %v5579 = vadd.f32 %v5387, 1.0
    %v5580 = vadd.f32 %v5389, 1.0
    %v5581 = vadd.f32 %v5391, 1.0
    %v5582 = vrcp.pop %v5392
    %v5583 = vmul.f32 1.0, %v5582
    %v5584 = vrcp.pop %v5393
    %v5585 = vmul.f32 1.0, %v5584
    %v5586 = vrcp.pop %v5394
    %v5587 = vmul.f32 1.0, %v5586
    %v5588 = vrcp.pop %v5395
    %v5589 = vmul.f32 1.0, %v5588
    %v5590 = vrcp.pop %v5396
    %v5591 = vmul.f32 1.0, %v5590
    %v5592 = vrcp.pop %v5397
    %v5593 = vmul.f32 1.0, %v5592
    %v5594 = vrcp.pop %v5398
    %v5595 = vmul.f32 1.0, %v5594
    %v5596 = vrcp.pop %v5399
    %v5597 = vmul.f32 1.0, %v5596
    %v5598 = vrcp.pop %v5400
    %v5599 = vmul.f32 1.0, %v5598
    %v5600 = vrcp.pop %v5401
    %v5601 = vmul.f32 1.0, %v5600
    %v5602 = vrcp.pop %v5402
    %v5603 = vmul.f32 1.0, %v5602
    %v5604 = vrcp.pop %v5403
    %v5605 = vmul.f32 1.0, %v5604
    %v5606 = vrcp.pop %v5404
    %v5607 = vmul.f32 1.0, %v5606
    %v5608 = vrcp.pop %v5405
    %v5609 = vmul.f32 1.0, %v5608
    %v5610 = vrcp.pop %v5406
    %v5611 = vmul.f32 1.0, %v5610
    %v5612 = vrcp.pop %v5407
    %v5613 = vmul.f32 1.0, %v5612
    %v5614 = vrcp.pop %v5408
    %v5615 = vmul.f32 1.0, %v5614
    %v5616 = vrcp.pop %v5409
    %v5617 = vmul.f32 1.0, %v5616
    %v5618 = vrcp.pop %v5410
    %v5619 = vmul.f32 1.0, %v5618
    %v5620 = vrcp.pop %v5411
    %v5621 = vmul.f32 1.0, %v5620
    %v5622 = vrcp.pop %v5412
    %v5623 = vmul.f32 1.0, %v5622
    %v5624 = vrcp.pop %v5413
    %v5625 = vmul.f32 1.0, %v5624
    %v5626 = vrcp.pop %v5414
    %v5627 = vmul.f32 1.0, %v5626
    %v5628 = vrcp.pop %v5415
    %v5629 = vmul.f32 1.0, %v5628
    %v5630 = vrcp.pop %v5416
    %v5631 = vmul.f32 1.0, %v5630
    %v5632 = vrcp.pop %v5417
    %v5633 = vmul.f32 1.0, %v5632
    %v5634 = vrcp.pop %v5418
    %v5635 = vmul.f32 1.0, %v5634
    %v5636 = vrcp.pop %v5419
    %v5637 = vmul.f32 1.0, %v5636
    %v5638 = vrcp.pop %v5420
    %v5639 = vmul.f32 1.0, %v5638
    %v5640 = vrcp.pop %v5421
    %v5641 = vmul.f32 1.0, %v5640
    %v5642 = vrcp.pop %v5422
    %v5643 = vmul.f32 1.0, %v5642
    %v5644 = vrcp.pop %v5423
    %v5645 = vmul.f32 1.0, %v5644
    %v5646 = vrcp.pop %v5424
    %v5647 = vmul.f32 1.0, %v5646
    %v5648 = vrcp.pop %v5425
    %v5649 = vmul.f32 1.0, %v5648
    %v5650 = vrcp.pop %v5426
    %v5651 = vmul.f32 1.0, %v5650
    %v5652 = vrcp.pop %v5427
    %v5653 = vmul.f32 1.0, %v5652
    %v5654 = vrcp.pop %v5428
    %v5655 = vmul.f32 1.0, %v5654
    %v5656 = vrcp.pop %v5429
    %v5657 = vmul.f32 1.0, %v5656
    %v5658 = vrcp.pop %v5430
    %v5659 = vmul.f32 1.0, %v5658
    %v5660 = vrcp.pop %v5431
    %v5661 = vmul.f32 1.0, %v5660
    %v5662 = vrcp.pop %v5432
    %v5663 = vmul.f32 1.0, %v5662
    %v5664 = vrcp.pop %v5433
    %v5665 = vmul.f32 1.0, %v5664
    %v5666 = vrcp.pop %v5434
    %v5667 = vmul.f32 1.0, %v5666
    %v5668 = vrcp.pop %v5435
    %v5669 = vmul.f32 1.0, %v5668
    %v5670 = vrcp.pop %v5436
    %v5671 = vmul.f32 1.0, %v5670
    %v5672 = vrcp.pop %v5437
    %v5673 = vmul.f32 1.0, %v5672
    %v5674 = vrcp.pop %v5438
    %v5675 = vmul.f32 1.0, %v5674
    %v5676 = vrcp.pop %v5439
    %v5677 = vmul.f32 1.0, %v5676
    %v5678 = vrcp.pop %v5440
    %v5679 = vmul.f32 1.0, %v5678
    %v5680 = vrcp.pop %v5441
    %v5681 = vmul.f32 1.0, %v5680
    %v5682 = vrcp.pop %v5442
    %v5683 = vmul.f32 1.0, %v5682
    %v5684 = vrcp.pop %v5443
    %v5685 = vmul.f32 1.0, %v5684
    %v5686 = vrcp.pop %v5444
    %v5687 = vmul.f32 1.0, %v5686
    %v5688 = vrcp.pop %v5445
    %v5689 = vmul.f32 1.0, %v5688
    %v5690 = vrcp.pop %v5446
    %v5691 = vmul.f32 1.0, %v5690
    %v5692 = vrcp.pop %v5447
    %v5693 = vmul.f32 1.0, %v5692
    %v5694 = vrcp.pop %v5448
    %v5695 = vmul.f32 1.0, %v5694
    %v5696 = vrcp.pop %v5449
    %v5697 = vmul.f32 1.0, %v5696
    %v5698 = vrcp.pop %v5450
    %v5699 = vmul.f32 1.0, %v5698
    %v5700 = vrcp.pop %v5451
    %v5701 = vmul.f32 1.0, %v5700
    %v5702 = vrcp.pop %v5452
    %v5703 = vmul.f32 1.0, %v5702
    %v5704 = vrcp.pop %v5453
    %v5705 = vmul.f32 1.0, %v5704
    %v5706 = vrcp.pop %v5454
    %v5707 = vmul.f32 1.0, %v5706
    %v5708 = vrcp.pop %v5455
    %v5709 = vmul.f32 1.0, %v5708
    %v5710 = vrcp.pop %v5456
    %v5711 = vmul.f32 1.0, %v5710
    %v5712 = vrcp.pop %v5457
    %v5713 = vmul.f32 1.0, %v5712
    %v5714 = vrcp.pop %v5458
    %v5715 = vmul.f32 1.0, %v5714
    %v5716 = vrcp.pop %v5459
    %v5717 = vmul.f32 1.0, %v5716
    %v5718 = vrcp.pop %v5460
    %v5719 = vmul.f32 1.0, %v5718
    %v5720 = vrcp.pop %v5461
    %v5721 = vmul.f32 1.0, %v5720
    %v5722 = vrcp.pop %v5462
    %v5723 = vmul.f32 1.0, %v5722
    %v5724 = vrcp.pop %v5463
    %v5725 = vmul.f32 1.0, %v5724
    %v5726 = vrcp.pop %v5464
    %v5727 = vmul.f32 1.0, %v5726
    %v5728 = vrcp.pop %v5465
    %v5729 = vmul.f32 1.0, %v5728
    %v5730 = vrcp.pop %v5466
    %v5731 = vmul.f32 1.0, %v5730
    %v5732 = vrcp.pop %v5467
    %v5733 = vmul.f32 1.0, %v5732
    %v5734 = vrcp.pop %v5468
    %v5735 = vmul.f32 1.0, %v5734
    %v5736 = vrcp.pop %v5469
    %v5737 = vmul.f32 1.0, %v5736
    %v5738 = vrcp.pop %v5470
    %v5739 = vmul.f32 1.0, %v5738
    %v5740 = vrcp.pop %v5471
    %v5741 = vmul.f32 1.0, %v5740
    %v5742 = vrcp.pop %v5472
    %v5743 = vmul.f32 1.0, %v5742
    %v5744 = vrcp.pop %v5473
    %v5745 = vmul.f32 1.0, %v5744
    %v5746 = vrcp.pop %v5474
    %v5747 = vmul.f32 1.0, %v5746
    %v5748 = vrcp.pop %v5475
    %v5749 = vmul.f32 1.0, %v5748
    %v5750 = vrcp.pop %v5476
    %v5751 = vmul.f32 1.0, %v5750
    %v5752 = vrcp.pop %v5477
    %v5753 = vmul.f32 1.0, %v5752
    %v5754 = vrcp.pop %v5478
    %v5755 = vmul.f32 1.0, %v5754
    %v5756 = vrcp.pop %v5479
    %v5757 = vmul.f32 1.0, %v5756
    %v5758 = vrcp.pop %v5480
    %v5759 = vmul.f32 1.0, %v5758
    %v5760 = vrcp.pop %v5481
    %v5761 = vmul.f32 1.0, %v5760
    %v5762 = vrcp.pop %v5482
    %v5763 = vmul.f32 1.0, %v5762
    %v5764 = vrcp.pop %v5483
    %v5765 = vmul.f32 1.0, %v5764
    %v5766 = vrcp.pop %v5484
    %v5767 = vmul.f32 1.0, %v5766
    %v5768 = vrcp.pop %v5485
    %v5769 = vmul.f32 1.0, %v5768
    %v5770 = vrcp.pop %v5486
    %v5771 = vmul.f32 1.0, %v5770
    %v5772 = vrcp.pop %v5487
    %v5773 = vmul.f32 1.0, %v5772
    %v5774 = vrcp.pop %v5488
    %v5775 = vmul.f32 1.0, %v5774
    %v5776 = vrcp.pop %v5489
    %v5777 = vmul.f32 1.0, %v5776
    %v5778 = vrcp.pop %v5490
    %v5779 = vmul.f32 1.0, %v5778
    %v5780 = vrcp.pop %v5491
    %v5781 = vmul.f32 1.0, %v5780
    %v5782 = vrcp.pop %v5492
    %v5783 = vmul.f32 1.0, %v5782
    %v5784 = vrcp.pop %v5493
    %v5785 = vmul.f32 1.0, %v5784
    %v5786 = vrcp.pop %v5494
    %v5787 = vmul.f32 1.0, %v5786
    %v5788 = vrcp.pop %v5495
    %v5789 = vmul.f32 1.0, %v5788
    %v5790 = vrcp.pop %v5496
    %v5791 = vmul.f32 1.0, %v5790
    %v5792 = vrcp.pop %v5497
    %v5793 = vmul.f32 1.0, %v5792
    %v5794 = vrcp.pop %v5498
    %v5795 = vmul.f32 1.0, %v5794
    %v5796 = vrcp.pop %v5499
    %v5797 = vmul.f32 1.0, %v5796
    %v5798 = vrcp.pop %v5500
    %v5799 = vmul.f32 1.0, %v5798
    %v5800 = vrcp.pop %v5501
    %v5801 = vmul.f32 1.0, %v5800
    %v5802 = vrcp.pop %v5502
    %v5803 = vmul.f32 1.0, %v5802
    %v5804 = vrcp.pop %v5503
    %v5805 = vmul.f32 1.0, %v5804
    %v5806 = vrcp.pop %v5504
    %v5807 = vmul.f32 1.0, %v5806
    %v5808 = vrcp.pop %v5505
    %v5809 = vmul.f32 1.0, %v5808
    %v5810 = vrcp.pop %v5506
    %v5811 = vmul.f32 1.0, %v5810
    %v5812 = vrcp.pop %v5507
    %v5813 = vmul.f32 1.0, %v5812
    %v5814 = vrcp.pop %v5508
    %v5815 = vmul.f32 1.0, %v5814
    %v5816 = vrcp.pop %v5509
    %v5817 = vmul.f32 1.0, %v5816
    %v5818 = vrcp.pop %v5510
    %v5819 = vmul.f32 1.0, %v5818
    %v5820 = vrcp.pop %v5511
    %v5821 = vmul.f32 1.0, %v5820
    %v5822 = vrcp.pop %v5512
    %v5823 = vmul.f32 1.0, %v5822
    %v5824 = vrcp.pop %v5513
    %v5825 = vmul.f32 1.0, %v5824
    %v5826 = vrcp.pop %v5514
    %v5827 = vmul.f32 1.0, %v5826
    %v5828 = vrcp.pop %v5515
    %v5829 = vmul.f32 1.0, %v5828
    %v5830 = vrcp.pop %v5516
    %v5831 = vmul.f32 1.0, %v5830
    %v5832 = vrcp.pop %v5517
    %v5833 = vmul.f32 1.0, %v5832
    %v5834 = vrcp.pop %v5518
    %v5835 = vmul.f32 1.0, %v5834
    %v5836 = vrcp.pop %v5519
    %v5837 = vmul.f32 1.0, %v5836
    %v5838 = vrcp.pop %v5520
    %v5839 = vmul.f32 1.0, %v5838
    %v5840 = vrcp.pop %v5521
    %v5841 = vmul.f32 1.0, %v5840
    %v5842 = vrcp.pop %v5522
    %v5843 = vmul.f32 1.0, %v5842
    %v5844 = vrcp.pop %v5523
    %v5845 = vmul.f32 1.0, %v5844
    %v5846 = vrcp.pop %v5524
    %v5847 = vmul.f32 1.0, %v5846
    %v5848 = vrcp.pop %v5525
    %v5849 = vmul.f32 1.0, %v5848
    %v5850 = vrcp.pop %v5526
    %v5851 = vmul.f32 1.0, %v5850
    %v5852 = vrcp.pop %v5527
    %v5853 = vmul.f32 1.0, %v5852
    %v5854 = vrcp.pop %v5528
    %v5855 = vmul.f32 1.0, %v5854
    %v5856 = vrcp.pop %v5529
    %v5857 = vmul.f32 1.0, %v5856
    %v5858 = vrcp.pop %v5530
    %v5859 = vmul.f32 1.0, %v5858
    %v5860 = vrcp.pop %v5531
    %v5861 = vmul.f32 1.0, %v5860
    %v5862 = vrcp.pop %v5532
    %v5863 = vmul.f32 1.0, %v5862
    %v5864 = vrcp.pop %v5533
    %v5865 = vmul.f32 1.0, %v5864
    %v5866 = vrcp.pop %v5534
    %v5867 = vmul.f32 1.0, %v5866
    %v5868 = vrcp.pop %v5535
    %v5869 = vmul.f32 1.0, %v5868
    %v5870 = vrcp.pop %v5536
    %v5871 = vmul.f32 1.0, %v5870
    %v5872 = vrcp.pop %v5537
    %v5873 = vmul.f32 1.0, %v5872
    %v5874 = vrcp.pop %v5538
    %v5875 = vmul.f32 1.0, %v5874
    %v5876 = vrcp.pop %v5539
    %v5877 = vmul.f32 1.0, %v5876
    %v5878 = vrcp.pop %v5540
    %v5879 = vmul.f32 1.0, %v5878
    %v5880 = vrcp.pop %v5541
    %v5881 = vmul.f32 1.0, %v5880
    %v5882 = vrcp.pop %v5542
    %v5883 = vmul.f32 1.0, %v5882
    %v5884 = vrcp.pop %v5543
    %v5885 = vmul.f32 1.0, %v5884
    %v5886 = vrcp.pop %v5544
    %v5887 = vmul.f32 1.0, %v5886
    %v5888 = vrcp.pop %v5545
    %v5889 = vmul.f32 1.0, %v5888
    %v5890 = vrcp.pop %v5546
    %v5891 = vmul.f32 1.0, %v5890
    %v5892 = vrcp.pop %v5547
    %v5893 = vmul.f32 1.0, %v5892
    %v5894 = vrcp.pop %v5548
    %v5895 = vmul.f32 1.0, %v5894
    %v5896 = vrcp.pop %v5549
    %v5897 = vmul.f32 1.0, %v5896
    %v5898 = vrcp.pop %v5550
    %v5899 = vmul.f32 1.0, %v5898
    %v5900 = vrcp.pop %v5551
    %v5901 = vmul.f32 1.0, %v5900
    %v5902 = vrcp.pop %v5552
    %v5903 = vmul.f32 1.0, %v5902
    %v5904 = vrcp.pop %v5553
    %v5905 = vmul.f32 1.0, %v5904
    %v5906 = vrcp.pop %v5554
    %v5907 = vmul.f32 1.0, %v5906
    %v5908 = vrcp.pop %v5555
    %v5909 = vmul.f32 1.0, %v5908
    %v5910 = vrcp.pop %v5556
    %v5911 = vmul.f32 1.0, %v5910
    %v5912 = vrcp.pop %v5557
    %v5913 = vmul.f32 1.0, %v5912
    %v5914 = vrcp.pop %v5558
    %v5915 = vmul.f32 1.0, %v5914
    %v5916 = vrcp.pop %v5559
    %v5917 = vmul.f32 1.0, %v5916
    %v5918 = vrcp.pop %v5560
    %v5919 = vmul.f32 1.0, %v5918
    %v5920 = vrcp.pop %v5561
    %v5921 = vmul.f32 1.0, %v5920
    %v5922 = vrcp.pop %v5562
    %v5923 = vmul.f32 1.0, %v5922
    %v5924 = vrcp.pop %v5563
    %v5925 = vmul.f32 1.0, %v5924
    %v5926 = vrcp.pop %v5564
    %v5927 = vmul.f32 1.0, %v5926
    %v5928 = vrcp.pop %v5565
    %v5929 = vmul.f32 1.0, %v5928
    %v5930 = vrcp.pop %v5566
    %v5931 = vmul.f32 1.0, %v5930
    %v5932 = vrcp.pop %v5567
    %v5933 = vmul.f32 1.0, %v5932
    %v5934 = vrcp.pop %v5568
    %v5935 = vmul.f32 1.0, %v5934
    %v5936 = vrcp.pop %v5569
    %v5937 = vmul.f32 1.0, %v5936
    %v5938 = vrcp.pop %v5570
    %v5939 = vmul.f32 1.0, %v5938
    %v5940 = vrcp.pop %v5571
    %v5941 = vmul.f32 1.0, %v5940
    %v5942 = vrcp.pop %v5572
    %v5943 = vmul.f32 1.0, %v5942
    %v5944 = vrcp.pop %v5573
    %v5945 = vmul.f32 1.0, %v5944
    %v5946 = vrcp.pop %v5574
    %v5947 = vmul.f32 1.0, %v5946
    %v5948 = vrcp.pop %v5575
    %v5949 = vmul.f32 1.0, %v5948
    %v5950 = vrcp.pop %v5576
    %v5951 = vmul.f32 1.0, %v5950
    %v5952 = vrcp.pop %v5577
    %v5953 = vmul.f32 1.0, %v5952
    %v5954 = vrcp.pop %v5578
    %v5955 = vmul.f32 1.0, %v5954
    %v5956 = vrcp.pop %v5579
    %v5957 = vmul.f32 1.0, %v5956
    %v5958 = vrcp.pop %v5580
    %v5959 = vmul.f32 1.0, %v5958
    %v5960 = vrcp.pop %v5581
    %v5961 = vmul.f32 1.0, %v5960
    %5962 = vst [vmem:[#allocation2] sm:$0xff] %v5583
    %5963 = vst [vmem:[#allocation2 + $0x8] sm:$0xff] %v5585
    %5964 = vst [vmem:[#allocation2 + $0x10] sm:$0xff] %v5587
    %5965 = vst [vmem:[#allocation2 + $0x18] sm:$0xff] %v5589
    %5966 = vst.msk [vmem:[#allocation2 + $0x20] sm:$0xff] %vm775, %v5591
    %5967 = vst [vmem:[#allocation2 + $0x28] sm:$0xff] %v5593
    %5968 = vst [vmem:[#allocation2 + $0x30] sm:$0xff] %v5595
    %5969 = vst [vmem:[#allocation2 + $0x38] sm:$0xff] %v5597
    %5970 = vst [vmem:[#allocation2 + $0x40] sm:$0xff] %v5599
    %5971 = vst.msk [vmem:[#allocation2 + $0x48] sm:$0xff] %vm775, %v5601
    %5972 = vst [vmem:[#allocation2 + $0x50] sm:$0xff] %v5603
    %5973 = vst [vmem:[#allocation2 + $0x58] sm:$0xff] %v5605
    %5974 = vst [vmem:[#allocation2 + $0x60] sm:$0xff] %v5607
    %5975 = vst [vmem:[#allocation2 + $0x68] sm:$0xff] %v5609
    %5976 = vst.msk [vmem:[#allocation2 + $0x70] sm:$0xff] %vm775, %v5611
    %5977 = vst [vmem:[#allocation2 + $0x78] sm:$0xff] %v5613
    %5978 = vst [vmem:[#allocation2 + $0x80] sm:$0xff] %v5615
    %5979 = vst [vmem:[#allocation2 + $0x88] sm:$0xff] %v5617
    %5980 = vst [vmem:[#allocation2 + $0x90] sm:$0xff] %v5619
    %5981 = vst.msk [vmem:[#allocation2 + $0x98] sm:$0xff] %vm775, %v5621
    %5982 = vst [vmem:[#allocation2 + $0xa0] sm:$0xff] %v5623
    %5983 = vst [vmem:[#allocation2 + $0xa8] sm:$0xff] %v5625
    %5984 = vst [vmem:[#allocation2 + $0xb0] sm:$0xff] %v5627
    %5985 = vst [vmem:[#allocation2 + $0xb8] sm:$0xff] %v5629
    %5986 = vst.msk [vmem:[#allocation2 + $0xc0] sm:$0xff] %vm775, %v5631
    %5987 = vst [vmem:[#allocation2 + $0xc8] sm:$0xff] %v5633
    %5988 = vst [vmem:[#allocation2 + $0xd0] sm:$0xff] %v5635
    %5989 = vst [vmem:[#allocation2 + $0xd8] sm:$0xff] %v5637
    %5990 = vst [vmem:[#allocation2 + $0xe0] sm:$0xff] %v5639
    %5991 = vst.msk [vmem:[#allocation2 + $0xe8] sm:$0xff] %vm775, %v5641
    %5992 = vst [vmem:[#allocation2 + $0xf0] sm:$0xff] %v5643
    %5993 = vst [vmem:[#allocation2 + $0xf8] sm:$0xff] %v5645
    %5994 = vst [vmem:[#allocation2 + $0x100] sm:$0xff] %v5647
    %5995 = vst [vmem:[#allocation2 + $0x108] sm:$0xff] %v5649
    %5996 = vst.msk [vmem:[#allocation2 + $0x110] sm:$0xff] %vm775, %v5651
    %5997 = vst [vmem:[#allocation2 + $0x118] sm:$0xff] %v5653
    %5998 = vst [vmem:[#allocation2 + $0x120] sm:$0xff] %v5655
    %5999 = vst [vmem:[#allocation2 + $0x128] sm:$0xff] %v5657
    %6000 = vst [vmem:[#allocation2 + $0x130] sm:$0xff] %v5659
    %6001 = vst.msk [vmem:[#allocation2 + $0x138] sm:$0xff] %vm775, %v5661
    %6002 = vst [vmem:[#allocation2 + $0x140] sm:$0xff] %v5663
    %6003 = vst [vmem:[#allocation2 + $0x148] sm:$0xff] %v5665
    %6004 = vst [vmem:[#allocation2 + $0x150] sm:$0xff] %v5667
    %6005 = vst [vmem:[#allocation2 + $0x158] sm:$0xff] %v5669
    %6006 = vst.msk [vmem:[#allocation2 + $0x160] sm:$0xff] %vm775, %v5671
    %6007 = vst [vmem:[#allocation2 + $0x168] sm:$0xff] %v5673
    %6008 = vst [vmem:[#allocation2 + $0x170] sm:$0xff] %v5675
    %6009 = vst [vmem:[#allocation2 + $0x178] sm:$0xff] %v5677
    %6010 = vst [vmem:[#allocation2 + $0x180] sm:$0xff] %v5679
    %6011 = vst.msk [vmem:[#allocation2 + $0x188] sm:$0xff] %vm775, %v5681
    %6012 = vst [vmem:[#allocation2 + $0x190] sm:$0xff] %v5683
    %6013 = vst [vmem:[#allocation2 + $0x198] sm:$0xff] %v5685
    %6014 = vst [vmem:[#allocation2 + $0x1a0] sm:$0xff] %v5687
    %6015 = vst [vmem:[#allocation2 + $0x1a8] sm:$0xff] %v5689
    %6016 = vst.msk [vmem:[#allocation2 + $0x1b0] sm:$0xff] %vm775, %v5691
    %6017 = vst [vmem:[#allocation2 + $0x1b8] sm:$0xff] %v5693
    %6018 = vst [vmem:[#allocation2 + $0x1c0] sm:$0xff] %v5695
    %6019 = vst [vmem:[#allocation2 + $0x1c8] sm:$0xff] %v5697
    %6020 = vst [vmem:[#allocation2 + $0x1d0] sm:$0xff] %v5699
    %6021 = vst.msk [vmem:[#allocation2 + $0x1d8] sm:$0xff] %vm775, %v5701
    %6022 = vst [vmem:[#allocation2 + $0x1e0] sm:$0xff] %v5703
    %6023 = vst [vmem:[#allocation2 + $0x1e8] sm:$0xff] %v5705
    %6024 = vst [vmem:[#allocation2 + $0x1f0] sm:$0xff] %v5707
    %6025 = vst [vmem:[#allocation2 + $0x1f8] sm:$0xff] %v5709
    %6026 = vst.msk [vmem:[#allocation2 + $0x200] sm:$0xff] %vm775, %v5711
    %6027 = vst [vmem:[#allocation2 + $0x208] sm:$0xff] %v5713
    %6028 = vst [vmem:[#allocation2 + $0x210] sm:$0xff] %v5715
    %6029 = vst [vmem:[#allocation2 + $0x218] sm:$0xff] %v5717
    %6030 = vst [vmem:[#allocation2 + $0x220] sm:$0xff] %v5719
    %6031 = vst.msk [vmem:[#allocation2 + $0x228] sm:$0xff] %vm775, %v5721
    %6032 = vst [vmem:[#allocation2 + $0x230] sm:$0xff] %v5723
    %6033 = vst [vmem:[#allocation2 + $0x238] sm:$0xff] %v5725
    %6034 = vst [vmem:[#allocation2 + $0x240] sm:$0xff] %v5727
    %6035 = vst [vmem:[#allocation2 + $0x248] sm:$0xff] %v5729
    %6036 = vst.msk [vmem:[#allocation2 + $0x250] sm:$0xff] %vm775, %v5731
    %6037 = vst [vmem:[#allocation2 + $0x258] sm:$0xff] %v5733
    %6038 = vst [vmem:[#allocation2 + $0x260] sm:$0xff] %v5735
    %6039 = vst [vmem:[#allocation2 + $0x268] sm:$0xff] %v5737
    %6040 = vst [vmem:[#allocation2 + $0x270] sm:$0xff] %v5739
    %6041 = vst.msk [vmem:[#allocation2 + $0x278] sm:$0xff] %vm775, %v5741
    %6042 = vst [vmem:[#allocation2 + $0x280] sm:$0xff] %v5743
    %6043 = vst [vmem:[#allocation2 + $0x288] sm:$0xff] %v5745
    %6044 = vst [vmem:[#allocation2 + $0x290] sm:$0xff] %v5747
    %6045 = vst [vmem:[#allocation2 + $0x298] sm:$0xff] %v5749
    %6046 = vst.msk [vmem:[#allocation2 + $0x2a0] sm:$0xff] %vm775, %v5751
    %6047 = vst [vmem:[#allocation2 + $0x2a8] sm:$0xff] %v5753
    %6048 = vst [vmem:[#allocation2 + $0x2b0] sm:$0xff] %v5755
    %6049 = vst [vmem:[#allocation2 + $0x2b8] sm:$0xff] %v5757
    %6050 = vst [vmem:[#allocation2 + $0x2c0] sm:$0xff] %v5759
    %6051 = vst.msk [vmem:[#allocation2 + $0x2c8] sm:$0xff] %vm775, %v5761
    %6052 = vst [vmem:[#allocation2 + $0x2d0] sm:$0xff] %v5763
    %6053 = vst [vmem:[#allocation2 + $0x2d8] sm:$0xff] %v5765
    %6054 = vst [vmem:[#allocation2 + $0x2e0] sm:$0xff] %v5767
    %6055 = vst [vmem:[#allocation2 + $0x2e8] sm:$0xff] %v5769
    %6056 = vst.msk [vmem:[#allocation2 + $0x2f0] sm:$0xff] %vm775, %v5771
    %6057 = vst [vmem:[#allocation2 + $0x2f8] sm:$0xff] %v5773
    %6058 = vst [vmem:[#allocation2 + $0x300] sm:$0xff] %v5775
    %6059 = vst [vmem:[#allocation2 + $0x308] sm:$0xff] %v5777
    %6060 = vst [vmem:[#allocation2 + $0x310] sm:$0xff] %v5779
    %6061 = vst.msk [vmem:[#allocation2 + $0x318] sm:$0xff] %vm775, %v5781
    %6062 = vst [vmem:[#allocation2 + $0x320] sm:$0xff] %v5783
    %6063 = vst [vmem:[#allocation2 + $0x328] sm:$0xff] %v5785
    %6064 = vst [vmem:[#allocation2 + $0x330] sm:$0xff] %v5787
    %6065 = vst [vmem:[#allocation2 + $0x338] sm:$0xff] %v5789
    %6066 = vst.msk [vmem:[#allocation2 + $0x340] sm:$0xff] %vm775, %v5791
    %6067 = vst [vmem:[#allocation2 + $0x348] sm:$0xff] %v5793
    %6068 = vst [vmem:[#allocation2 + $0x350] sm:$0xff] %v5795
    %6069 = vst [vmem:[#allocation2 + $0x358] sm:$0xff] %v5797
    %6070 = vst [vmem:[#allocation2 + $0x360] sm:$0xff] %v5799
    %6071 = vst.msk [vmem:[#allocation2 + $0x368] sm:$0xff] %vm775, %v5801
    %6072 = vst [vmem:[#allocation2 + $0x370] sm:$0xff] %v5803
    %6073 = vst [vmem:[#allocation2 + $0x378] sm:$0xff] %v5805
    %6074 = vst [vmem:[#allocation2 + $0x380] sm:$0xff] %v5807
    %6075 = vst [vmem:[#allocation2 + $0x388] sm:$0xff] %v5809
    %6076 = vst.msk [vmem:[#allocation2 + $0x390] sm:$0xff] %vm775, %v5811
    %6077 = vst [vmem:[#allocation2 + $0x398] sm:$0xff] %v5813
    %6078 = vst [vmem:[#allocation2 + $0x3a0] sm:$0xff] %v5815
    %6079 = vst [vmem:[#allocation2 + $0x3a8] sm:$0xff] %v5817
    %6080 = vst [vmem:[#allocation2 + $0x3b0] sm:$0xff] %v5819
    %6081 = vst.msk [vmem:[#allocation2 + $0x3b8] sm:$0xff] %vm775, %v5821
    %6082 = vst [vmem:[#allocation2 + $0x3c0] sm:$0xff] %v5823
    %6083 = vst [vmem:[#allocation2 + $0x3c8] sm:$0xff] %v5825
    %6084 = vst [vmem:[#allocation2 + $0x3d0] sm:$0xff] %v5827
    %6085 = vst [vmem:[#allocation2 + $0x3d8] sm:$0xff] %v5829
    %6086 = vst.msk [vmem:[#allocation2 + $0x3e0] sm:$0xff] %vm775, %v5831
    %6087 = vst [vmem:[#allocation2 + $0x3e8] sm:$0xff] %v5833
    %6088 = vst [vmem:[#allocation2 + $0x3f0] sm:$0xff] %v5835
    %6089 = vst [vmem:[#allocation2 + $0x3f8] sm:$0xff] %v5837
    %6090 = vst [vmem:[#allocation2 + $0x400] sm:$0xff] %v5839
    %6091 = vst.msk [vmem:[#allocation2 + $0x408] sm:$0xff] %vm775, %v5841
    %6092 = vst [vmem:[#allocation2 + $0x410] sm:$0xff] %v5843
    %6093 = vst [vmem:[#allocation2 + $0x418] sm:$0xff] %v5845
    %6094 = vst [vmem:[#allocation2 + $0x420] sm:$0xff] %v5847
    %6095 = vst [vmem:[#allocation2 + $0x428] sm:$0xff] %v5849
    %6096 = vst.msk [vmem:[#allocation2 + $0x430] sm:$0xff] %vm775, %v5851
    %6097 = vst [vmem:[#allocation2 + $0x438] sm:$0xff] %v5853
    %6098 = vst [vmem:[#allocation2 + $0x440] sm:$0xff] %v5855
    %6099 = vst [vmem:[#allocation2 + $0x448] sm:$0xff] %v5857
    %6100 = vst [vmem:[#allocation2 + $0x450] sm:$0xff] %v5859
    %6101 = vst.msk [vmem:[#allocation2 + $0x458] sm:$0xff] %vm775, %v5861
    %6102 = vst [vmem:[#allocation2 + $0x460] sm:$0xff] %v5863
    %6103 = vst [vmem:[#allocation2 + $0x468] sm:$0xff] %v5865
    %6104 = vst [vmem:[#allocation2 + $0x470] sm:$0xff] %v5867
    %6105 = vst [vmem:[#allocation2 + $0x478] sm:$0xff] %v5869
    %6106 = vst.msk [vmem:[#allocation2 + $0x480] sm:$0xff] %vm775, %v5871
    %6107 = vst [vmem:[#allocation2 + $0x488] sm:$0xff] %v5873
    %6108 = vst [vmem:[#allocation2 + $0x490] sm:$0xff] %v5875
    %6109 = vst [vmem:[#allocation2 + $0x498] sm:$0xff] %v5877
    %6110 = vst [vmem:[#allocation2 + $0x4a0] sm:$0xff] %v5879
    %6111 = vst.msk [vmem:[#allocation2 + $0x4a8] sm:$0xff] %vm775, %v5881
    %6112 = vst [vmem:[#allocation2 + $0x4b0] sm:$0xff] %v5883
    %6113 = vst [vmem:[#allocation2 + $0x4b8] sm:$0xff] %v5885
    %6114 = vst [vmem:[#allocation2 + $0x4c0] sm:$0xff] %v5887
    %6115 = vst [vmem:[#allocation2 + $0x4c8] sm:$0xff] %v5889
    %6116 = vst.msk [vmem:[#allocation2 + $0x4d0] sm:$0xff] %vm775, %v5891
    %6117 = vst [vmem:[#allocation2 + $0x4d8] sm:$0xff] %v5893
    %6118 = vst [vmem:[#allocation2 + $0x4e0] sm:$0xff] %v5895
    %6119 = vst [vmem:[#allocation2 + $0x4e8] sm:$0xff] %v5897
    %6120 = vst [vmem:[#allocation2 + $0x4f0] sm:$0xff] %v5899
    %6121 = vst.msk [vmem:[#allocation2 + $0x4f8] sm:$0xff] %vm775, %v5901
    %6122 = vst [vmem:[#allocation2 + $0x500] sm:$0xff] %v5903
    %6123 = vst [vmem:[#allocation2 + $0x508] sm:$0xff] %v5905
    %6124 = vst [vmem:[#allocation2 + $0x510] sm:$0xff] %v5907
    %6125 = vst [vmem:[#allocation2 + $0x518] sm:$0xff] %v5909
    %6126 = vst.msk [vmem:[#allocation2 + $0x520] sm:$0xff] %vm775, %v5911
    %6127 = vst [vmem:[#allocation2 + $0x528] sm:$0xff] %v5913
    %6128 = vst [vmem:[#allocation2 + $0x530] sm:$0xff] %v5915
    %6129 = vst [vmem:[#allocation2 + $0x538] sm:$0xff] %v5917
    %6130 = vst [vmem:[#allocation2 + $0x540] sm:$0xff] %v5919
    %6131 = vst.msk [vmem:[#allocation2 + $0x548] sm:$0xff] %vm775, %v5921
    %6132 = vst [vmem:[#allocation2 + $0x550] sm:$0xff] %v5923
    %6133 = vst [vmem:[#allocation2 + $0x558] sm:$0xff] %v5925
    %6134 = vst [vmem:[#allocation2 + $0x560] sm:$0xff] %v5927
    %6135 = vst [vmem:[#allocation2 + $0x568] sm:$0xff] %v5929
    %6136 = vst.msk [vmem:[#allocation2 + $0x570] sm:$0xff] %vm775, %v5931
    %6137 = vst [vmem:[#allocation2 + $0x578] sm:$0xff] %v5933
    %6138 = vst [vmem:[#allocation2 + $0x580] sm:$0xff] %v5935
    %6139 = vst [vmem:[#allocation2 + $0x588] sm:$0xff] %v5937
    %6140 = vst [vmem:[#allocation2 + $0x590] sm:$0xff] %v5939
    %6141 = vst.msk [vmem:[#allocation2 + $0x598] sm:$0xff] %vm775, %v5941
    %6142 = vst [vmem:[#allocation2 + $0x5a0] sm:$0xff] %v5943
    %6143 = vst [vmem:[#allocation2 + $0x5a8] sm:$0xff] %v5945
    %6144 = vst [vmem:[#allocation2 + $0x5b0] sm:$0xff] %v5947
    %6145 = vst [vmem:[#allocation2 + $0x5b8] sm:$0xff] %v5949
    %6146 = vst.msk [vmem:[#allocation2 + $0x5c0] sm:$0xff] %vm775, %v5951
    %6147 = vst [vmem:[#allocation2 + $0x5c8] sm:$0xff] %v5953
    %6148 = vst [vmem:[#allocation2 + $0x5d0] sm:$0xff] %v5955
    %6149 = vst [vmem:[#allocation2 + $0x5d8] sm:$0xff] %v5957
    %6150 = vst [vmem:[#allocation2 + $0x5e0] sm:$0xff] %v5959
    %6151 = vst.msk [vmem:[#allocation2 + $0x5e8] sm:$0xff] %vm775, %v5961
    // Predicated region
    $region70: #{autoencoder_forward.1} parent=1 // pred_check
      _
    $region71: #{autoencoder_forward.1} parent=1 // pred_check_branch
      %6153 = sbr.rel (0) target = $region73
    $region72: #{autoencoder_forward.1} parent=1 // pred_region
      %s6155 = ssub.s32 24320, 24320
      %6156 = vsyncadd [#allocation3], %s6155
      %s6157 = sshll.u32 [#allocation2], 4
      %s6158 = int_to_ptr.vmem [resolvable:$true] %s6157
      %6163 = dma.vmem_to_hbm [thread:$0]  %s6158, 24320, %s17, [#allocation3], 640, 640, 40
    $region73: #{autoencoder_forward.1} parent=1 // pred_fallthru
      _
    // Predicated region
    $region74: #{autoencoder_forward.1} parent=1 // pred_check
      _
    $region75: #{autoencoder_forward.1} parent=1 // pred_check_branch
      %6165 = sbr.rel (0) target = $region77
    $region76: #{autoencoder_forward.1} parent=1 // pred_region
      %6166 = dma.done [#allocation3], 24320
    $region77: #{autoencoder_forward.1} parent=1 // pred_fallthru
      _
    %6167 = vsyncpa [#allocation3], 1

</llo_original>
